<compile_context>
chip_gen: v7x
topology: tpu7x:2x2x1
jax: 0.10.0
libtpu: 0.0.40
codegen_flags: <defaults>
</compile_context>

<pallas_src>
import jax
import jax.numpy as jnp
from jax.experimental import pallas as pl
from jax.experimental.pallas import tpu as pltpu


# -----------------------------------------------------------------------------
# Kernel: 10 bf16 MXU dots, every small activation one 128-lane vector wide.
#
# w_small row layout (bf16, (1032, 128)):
#   [   0: 384)  camera layer2, block-diag 3x(128,16)          -> out cols  0:48
#   [ 384: 512)  camera layer3, block-diag (16,8)/(16,8)/(16,16)-> out cols 16:48
#   [ 512: 520)  position layer1 (rows 0..2 = wx1/wy1/wz1)     -> out cols  0:24
#   [ 520: 648)  position layer2, block-diag (8,8)/(8,4)/(8,4) -> out cols  0:16
#   [ 648: 776)  joint_layer1 (rows 0:16) + camera_joint_layer1 (rows 16:48)
#   [ 776: 904)  joint_layer2 (rows 0:24)                      -> out cols  0:32
#   [ 904:1032)  output_layer (rows 0:32)                      -> out cols 0:n_actions
# bias row layout (f32, (16,128)): rows 0-2 camera layer1 biases, rows 3-9 the
#   padded biases of the 7 fused layers above (same lane offsets as their
#   weight blocks), rows 10-15 zero.
# -----------------------------------------------------------------------------
def _qnet_kernel(depth_ref, relpos_ref, wcam_ref, wsmall_ref, bias_ref, out_ref):
  f32, bf16 = jnp.float32, jnp.bfloat16
  relu = lambda v: jnp.maximum(v, 0.0)
  # All matmuls: bf16 x bf16 operands, f32 MXU accumulation.
  dot = lambda a, b: jnp.dot(a.astype(bf16), b, preferred_element_type=f32)

  bias = bias_ref[...]                                           # (16, 128) f32

  # ---- camera towers, layer 1: f32 depth cast to bf16 IN-KERNEL ----
  h = []
  for i in range(3):
    d_i = depth_ref[:, i * 1024:(i + 1) * 1024]                  # (tb, 1024) f32
    h.append(relu(dot(d_i, wcam_ref[:, i * 128:(i + 1) * 128]) + bias[i:i + 1, :]))
  a1 = jnp.concatenate(h, axis=1)                                # (tb, 384) f32

  # ---- camera layers 2 & 3 (fused block-diagonal matmuls) ----
  a2 = relu(dot(a1, wsmall_ref[0:384, :]) + bias[3:4, :])        # live cols  0:48
  cam = relu(dot(a2, wsmall_ref[384:512, :]) + bias[4:5, :])     # live cols 16:48

  # ---- position towers (x/y/z fused) ----
  p1 = relu(dot(relpos_ref[...], wsmall_ref[512:520, :]) + bias[5:6, :])
  p2 = relu(dot(p1, wsmall_ref[520:648, :]) + bias[6:7, :])      # live cols  0:16

  # ---- joint_layer1 + camera_joint_layer1 (fused, K=128) ----
  # p2 and cam have disjoint live lanes -> the add IS the concatenation.
  j_in = p2 + cam                                                # cols 0:48 = cat(pos, cam)
  j1 = relu(dot(j_in, wsmall_ref[648:776, :]) + bias[7:8, :])    # cols 0:24 = cat(joint_pos, joint_cam)

  # ---- joint_layer2 + output_layer (lane-dense full-block store) ----
  j2 = relu(dot(j1, wsmall_ref[776:904, :]) + bias[8:9, :])      # cols 0:32
  out_ref[...] = dot(j2, wsmall_ref[904:1032, :]) + bias[9:10, :]


# -----------------------------------------------------------------------------
# Wrapper
# -----------------------------------------------------------------------------
def _build_call(B, tb, grid, single_buffer_weights):
  def wspec(shape):
    if single_buffer_weights:
      # Constant index map -> the operand never changes across grid steps;
      # a single buffer saves the second (wasted) VMEM copy.
      return pl.BlockSpec(shape, lambda i: (0, 0),
                          pipeline_mode=pl.Buffered(buffer_count=1))
    return pl.BlockSpec(shape, lambda i: (0, 0))

  return pl.pallas_call(
      _qnet_kernel,
      out_shape=jax.ShapeDtypeStruct((B, 128), jnp.float32),
      grid=grid,
      in_specs=[
          pl.BlockSpec((tb, 3 * 1024), lambda i: (i, 0)),   # depth tile (f32)
          pl.BlockSpec((tb, 8), lambda i: (i, 0)),          # relpos tile
          wspec((1024, 384)),                               # camera L1 weights (bf16, resident)
          wspec((1032, 128)),                               # small-weight slab (bf16, resident)
          wspec((16, 128)),                                 # bias slab (f32, resident)
      ],
      out_specs=pl.BlockSpec((tb, 128), lambda i: (i, 0)),  # lane-dense output
      compiler_params=pltpu.CompilerParams(
          dimension_semantics=("parallel",),
          vmem_limit_bytes=32 * 1024 * 1024,
      ),
  )


def quadrotor_qnet_forward(depth_image, relative_position, packed, n_actions,
                           batch_tile=512):
  """depth_image: (B, 3, 1024) f32, relative_position: (B, 3) f32."""
  w_cam1, w_small, bias = packed
  B = depth_image.shape[0]
  assert n_actions <= 128

  depth = depth_image.reshape(B, 3 * 1024)                    # free reshape, stays f32
  relpos = jnp.pad(relative_position.astype(jnp.float32), ((0, 0), (0, 5)))

  tb = min(B, batch_tile)
  if tb == B and B >= 16:
    # Ensure >= 2 grid steps so ("parallel",) can shard across v7x's two TCs.
    tb = (((B + 1) // 2) + 7) // 8 * 8
  grid = (pl.cdiv(B, tb),)

  args = (depth, relpos, w_cam1, w_small, bias)
  try:
    out = _build_call(B, tb, grid, single_buffer_weights=True)(*args)
  except Exception:
    # pl.Buffered(1) not supported on this jax version -> default pipelining.
    out = _build_call(B, tb, grid, single_buffer_weights=False)(*args)
  return out[:, :n_actions]


# -----------------------------------------------------------------------------
# Parameter init (PyTorch Linear default U(-1/sqrt(fan_in), ..)), stored as
# (in_features, out_features) weights and (1, out_features) biases.
# -----------------------------------------------------------------------------
def _init_linear(key, fan_in, fan_out):
  kw, kb = jax.random.split(key)
  bound = 1.0 / (fan_in ** 0.5)
  w = jax.random.uniform(kw, (fan_in, fan_out), jnp.float32, -bound, bound)
  b = jax.random.uniform(kb, (1, fan_out), jnp.float32, -bound, bound)
  return w, b


def make_params(key, n_rel_x, n_rel_y, n_rel_z, n_actions):
  shapes = [
      (n_rel_x, 8), (8, 8),               # x_layer1/2
      (n_rel_y, 8), (8, 4),               # y_layer1/2
      (n_rel_z, 8), (8, 4),               # z_layer1/2
      (1024, 128), (128, 16), (16, 8),    # camera_1
      (1024, 128), (128, 16), (16, 8),    # camera_2
      (1024, 128), (128, 16), (16, 16),   # camera_3
      (16, 8),                            # joint_layer1   (8+4+4 -> 8)
      (32, 16),                           # camera_joint_layer1 (8+8+16 -> 16)
      (24, 32),                           # joint_layer2   (8+16 -> 32)
      (32, n_actions),                    # output_layer
  ]
  keys = jax.random.split(key, len(shapes))
  params = []
  for k, (fi, fo) in zip(keys, shapes):
    w, b = _init_linear(k, fi, fo)
    params.extend([w, b])
  return params


# -----------------------------------------------------------------------------
# Pack per-layer params into the three kernel slabs.
# -----------------------------------------------------------------------------
def pack_params(params):
  (wx1, bx1, wx2, bx2, wy1, by1, wy2, by2, wz1, bz1, wz2, bz2,
   wc11, bc11, wc12, bc12, wc13, bc13,
   wc21, bc21, wc22, bc22, wc23, bc23,
   wc31, bc31, wc32, bc32, wc33, bc33,
   wj1, bj1, wcj1, bcj1, wj2, bj2, wout, bout) = params

  # Big camera layer-1 slab: (1024, 384) bf16.
  w_cam1 = jnp.concatenate([wc11, wc21, wc31], axis=1).astype(jnp.bfloat16)

  def block(rows, entries):
    m = jnp.zeros((rows, 128), jnp.float32)
    for r0, c0, w in entries:
      m = m.at[r0:r0 + w.shape[0], c0:c0 + w.shape[1]].set(w)
    return m

  w_small = jnp.concatenate([
      block(384, [(0, 0, wc12), (128, 16, wc22), (256, 32, wc32)]),   # cam L2 -> cols 0:48
      block(128, [(0, 16, wc13), (16, 24, wc23), (32, 32, wc33)]),    # cam L3 -> cols 16:48
      block(8,   [(0, 0, wx1), (1, 8, wy1), (2, 16, wz1)]),           # pos L1 -> cols 0:24
      block(128, [(0, 0, wx2), (8, 8, wy2), (16, 12, wz2)]),          # pos L2 -> cols 0:16
      block(128, [(0, 0, wj1), (16, 8, wcj1)]),                       # joint1 (+cam_joint1) -> cols 0:24
      block(128, [(0, 0, wj2)]),                                      # joint2 -> cols 0:32
      block(128, [(0, 0, wout)]),                                     # output -> cols 0:n_actions
  ], axis=0).astype(jnp.bfloat16)                                     # (1032, 128) bf16

  def brow(entries):
    r = jnp.zeros((128,), jnp.float32)
    for c0, b in entries:
      r = r.at[c0:c0 + b.shape[-1]].set(b.reshape(-1))
    return r

  bias = jnp.stack(
      [brow([(0, bc11)]), brow([(0, bc21)]), brow([(0, bc31)]),
       brow([(0, bc12), (16, bc22), (32, bc32)]),
       brow([(16, bc13), (24, bc23), (32, bc33)]),
       brow([(0, bx1), (8, by1), (16, bz1)]),
       brow([(0, bx2), (8, by2), (12, bz2)]),
       brow([(0, bj1), (8, bcj1)]),
       brow([(0, bj2)]),
       brow([(0, bout)])]
      + [jnp.zeros((128,), jnp.float32)] * 6,
      axis=0)                                                         # (16, 128) f32

  return w_cam1, w_small, bias


# -----------------------------------------------------------------------------
# References.  `mirrored` reproduces the kernel's bf16 operand quantization
# exactly; `f32` is the faithful full-precision PyTorch forward.
# -----------------------------------------------------------------------------
def _reference(depth_image, relative_position, params, quantize):
  (wx1, bx1, wx2, bx2, wy1, by1, wy2, by2, wz1, bz1, wz2, bz2,
   wc11, bc11, wc12, bc12, wc13, bc13,
   wc21, bc21, wc22, bc22, wc23, bc23,
   wc31, bc31, wc32, bc32, wc33, bc33,
   wj1, bj1, wcj1, bcj1, wj2, bj2, wout, bout) = params
  relu = jax.nn.relu
  q = (lambda a: a.astype(jnp.bfloat16)) if quantize else (lambda a: a)
  mm = lambda a, w, b: jnp.dot(q(a), q(w), preferred_element_type=jnp.float32) + b

  d1, d2, d3 = depth_image[:, 0], depth_image[:, 1], depth_image[:, 2]
  cam1 = relu(mm(relu(mm(relu(mm(d1, wc11, bc11)), wc12, bc12)), wc13, bc13))
  cam2 = relu(mm(relu(mm(relu(mm(d2, wc21, bc21)), wc22, bc22)), wc23, bc23))
  cam3 = relu(mm(relu(mm(relu(mm(d3, wc31, bc31)), wc32, bc32)), wc33, bc33))
  rx, ry, rz = (relative_position[:, i:i + 1] for i in range(3))
  x = relu(mm(relu(mm(rx, wx1, bx1)), wx2, bx2))
  y = relu(mm(relu(mm(ry, wy1, by1)), wy2, by2))
  z = relu(mm(relu(mm(rz, wz1, bz1)), wz2, bz2))
  joint_pos = relu(mm(jnp.concatenate([x, y, z], axis=1), wj1, bj1))
  joint_cam = relu(mm(jnp.concatenate([cam1, cam2, cam3], axis=1), wcj1, bcj1))
  joint_all = relu(mm(jnp.concatenate([joint_pos, joint_cam], axis=1), wj2, bj2))
  return mm(joint_all, wout, bout)


def reference_forward_mirrored(d, r, params):
  return _reference(d, r, params, quantize=True)


def reference_forward_f32(d, r, params):
  return _reference(d, r, params, quantize=False)


# -----------------------------------------------------------------------------
if __name__ == "__main__":
  N_REL_X = N_REL_Y = N_REL_Z = 1
  N_ACTIONS = 6

  root = jax.random.PRNGKey(0)
  k_params, k_data = jax.random.split(root)
  params = make_params(k_params, N_REL_X, N_REL_Y, N_REL_Z, N_ACTIONS)
  packed = pack_params(params)

  # B=4: single full tile.  B=20: multi-step grid with a partial last tile
  # (tests the non-divisible-batch masking path flagged in the review).
  for B in (4, 20):
    kd, kp = jax.random.split(jax.random.fold_in(k_data, B))
    depth_image = jax.random.uniform(kd, (B, 3, 1024), jnp.float32)
    relative_position = jax.random.normal(kp, (B, 3), jnp.float32)

    out = quadrotor_qnet_forward(depth_image, relative_position, packed, N_ACTIONS)
    out = jax.block_until_ready(out)
    assert out.shape == (B, N_ACTIONS)

    ref_bf16 = reference_forward_mirrored(depth_image, relative_position, params)
    ref_f32 = reference_forward_f32(depth_image, relative_position, params)
    err_m = float(jnp.max(jnp.abs(out - ref_bf16)))
    err_f = float(jnp.max(jnp.abs(out - ref_f32)))
    assert jnp.allclose(out, ref_bf16, atol=2e-3, rtol=2e-3), (
        "B=%d mirrored-ref max abs err %e" % (B, err_m))
    assert jnp.allclose(out, ref_f32, atol=5e-2, rtol=5e-2), (
        "B=%d f32-ref max abs err %e" % (B, err_f))

  print("KERNEL_OK")
</pallas_src>

<mosaic_0001>
module attributes {stable_mosaic.version = 11 : i64} {
  func.func @_qnet_kernel(%arg0: i32, %arg1: memref<4x3072xf32, #tpu.memory_space<vmem>>, %arg2: memref<4x8xf32, #tpu.memory_space<vmem>>, %arg3: memref<1024x384xbf16, #tpu.memory_space<vmem>>, %arg4: memref<1032x128xbf16, #tpu.memory_space<vmem>>, %arg5: memref<16x128xf32, #tpu.memory_space<vmem>>, %arg6: memref<4x128xf32, #tpu.memory_space<vmem>>) attributes {dimension_semantics = [#tpu.dimension_semantics<parallel>], iteration_bounds = array<i64: 1>, scalar_prefetch = 0 : i64, scratch_operands = 0 : i64, tpu.core_type = #tpu.core_type<tc>, window_params = [{transform_indices = @transform_0, window_bounds = array<i64: 4, 3072>}, {transform_indices = @transform_1, window_bounds = array<i64: 4, 8>}, {pipeline_mode = #tpu.pipeline_mode<synchronous>, transform_indices = @transform_2, window_bounds = array<i64: 1024, 384>}, {pipeline_mode = #tpu.pipeline_mode<synchronous>, transform_indices = @transform_3, window_bounds = array<i64: 1032, 128>}, {pipeline_mode = #tpu.pipeline_mode<synchronous>, transform_indices = @transform_4, window_bounds = array<i64: 16, 128>}, {transform_indices = @transform_5, window_bounds = array<i64: 4, 128>}]} {
    %c0 = arith.constant 0 : index
    %c0_0 = arith.constant 0 : index
    %0 = vector.load %arg5[%c0, %c0_0] : memref<16x128xf32, #tpu.memory_space<vmem>>, vector<16x128xf32>
    %c0_1 = arith.constant 0 : index
    %c0_2 = arith.constant 0 : index
    %1 = vector.load %arg1[%c0_1, %c0_2] : memref<4x3072xf32, #tpu.memory_space<vmem>>, vector<4x1024xf32>
    %c0_3 = arith.constant 0 : index
    %c0_4 = arith.constant 0 : index
    %2 = vector.load %arg3[%c0_3, %c0_4] : memref<1024x384xbf16, #tpu.memory_space<vmem>>, vector<1024x128xbf16>
    %3 = arith.truncf %1 : vector<4x1024xf32> to vector<4x1024xbf16>
    %cst = arith.constant dense<0.000000e+00> : vector<4x128xf32>
    %4 = tpu.matmul %3, %2, %cst {dimension_numbers = #tpu.dot_dimension_numbers<[1], [0], [0], [1], [0, 0, 1, 1], [], []>} : vector<4x1024xbf16>, vector<1024x128xbf16>, vector<4x128xf32> -> vector<4x128xf32>
    %5 = vector.extract_strided_slice %0 {offsets = [0, 0], sizes = [1, 128], strides = [1, 1]} : vector<16x128xf32> to vector<1x128xf32>
    %6 = vector.broadcast %5 : vector<1x128xf32> to vector<4x128xf32>
    %7 = arith.addf %4, %6 : vector<4x128xf32>
    %cst_5 = arith.constant 0.000000e+00 : f32
    %8 = vector.broadcast %cst_5 : f32 to vector<4x128xf32>
    %9 = arith.maximumf %7, %8 : vector<4x128xf32>
    %c0_6 = arith.constant 0 : index
    %c1024 = arith.constant 1024 : index
    %10 = vector.load %arg1[%c0_6, %c1024] : memref<4x3072xf32, #tpu.memory_space<vmem>>, vector<4x1024xf32>
    %c0_7 = arith.constant 0 : index
    %c128 = arith.constant 128 : index
    %11 = vector.load %arg3[%c0_7, %c128] : memref<1024x384xbf16, #tpu.memory_space<vmem>>, vector<1024x128xbf16>
    %12 = arith.truncf %10 : vector<4x1024xf32> to vector<4x1024xbf16>
    %cst_8 = arith.constant dense<0.000000e+00> : vector<4x128xf32>
    %13 = tpu.matmul %12, %11, %cst_8 {dimension_numbers = #tpu.dot_dimension_numbers<[1], [0], [0], [1], [0, 0, 1, 1], [], []>} : vector<4x1024xbf16>, vector<1024x128xbf16>, vector<4x128xf32> -> vector<4x128xf32>
    %14 = vector.extract_strided_slice %0 {offsets = [1, 0], sizes = [1, 128], strides = [1, 1]} : vector<16x128xf32> to vector<1x128xf32>
    %15 = vector.broadcast %14 : vector<1x128xf32> to vector<4x128xf32>
    %16 = arith.addf %13, %15 : vector<4x128xf32>
    %cst_9 = arith.constant 0.000000e+00 : f32
    %17 = vector.broadcast %cst_9 : f32 to vector<4x128xf32>
    %18 = arith.maximumf %16, %17 : vector<4x128xf32>
    %c0_10 = arith.constant 0 : index
    %c2048 = arith.constant 2048 : index
    %19 = vector.load %arg1[%c0_10, %c2048] : memref<4x3072xf32, #tpu.memory_space<vmem>>, vector<4x1024xf32>
    %c0_11 = arith.constant 0 : index
    %c256 = arith.constant 256 : index
    %20 = vector.load %arg3[%c0_11, %c256] : memref<1024x384xbf16, #tpu.memory_space<vmem>>, vector<1024x128xbf16>
    %21 = arith.truncf %19 : vector<4x1024xf32> to vector<4x1024xbf16>
    %cst_12 = arith.constant dense<0.000000e+00> : vector<4x128xf32>
    %22 = tpu.matmul %21, %20, %cst_12 {dimension_numbers = #tpu.dot_dimension_numbers<[1], [0], [0], [1], [0, 0, 1, 1], [], []>} : vector<4x1024xbf16>, vector<1024x128xbf16>, vector<4x128xf32> -> vector<4x128xf32>
    %23 = vector.extract_strided_slice %0 {offsets = [2, 0], sizes = [1, 128], strides = [1, 1]} : vector<16x128xf32> to vector<1x128xf32>
    %24 = vector.broadcast %23 : vector<1x128xf32> to vector<4x128xf32>
    %25 = arith.addf %22, %24 : vector<4x128xf32>
    %cst_13 = arith.constant 0.000000e+00 : f32
    %26 = vector.broadcast %cst_13 : f32 to vector<4x128xf32>
    %27 = arith.maximumf %25, %26 : vector<4x128xf32>
    %28 = tpu.concatenate %9, %18, %27 in 1 : vector<4x128xf32>, vector<4x128xf32>, vector<4x128xf32> -> vector<4x384xf32>
    %c0_14 = arith.constant 0 : index
    %c0_15 = arith.constant 0 : index
    %29 = vector.load %arg4[%c0_14, %c0_15] : memref<1032x128xbf16, #tpu.memory_space<vmem>>, vector<384x128xbf16>
    %30 = arith.truncf %28 : vector<4x384xf32> to vector<4x384xbf16>
    %cst_16 = arith.constant dense<0.000000e+00> : vector<4x128xf32>
    %31 = tpu.matmul %30, %29, %cst_16 {dimension_numbers = #tpu.dot_dimension_numbers<[1], [0], [0], [1], [0, 0, 1, 1], [], []>} : vector<4x384xbf16>, vector<384x128xbf16>, vector<4x128xf32> -> vector<4x128xf32>
    %32 = vector.extract_strided_slice %0 {offsets = [3, 0], sizes = [1, 128], strides = [1, 1]} : vector<16x128xf32> to vector<1x128xf32>
    %33 = vector.broadcast %32 : vector<1x128xf32> to vector<4x128xf32>
    %34 = arith.addf %31, %33 : vector<4x128xf32>
    %cst_17 = arith.constant 0.000000e+00 : f32
    %35 = vector.broadcast %cst_17 : f32 to vector<4x128xf32>
    %36 = arith.maximumf %34, %35 : vector<4x128xf32>
    %c384 = arith.constant 384 : index
    %c0_18 = arith.constant 0 : index
    %37 = vector.load %arg4[%c384, %c0_18] : memref<1032x128xbf16, #tpu.memory_space<vmem>>, vector<128x128xbf16>
    %38 = arith.truncf %36 : vector<4x128xf32> to vector<4x128xbf16>
    %cst_19 = arith.constant dense<0.000000e+00> : vector<4x128xf32>
    %39 = tpu.matmul %38, %37, %cst_19 {dimension_numbers = #tpu.dot_dimension_numbers<[1], [0], [0], [1], [0, 0, 1, 1], [], []>} : vector<4x128xbf16>, vector<128x128xbf16>, vector<4x128xf32> -> vector<4x128xf32>
    %40 = vector.extract_strided_slice %0 {offsets = [4, 0], sizes = [1, 128], strides = [1, 1]} : vector<16x128xf32> to vector<1x128xf32>
    %41 = vector.broadcast %40 : vector<1x128xf32> to vector<4x128xf32>
    %42 = arith.addf %39, %41 : vector<4x128xf32>
    %cst_20 = arith.constant 0.000000e+00 : f32
    %43 = vector.broadcast %cst_20 : f32 to vector<4x128xf32>
    %44 = arith.maximumf %42, %43 : vector<4x128xf32>
    %c0_21 = arith.constant 0 : index
    %c0_22 = arith.constant 0 : index
    %45 = vector.load %arg2[%c0_21, %c0_22] : memref<4x8xf32, #tpu.memory_space<vmem>>, vector<4x8xf32>
    %c512 = arith.constant 512 : index
    %c0_23 = arith.constant 0 : index
    %46 = vector.load %arg4[%c512, %c0_23] : memref<1032x128xbf16, #tpu.memory_space<vmem>>, vector<8x128xbf16>
    %47 = arith.truncf %45 : vector<4x8xf32> to vector<4x8xbf16>
    %cst_24 = arith.constant dense<0.000000e+00> : vector<4x128xf32>
    %48 = tpu.matmul %47, %46, %cst_24 {dimension_numbers = #tpu.dot_dimension_numbers<[1], [0], [0], [1], [0, 0, 1, 1], [], []>} : vector<4x8xbf16>, vector<8x128xbf16>, vector<4x128xf32> -> vector<4x128xf32>
    %49 = vector.extract_strided_slice %0 {offsets = [5, 0], sizes = [1, 128], strides = [1, 1]} : vector<16x128xf32> to vector<1x128xf32>
    %50 = vector.broadcast %49 : vector<1x128xf32> to vector<4x128xf32>
    %51 = arith.addf %48, %50 : vector<4x128xf32>
    %cst_25 = arith.constant 0.000000e+00 : f32
    %52 = vector.broadcast %cst_25 : f32 to vector<4x128xf32>
    %53 = arith.maximumf %51, %52 : vector<4x128xf32>
    %c520 = arith.constant 520 : index
    %c0_26 = arith.constant 0 : index
    %54 = vector.load %arg4[%c520, %c0_26] : memref<1032x128xbf16, #tpu.memory_space<vmem>>, vector<128x128xbf16>
    %55 = arith.truncf %53 : vector<4x128xf32> to vector<4x128xbf16>
    %cst_27 = arith.constant dense<0.000000e+00> : vector<4x128xf32>
    %56 = tpu.matmul %55, %54, %cst_27 {dimension_numbers = #tpu.dot_dimension_numbers<[1], [0], [0], [1], [0, 0, 1, 1], [], []>} : vector<4x128xbf16>, vector<128x128xbf16>, vector<4x128xf32> -> vector<4x128xf32>
    %57 = vector.extract_strided_slice %0 {offsets = [6, 0], sizes = [1, 128], strides = [1, 1]} : vector<16x128xf32> to vector<1x128xf32>
    %58 = vector.broadcast %57 : vector<1x128xf32> to vector<4x128xf32>
    %59 = arith.addf %56, %58 : vector<4x128xf32>
    %cst_28 = arith.constant 0.000000e+00 : f32
    %60 = vector.broadcast %cst_28 : f32 to vector<4x128xf32>
    %61 = arith.maximumf %59, %60 : vector<4x128xf32>
    %62 = arith.addf %61, %44 : vector<4x128xf32>
    %c648 = arith.constant 648 : index
    %c0_29 = arith.constant 0 : index
    %63 = vector.load %arg4[%c648, %c0_29] : memref<1032x128xbf16, #tpu.memory_space<vmem>>, vector<128x128xbf16>
    %64 = arith.truncf %62 : vector<4x128xf32> to vector<4x128xbf16>
    %cst_30 = arith.constant dense<0.000000e+00> : vector<4x128xf32>
    %65 = tpu.matmul %64, %63, %cst_30 {dimension_numbers = #tpu.dot_dimension_numbers<[1], [0], [0], [1], [0, 0, 1, 1], [], []>} : vector<4x128xbf16>, vector<128x128xbf16>, vector<4x128xf32> -> vector<4x128xf32>
    %66 = vector.extract_strided_slice %0 {offsets = [7, 0], sizes = [1, 128], strides = [1, 1]} : vector<16x128xf32> to vector<1x128xf32>
    %67 = vector.broadcast %66 : vector<1x128xf32> to vector<4x128xf32>
    %68 = arith.addf %65, %67 : vector<4x128xf32>
    %cst_31 = arith.constant 0.000000e+00 : f32
    %69 = vector.broadcast %cst_31 : f32 to vector<4x128xf32>
    %70 = arith.maximumf %68, %69 : vector<4x128xf32>
    %c776 = arith.constant 776 : index
    %c0_32 = arith.constant 0 : index
    %71 = vector.load %arg4[%c776, %c0_32] : memref<1032x128xbf16, #tpu.memory_space<vmem>>, vector<128x128xbf16>
    %72 = arith.truncf %70 : vector<4x128xf32> to vector<4x128xbf16>
    %cst_33 = arith.constant dense<0.000000e+00> : vector<4x128xf32>
    %73 = tpu.matmul %72, %71, %cst_33 {dimension_numbers = #tpu.dot_dimension_numbers<[1], [0], [0], [1], [0, 0, 1, 1], [], []>} : vector<4x128xbf16>, vector<128x128xbf16>, vector<4x128xf32> -> vector<4x128xf32>
    %74 = vector.extract_strided_slice %0 {offsets = [8, 0], sizes = [1, 128], strides = [1, 1]} : vector<16x128xf32> to vector<1x128xf32>
    %75 = vector.broadcast %74 : vector<1x128xf32> to vector<4x128xf32>
    %76 = arith.addf %73, %75 : vector<4x128xf32>
    %cst_34 = arith.constant 0.000000e+00 : f32
    %77 = vector.broadcast %cst_34 : f32 to vector<4x128xf32>
    %78 = arith.maximumf %76, %77 : vector<4x128xf32>
    %c904 = arith.constant 904 : index
    %c0_35 = arith.constant 0 : index
    %79 = vector.load %arg4[%c904, %c0_35] : memref<1032x128xbf16, #tpu.memory_space<vmem>>, vector<128x128xbf16>
    %80 = arith.truncf %78 : vector<4x128xf32> to vector<4x128xbf16>
    %cst_36 = arith.constant dense<0.000000e+00> : vector<4x128xf32>
    %81 = tpu.matmul %80, %79, %cst_36 {dimension_numbers = #tpu.dot_dimension_numbers<[1], [0], [0], [1], [0, 0, 1, 1], [], []>} : vector<4x128xbf16>, vector<128x128xbf16>, vector<4x128xf32> -> vector<4x128xf32>
    %82 = vector.extract_strided_slice %0 {offsets = [9, 0], sizes = [1, 128], strides = [1, 1]} : vector<16x128xf32> to vector<1x128xf32>
    %83 = vector.broadcast %82 : vector<1x128xf32> to vector<4x128xf32>
    %84 = arith.addf %81, %83 : vector<4x128xf32>
    %c0_37 = arith.constant 0 : index
    %c0_38 = arith.constant 0 : index
    %85 = vector.load %arg6[%c0_37, %c0_38] : memref<4x128xf32, #tpu.memory_space<vmem>>, vector<4x128xf32>
    tpu.vector_store %arg6[%c0_37, %c0_38], %84 {strides = array<i32>} : memref<4x128xf32, #tpu.memory_space<vmem>>, vector<4x128xf32>,
    return
  }
  func.func @transform_0(%arg0: i32) -> (i32, i32) {
    %c0_i32 = arith.constant 0 : i32
    %c0_i32_0 = arith.constant 0 : i32
    return %arg0, %c0_i32 : i32, i32
  }
  func.func @transform_1(%arg0: i32) -> (i32, i32) {
    %c0_i32 = arith.constant 0 : i32
    %c0_i32_0 = arith.constant 0 : i32
    return %arg0, %c0_i32 : i32, i32
  }
  func.func @transform_2(%arg0: i32) -> (i32, i32) {
    %c0_i32 = arith.constant 0 : i32
    %c0_i32_0 = arith.constant 0 : i32
    %c0_i32_1 = arith.constant 0 : i32
    return %c0_i32, %c0_i32_0 : i32, i32
  }
  func.func @transform_3(%arg0: i32) -> (i32, i32) {
    %c0_i32 = arith.constant 0 : i32
    %c0_i32_0 = arith.constant 0 : i32
    %c0_i32_1 = arith.constant 0 : i32
    return %c0_i32, %c0_i32_0 : i32, i32
  }
  func.func @transform_4(%arg0: i32) -> (i32, i32) {
    %c0_i32 = arith.constant 0 : i32
    %c0_i32_0 = arith.constant 0 : i32
    %c0_i32_1 = arith.constant 0 : i32
    return %c0_i32, %c0_i32_0 : i32, i32
  }
  func.func @transform_5(%arg0: i32) -> (i32, i32) {
    %c0_i32 = arith.constant 0 : i32
    %c0_i32_0 = arith.constant 0 : i32
    return %arg0, %c0_i32 : i32, i32
  }
}

module attributes {stable_mosaic.version = 11 : i64} {
  func.func @_qnet_kernel(%arg0: i32, %arg1: memref<4x3072xf32, #tpu.memory_space<vmem>>, %arg2: memref<4x8xf32, #tpu.memory_space<vmem>>, %arg3: memref<1024x384xbf16, #tpu.memory_space<vmem>>, %arg4: memref<1032x128xbf16, #tpu.memory_space<vmem>>, %arg5: memref<16x128xf32, #tpu.memory_space<vmem>>, %arg6: memref<4x128xf32, #tpu.memory_space<vmem>>) attributes {dimension_semantics = [#tpu.dimension_semantics<parallel>], iteration_bounds = array<i64: 1>, scalar_prefetch = 0 : i64, scratch_operands = 0 : i64, tpu.core_type = #tpu.core_type<tc>, window_params = [{transform_indices = @transform_0, window_bounds = array<i64: 4, 3072>}, {transform_indices = @transform_1, window_bounds = array<i64: 4, 8>}, {pipeline_mode = #tpu.pipeline_mode<synchronous>, transform_indices = @transform_2, window_bounds = array<i64: 1024, 384>}, {pipeline_mode = #tpu.pipeline_mode<synchronous>, transform_indices = @transform_3, window_bounds = array<i64: 1032, 128>}, {pipeline_mode = #tpu.pipeline_mode<synchronous>, transform_indices = @transform_4, window_bounds = array<i64: 16, 128>}, {transform_indices = @transform_5, window_bounds = array<i64: 4, 128>}]} {
    %c0 = arith.constant 0 : index
    %c0_0 = arith.constant 0 : index
    %0 = vector.load %arg5[%c0, %c0_0] : memref<16x128xf32, #tpu.memory_space<vmem>>, vector<16x128xf32>
    %c0_1 = arith.constant 0 : index
    %c0_2 = arith.constant 0 : index
    %1 = vector.load %arg1[%c0_1, %c0_2] : memref<4x3072xf32, #tpu.memory_space<vmem>>, vector<4x1024xf32>
    %c0_3 = arith.constant 0 : index
    %c0_4 = arith.constant 0 : index
    %2 = vector.load %arg3[%c0_3, %c0_4] : memref<1024x384xbf16, #tpu.memory_space<vmem>>, vector<1024x128xbf16>
    %3 = arith.truncf %1 : vector<4x1024xf32> to vector<4x1024xbf16>
    %cst = arith.constant dense<0.000000e+00> : vector<4x128xf32>
    %4 = tpu.matmul %3, %2, %cst {dimension_numbers = #tpu.dot_dimension_numbers<[1], [0], [0], [1], [0, 0, 1, 1], [], []>} : vector<4x1024xbf16>, vector<1024x128xbf16>, vector<4x128xf32> -> vector<4x128xf32>
    %5 = vector.extract_strided_slice %0 {offsets = [0, 0], sizes = [1, 128], strides = [1, 1]} : vector<16x128xf32> to vector<1x128xf32>
    %6 = vector.broadcast %5 : vector<1x128xf32> to vector<4x128xf32>
    %7 = arith.addf %4, %6 : vector<4x128xf32>
    %cst_5 = arith.constant 0.000000e+00 : f32
    %8 = vector.broadcast %cst_5 : f32 to vector<4x128xf32>
    %9 = arith.maximumf %7, %8 : vector<4x128xf32>
    %c0_6 = arith.constant 0 : index
    %c1024 = arith.constant 1024 : index
    %10 = vector.load %arg1[%c0_6, %c1024] : memref<4x3072xf32, #tpu.memory_space<vmem>>, vector<4x1024xf32>
    %c0_7 = arith.constant 0 : index
    %c128 = arith.constant 128 : index
    %11 = vector.load %arg3[%c0_7, %c128] : memref<1024x384xbf16, #tpu.memory_space<vmem>>, vector<1024x128xbf16>
    %12 = arith.truncf %10 : vector<4x1024xf32> to vector<4x1024xbf16>
    %cst_8 = arith.constant dense<0.000000e+00> : vector<4x128xf32>
    %13 = tpu.matmul %12, %11, %cst_8 {dimension_numbers = #tpu.dot_dimension_numbers<[1], [0], [0], [1], [0, 0, 1, 1], [], []>} : vector<4x1024xbf16>, vector<1024x128xbf16>, vector<4x128xf32> -> vector<4x128xf32>
    %14 = vector.extract_strided_slice %0 {offsets = [1, 0], sizes = [1, 128], strides = [1, 1]} : vector<16x128xf32> to vector<1x128xf32>
    %15 = vector.broadcast %14 : vector<1x128xf32> to vector<4x128xf32>
    %16 = arith.addf %13, %15 : vector<4x128xf32>
    %cst_9 = arith.constant 0.000000e+00 : f32
    %17 = vector.broadcast %cst_9 : f32 to vector<4x128xf32>
    %18 = arith.maximumf %16, %17 : vector<4x128xf32>
    %c0_10 = arith.constant 0 : index
    %c2048 = arith.constant 2048 : index
    %19 = vector.load %arg1[%c0_10, %c2048] : memref<4x3072xf32, #tpu.memory_space<vmem>>, vector<4x1024xf32>
    %c0_11 = arith.constant 0 : index
    %c256 = arith.constant 256 : index
    %20 = vector.load %arg3[%c0_11, %c256] : memref<1024x384xbf16, #tpu.memory_space<vmem>>, vector<1024x128xbf16>
    %21 = arith.truncf %19 : vector<4x1024xf32> to vector<4x1024xbf16>
    %cst_12 = arith.constant dense<0.000000e+00> : vector<4x128xf32>
    %22 = tpu.matmul %21, %20, %cst_12 {dimension_numbers = #tpu.dot_dimension_numbers<[1], [0], [0], [1], [0, 0, 1, 1], [], []>} : vector<4x1024xbf16>, vector<1024x128xbf16>, vector<4x128xf32> -> vector<4x128xf32>
    %23 = vector.extract_strided_slice %0 {offsets = [2, 0], sizes = [1, 128], strides = [1, 1]} : vector<16x128xf32> to vector<1x128xf32>
    %24 = vector.broadcast %23 : vector<1x128xf32> to vector<4x128xf32>
    %25 = arith.addf %22, %24 : vector<4x128xf32>
    %cst_13 = arith.constant 0.000000e+00 : f32
    %26 = vector.broadcast %cst_13 : f32 to vector<4x128xf32>
    %27 = arith.maximumf %25, %26 : vector<4x128xf32>
    %28 = tpu.concatenate %9, %18, %27 in 1 : vector<4x128xf32>, vector<4x128xf32>, vector<4x128xf32> -> vector<4x384xf32>
    %c0_14 = arith.constant 0 : index
    %c0_15 = arith.constant 0 : index
    %29 = vector.load %arg4[%c0_14, %c0_15] : memref<1032x128xbf16, #tpu.memory_space<vmem>>, vector<384x128xbf16>
    %30 = arith.truncf %28 : vector<4x384xf32> to vector<4x384xbf16>
    %cst_16 = arith.constant dense<0.000000e+00> : vector<4x128xf32>
    %31 = tpu.matmul %30, %29, %cst_16 {dimension_numbers = #tpu.dot_dimension_numbers<[1], [0], [0], [1], [0, 0, 1, 1], [], []>} : vector<4x384xbf16>, vector<384x128xbf16>, vector<4x128xf32> -> vector<4x128xf32>
    %32 = vector.extract_strided_slice %0 {offsets = [3, 0], sizes = [1, 128], strides = [1, 1]} : vector<16x128xf32> to vector<1x128xf32>
    %33 = vector.broadcast %32 : vector<1x128xf32> to vector<4x128xf32>
    %34 = arith.addf %31, %33 : vector<4x128xf32>
    %cst_17 = arith.constant 0.000000e+00 : f32
    %35 = vector.broadcast %cst_17 : f32 to vector<4x128xf32>
    %36 = arith.maximumf %34, %35 : vector<4x128xf32>
    %c384 = arith.constant 384 : index
    %c0_18 = arith.constant 0 : index
    %37 = vector.load %arg4[%c384, %c0_18] : memref<1032x128xbf16, #tpu.memory_space<vmem>>, vector<128x128xbf16>
    %38 = arith.truncf %36 : vector<4x128xf32> to vector<4x128xbf16>
    %cst_19 = arith.constant dense<0.000000e+00> : vector<4x128xf32>
    %39 = tpu.matmul %38, %37, %cst_19 {dimension_numbers = #tpu.dot_dimension_numbers<[1], [0], [0], [1], [0, 0, 1, 1], [], []>} : vector<4x128xbf16>, vector<128x128xbf16>, vector<4x128xf32> -> vector<4x128xf32>
    %40 = vector.extract_strided_slice %0 {offsets = [4, 0], sizes = [1, 128], strides = [1, 1]} : vector<16x128xf32> to vector<1x128xf32>
    %41 = vector.broadcast %40 : vector<1x128xf32> to vector<4x128xf32>
    %42 = arith.addf %39, %41 : vector<4x128xf32>
    %cst_20 = arith.constant 0.000000e+00 : f32
    %43 = vector.broadcast %cst_20 : f32 to vector<4x128xf32>
    %44 = arith.maximumf %42, %43 : vector<4x128xf32>
    %c0_21 = arith.constant 0 : index
    %c0_22 = arith.constant 0 : index
    %45 = vector.load %arg2[%c0_21, %c0_22] : memref<4x8xf32, #tpu.memory_space<vmem>>, vector<4x8xf32>
    %c512 = arith.constant 512 : index
    %c0_23 = arith.constant 0 : index
    %46 = vector.load %arg4[%c512, %c0_23] : memref<1032x128xbf16, #tpu.memory_space<vmem>>, vector<8x128xbf16>
    %47 = arith.truncf %45 : vector<4x8xf32> to vector<4x8xbf16>
    %cst_24 = arith.constant dense<0.000000e+00> : vector<4x128xf32>
    %48 = tpu.matmul %47, %46, %cst_24 {dimension_numbers = #tpu.dot_dimension_numbers<[1], [0], [0], [1], [0, 0, 1, 1], [], []>} : vector<4x8xbf16>, vector<8x128xbf16>, vector<4x128xf32> -> vector<4x128xf32>
    %49 = vector.extract_strided_slice %0 {offsets = [5, 0], sizes = [1, 128], strides = [1, 1]} : vector<16x128xf32> to vector<1x128xf32>
    %50 = vector.broadcast %49 : vector<1x128xf32> to vector<4x128xf32>
    %51 = arith.addf %48, %50 : vector<4x128xf32>
    %cst_25 = arith.constant 0.000000e+00 : f32
    %52 = vector.broadcast %cst_25 : f32 to vector<4x128xf32>
    %53 = arith.maximumf %51, %52 : vector<4x128xf32>
    %c520 = arith.constant 520 : index
    %c0_26 = arith.constant 0 : index
    %54 = vector.load %arg4[%c520, %c0_26] : memref<1032x128xbf16, #tpu.memory_space<vmem>>, vector<128x128xbf16>
    %55 = arith.truncf %53 : vector<4x128xf32> to vector<4x128xbf16>
    %cst_27 = arith.constant dense<0.000000e+00> : vector<4x128xf32>
    %56 = tpu.matmul %55, %54, %cst_27 {dimension_numbers = #tpu.dot_dimension_numbers<[1], [0], [0], [1], [0, 0, 1, 1], [], []>} : vector<4x128xbf16>, vector<128x128xbf16>, vector<4x128xf32> -> vector<4x128xf32>
    %57 = vector.extract_strided_slice %0 {offsets = [6, 0], sizes = [1, 128], strides = [1, 1]} : vector<16x128xf32> to vector<1x128xf32>
    %58 = vector.broadcast %57 : vector<1x128xf32> to vector<4x128xf32>
    %59 = arith.addf %56, %58 : vector<4x128xf32>
    %cst_28 = arith.constant 0.000000e+00 : f32
    %60 = vector.broadcast %cst_28 : f32 to vector<4x128xf32>
    %61 = arith.maximumf %59, %60 : vector<4x128xf32>
    %62 = arith.addf %61, %44 : vector<4x128xf32>
    %c648 = arith.constant 648 : index
    %c0_29 = arith.constant 0 : index
    %63 = vector.load %arg4[%c648, %c0_29] : memref<1032x128xbf16, #tpu.memory_space<vmem>>, vector<128x128xbf16>
    %64 = arith.truncf %62 : vector<4x128xf32> to vector<4x128xbf16>
    %cst_30 = arith.constant dense<0.000000e+00> : vector<4x128xf32>
    %65 = tpu.matmul %64, %63, %cst_30 {dimension_numbers = #tpu.dot_dimension_numbers<[1], [0], [0], [1], [0, 0, 1, 1], [], []>} : vector<4x128xbf16>, vector<128x128xbf16>, vector<4x128xf32> -> vector<4x128xf32>
    %66 = vector.extract_strided_slice %0 {offsets = [7, 0], sizes = [1, 128], strides = [1, 1]} : vector<16x128xf32> to vector<1x128xf32>
    %67 = vector.broadcast %66 : vector<1x128xf32> to vector<4x128xf32>
    %68 = arith.addf %65, %67 : vector<4x128xf32>
    %cst_31 = arith.constant 0.000000e+00 : f32
    %69 = vector.broadcast %cst_31 : f32 to vector<4x128xf32>
    %70 = arith.maximumf %68, %69 : vector<4x128xf32>
    %c776 = arith.constant 776 : index
    %c0_32 = arith.constant 0 : index
    %71 = vector.load %arg4[%c776, %c0_32] : memref<1032x128xbf16, #tpu.memory_space<vmem>>, vector<128x128xbf16>
    %72 = arith.truncf %70 : vector<4x128xf32> to vector<4x128xbf16>
    %cst_33 = arith.constant dense<0.000000e+00> : vector<4x128xf32>
    %73 = tpu.matmul %72, %71, %cst_33 {dimension_numbers = #tpu.dot_dimension_numbers<[1], [0], [0], [1], [0, 0, 1, 1], [], []>} : vector<4x128xbf16>, vector<128x128xbf16>, vector<4x128xf32> -> vector<4x128xf32>
    %74 = vector.extract_strided_slice %0 {offsets = [8, 0], sizes = [1, 128], strides = [1, 1]} : vector<16x128xf32> to vector<1x128xf32>
    %75 = vector.broadcast %74 : vector<1x128xf32> to vector<4x128xf32>
    %76 = arith.addf %73, %75 : vector<4x128xf32>
    %cst_34 = arith.constant 0.000000e+00 : f32
    %77 = vector.broadcast %cst_34 : f32 to vector<4x128xf32>
    %78 = arith.maximumf %76, %77 : vector<4x128xf32>
    %c904 = arith.constant 904 : index
    %c0_35 = arith.constant 0 : index
    %79 = vector.load %arg4[%c904, %c0_35] : memref<1032x128xbf16, #tpu.memory_space<vmem>>, vector<128x128xbf16>
    %80 = arith.truncf %78 : vector<4x128xf32> to vector<4x128xbf16>
    %cst_36 = arith.constant dense<0.000000e+00> : vector<4x128xf32>
    %81 = tpu.matmul %80, %79, %cst_36 {dimension_numbers = #tpu.dot_dimension_numbers<[1], [0], [0], [1], [0, 0, 1, 1], [], []>} : vector<4x128xbf16>, vector<128x128xbf16>, vector<4x128xf32> -> vector<4x128xf32>
    %82 = vector.extract_strided_slice %0 {offsets = [9, 0], sizes = [1, 128], strides = [1, 1]} : vector<16x128xf32> to vector<1x128xf32>
    %83 = vector.broadcast %82 : vector<1x128xf32> to vector<4x128xf32>
    %84 = arith.addf %81, %83 : vector<4x128xf32>
    %c0_37 = arith.constant 0 : index
    %c0_38 = arith.constant 0 : index
    %85 = vector.load %arg6[%c0_37, %c0_38] : memref<4x128xf32, #tpu.memory_space<vmem>>, vector<4x128xf32>
    tpu.vector_store %arg6[%c0_37, %c0_38], %84 {strides = array<i32>} : memref<4x128xf32, #tpu.memory_space<vmem>>, vector<4x128xf32>,
    return
  }
  func.func @transform_0(%arg0: i32) -> (i32, i32) {
    %c0_i32 = arith.constant 0 : i32
    %c0_i32_0 = arith.constant 0 : i32
    return %arg0, %c0_i32 : i32, i32
  }
  func.func @transform_1(%arg0: i32) -> (i32, i32) {
    %c0_i32 = arith.constant 0 : i32
    %c0_i32_0 = arith.constant 0 : i32
    return %arg0, %c0_i32 : i32, i32
  }
  func.func @transform_2(%arg0: i32) -> (i32, i32) {
    %c0_i32 = arith.constant 0 : i32
    %c0_i32_0 = arith.constant 0 : i32
    %c0_i32_1 = arith.constant 0 : i32
    return %c0_i32, %c0_i32_0 : i32, i32
  }
  func.func @transform_3(%arg0: i32) -> (i32, i32) {
    %c0_i32 = arith.constant 0 : i32
    %c0_i32_0 = arith.constant 0 : i32
    %c0_i32_1 = arith.constant 0 : i32
    return %c0_i32, %c0_i32_0 : i32, i32
  }
  func.func @transform_4(%arg0: i32) -> (i32, i32) {
    %c0_i32 = arith.constant 0 : i32
    %c0_i32_0 = arith.constant 0 : i32
    %c0_i32_1 = arith.constant 0 : i32
    return %c0_i32, %c0_i32_0 : i32, i32
  }
  func.func @transform_5(%arg0: i32) -> (i32, i32) {
    %c0_i32 = arith.constant 0 : i32
    %c0_i32_0 = arith.constant 0 : i32
    return %arg0, %c0_i32 : i32, i32
  }
}

</mosaic_0001>

<llo_original>
// kernel: tpu_custom_call.1
$region0: #{tpu_custom_call.1}
  #allocation0 [shape = 'u32[]', space=smem, size = 0x4, offset = 0x4, fixed_abs, tag = 'smem constant byte address 0x4 - core index']
  #allocation1 [shape = 'u32[144,128]{1,0:T(1,128)}', space=vmem, size = 0x12000, scoped, tag = 'internal scratch']
  %s0 = inlined_call_operand.hbm [shape: f32[4,3072], index: 0, kind: input, shape index: {}]
  %s1 = inlined_call_operand.hbm [shape: f32[4,8], index: 1, kind: input, shape index: {}]
  %s2 = inlined_call_operand.hbm [shape: bf16[1024,384], index: 2, kind: input, shape index: {}]
  %s3 = inlined_call_operand.hbm [shape: bf16[1032,128], index: 3, kind: input, shape index: {}]
  %s4 = inlined_call_operand.hbm [shape: f32[16,128], index: 4, kind: input, shape index: {}]
  %s5 = inlined_call_operand.hbm [shape: f32[4,128], index: 5, kind: output, shape index: {}]
  %s6 = sld [smem:[#allocation0]]
  $region50: #{tpu_custom_call.1} parent=0
    _
  %s8 = ssub.s32 1, %s6
  %s9 = scalar_select 0, %s8, %s6
  $region1: #{tpu_custom_call.1} parent=0
    #allocation2 [shape = 'u8[49152]{0}', space=vmem, size = 0xc000, scoped, tag = 'input window, operand 0, single buffered']
    #allocation3 [shape = 's32[1]{0}', space=sflag, size = 0x4, scoped, tag = 'scoped memory for tpu_custom_call.1']
    #allocation4 [shape = 's32[1]{0}', space=sflag, size = 0x4, scoped, tag = 'scoped memory for tpu_custom_call.1']
    #allocation5 [shape = 'u8[2048]{0}', space=vmem, size = 0x800, scoped, tag = 'input window, operand 1, single buffered']
    #allocation6 [shape = 's32[1]{0}', space=sflag, size = 0x4, scoped, tag = 'scoped memory for tpu_custom_call.1']
    #allocation7 [shape = 'u8[786432]{0}', space=vmem, size = 0xc0000, scoped, tag = 'input window, operand 2, single buffered']
    #allocation8 [shape = 'u8[264192]{0}', space=vmem, size = 0x40800, scoped, tag = 'input window, operand 3, single buffered']
    #allocation9 [shape = 's32[1]{0}', space=sflag, size = 0x4, scoped, tag = 'scoped memory for tpu_custom_call.1']
    #allocation10 [shape = 'u8[8192]{0}', space=vmem, size = 0x2000, scoped, tag = 'input window, operand 4, single buffered']
    #allocation11 [shape = 'u8[2048]{0}', space=vmem, size = 0x800, scoped, tag = 'output window, operand 0, single buffered']
    %10 = vsyncpa [#allocation3], 0
    %11 = vsyncpa [#allocation6], 0
    %12 = vsyncpa [#allocation9], 0
    %13 = vsyncpa [#allocation4], 0
    // Predicated region
    $region2: #{tpu_custom_call.1} parent=1 // pred_check
      _
    $region3: #{tpu_custom_call.1} parent=1 // pred_check_branch
      %15 = sbr.rel (0) target = $region5
    $region4: #{tpu_custom_call.1} parent=1 // pred_region
      %s17 = ssub.s32 1536, 1536
      %18 = vsyncadd [#allocation3], %s17
      %s20 = sshll.u32 [#allocation2], 4
      %s21 = int_to_ptr.vmem [resolvable:$true] %s20
      %23 = dma.hbm_to_vmem [thread:$0]  %s0, 1536, %s21, [#allocation3]
    $region5: #{tpu_custom_call.1} parent=1 // pred_fallthru
      _
    // Predicated region
    $region6: #{tpu_custom_call.1} parent=1 // pred_check
      _
    $region7: #{tpu_custom_call.1} parent=1 // pred_check_branch
      %25 = sbr.rel (0) target = $region9
    $region8: #{tpu_custom_call.1} parent=1 // pred_region
      %s27 = ssub.s32 64, 64
      %28 = vsyncadd [#allocation6], %s27
      %s30 = sshll.u32 [#allocation5], 4
      %s31 = int_to_ptr.vmem [resolvable:$true] %s30
      %33 = dma.hbm_to_vmem [thread:$0]  %s1, 64, %s31, [#allocation6]
    $region9: #{tpu_custom_call.1} parent=1 // pred_fallthru
      _
    // Predicated region
    $region10: #{tpu_custom_call.1} parent=1 // pred_check
      _
    $region11: #{tpu_custom_call.1} parent=1 // pred_check_branch
      %35 = sbr.rel (0) target = $region13
    $region12: #{tpu_custom_call.1} parent=1 // pred_region
      %s37 = ssub.s32 24576, 24576
      %38 = vsyncadd [#allocation6], %s37
      %s39 = sshll.u32 [#allocation7], 4
      %s40 = int_to_ptr.vmem [resolvable:$true] %s39
      %45 = dma.hbm_to_vmem [thread:$0]  %s2, 24576, %s40, [#allocation6], 192, 192, 12
    $region13: #{tpu_custom_call.1} parent=1 // pred_fallthru
      _
    // Predicated region
    $region14: #{tpu_custom_call.1} parent=1 // pred_check
      _
    $region15: #{tpu_custom_call.1} parent=1 // pred_check_branch
      %47 = sbr.rel (0) target = $region17
    $region16: #{tpu_custom_call.1} parent=1 // pred_region
      %s49 = ssub.s32 8256, 8256
      %50 = vsyncadd [#allocation9], %s49
      %s51 = sshll.u32 [#allocation8], 4
      %s52 = int_to_ptr.vmem [resolvable:$true] %s51
      %57 = dma.hbm_to_vmem [thread:$0]  %s3, 8256, %s52, [#allocation9], 64, 64, 4
    $region17: #{tpu_custom_call.1} parent=1 // pred_fallthru
      _
    // Predicated region
    $region18: #{tpu_custom_call.1} parent=1 // pred_check
      _
    $region19: #{tpu_custom_call.1} parent=1 // pred_check_branch
      %59 = sbr.rel (0) target = $region21
    $region20: #{tpu_custom_call.1} parent=1 // pred_region
      %s61 = ssub.s32 256, 256
      %62 = vsyncadd [#allocation9], %s61
      %s63 = sshll.u32 [#allocation10], 4
      %s64 = int_to_ptr.vmem [resolvable:$true] %s63
      %69 = dma.hbm_to_vmem [thread:$0]  %s4, 256, %s64, [#allocation9], 128, 128, 8
    $region21: #{tpu_custom_call.1} parent=1 // pred_fallthru
      _
    // Predicated region
    $region22: #{tpu_custom_call.1} parent=1 // pred_check
      _
    $region23: #{tpu_custom_call.1} parent=1 // pred_check_branch
      %71 = sbr.rel (0) target = $region25
    $region24: #{tpu_custom_call.1} parent=1 // pred_region
      %72 = dma.done [#allocation3], 1536
    $region25: #{tpu_custom_call.1} parent=1 // pred_fallthru
      _
    // Predicated region
    $region26: #{tpu_custom_call.1} parent=1 // pred_check
      _
    $region27: #{tpu_custom_call.1} parent=1 // pred_check_branch
      %74 = sbr.rel (0) target = $region29
    $region28: #{tpu_custom_call.1} parent=1 // pred_region
      %75 = dma.done [#allocation6], 64
    $region29: #{tpu_custom_call.1} parent=1 // pred_fallthru
      _
    // Predicated region
    $region30: #{tpu_custom_call.1} parent=1 // pred_check
      _
    $region31: #{tpu_custom_call.1} parent=1 // pred_check_branch
      %77 = sbr.rel (0) target = $region33
    $region32: #{tpu_custom_call.1} parent=1 // pred_region
      %78 = dma.done [#allocation6], 24576
    $region33: #{tpu_custom_call.1} parent=1 // pred_fallthru
      _
    // Predicated region
    $region34: #{tpu_custom_call.1} parent=1 // pred_check
      _
    $region35: #{tpu_custom_call.1} parent=1 // pred_check_branch
      %80 = sbr.rel (0) target = $region37
    $region36: #{tpu_custom_call.1} parent=1 // pred_region
      %81 = dma.done [#allocation9], 8256
    $region37: #{tpu_custom_call.1} parent=1 // pred_fallthru
      _
    // Predicated region
    $region38: #{tpu_custom_call.1} parent=1 // pred_check
      _
    $region39: #{tpu_custom_call.1} parent=1 // pred_check_branch
      %83 = sbr.rel (0) target = $region41
    $region40: #{tpu_custom_call.1} parent=1 // pred_region
      %84 = dma.done [#allocation9], 256
    $region41: #{tpu_custom_call.1} parent=1 // pred_fallthru
      _
    %v86 = vld [vmem:[#allocation10] sm:$0xff]
    %v87 = vld [vmem:[#allocation10 + $0x8] sm:$0xff]
    %v88 = vld [vmem:[#allocation2] sm:$0xff]
    %v89 = vld [vmem:[#allocation2 + $0x8] sm:$0xff]
    %v90 = vld [vmem:[#allocation2 + $0x10] sm:$0xff]
    %v91 = vld [vmem:[#allocation2 + $0x18] sm:$0xff]
    %v92 = vld [vmem:[#allocation7] sm:$0xf]
    %v93 = vld [vmem:[#allocation7 + $0xc] sm:$0xf]
    %v94 = vld [vmem:[#allocation7 + $0x18] sm:$0xf]
    %v95 = vld [vmem:[#allocation7 + $0x24] sm:$0xf]
    %v96 = vld [vmem:[#allocation7 + $0x30] sm:$0xf]
    %v97 = vld [vmem:[#allocation7 + $0x3c] sm:$0xf]
    %v98 = vld [vmem:[#allocation7 + $0x48] sm:$0xf]
    %v99 = vld [vmem:[#allocation7 + $0x54] sm:$0xf]
    %v100 = vld [vmem:[#allocation7 + $0x60] sm:$0xf]
    %v101 = vld [vmem:[#allocation7 + $0x6c] sm:$0xf]
    %v102 = vld [vmem:[#allocation7 + $0x78] sm:$0xf]
    %v103 = vld [vmem:[#allocation7 + $0x84] sm:$0xf]
    %v104 = vld [vmem:[#allocation7 + $0x90] sm:$0xf]
    %v105 = vld [vmem:[#allocation7 + $0x9c] sm:$0xf]
    %v106 = vld [vmem:[#allocation7 + $0xa8] sm:$0xf]
    %v107 = vld [vmem:[#allocation7 + $0xb4] sm:$0xf]
    %v108 = vld [vmem:[#allocation7 + $0xc0] sm:$0xf]
    %v109 = vld [vmem:[#allocation7 + $0xcc] sm:$0xf]
    %v110 = vld [vmem:[#allocation7 + $0xd8] sm:$0xf]
    %v111 = vld [vmem:[#allocation7 + $0xe4] sm:$0xf]
    %v112 = vld [vmem:[#allocation7 + $0xf0] sm:$0xf]
    %v113 = vld [vmem:[#allocation7 + $0xfc] sm:$0xf]
    %v114 = vld [vmem:[#allocation7 + $0x108] sm:$0xf]
    %v115 = vld [vmem:[#allocation7 + $0x114] sm:$0xf]
    %v116 = vld [vmem:[#allocation7 + $0x120] sm:$0xf]
    %v117 = vld [vmem:[#allocation7 + $0x12c] sm:$0xf]
    %v118 = vld [vmem:[#allocation7 + $0x138] sm:$0xf]
    %v119 = vld [vmem:[#allocation7 + $0x144] sm:$0xf]
    %v120 = vld [vmem:[#allocation7 + $0x150] sm:$0xf]
    %v121 = vld [vmem:[#allocation7 + $0x15c] sm:$0xf]
    %v122 = vld [vmem:[#allocation7 + $0x168] sm:$0xf]
    %v123 = vld [vmem:[#allocation7 + $0x174] sm:$0xf]
    %v124 = vld [vmem:[#allocation7 + $0x180] sm:$0xf]
    %v125 = vld [vmem:[#allocation7 + $0x18c] sm:$0xf]
    %v126 = vld [vmem:[#allocation7 + $0x198] sm:$0xf]
    %v127 = vld [vmem:[#allocation7 + $0x1a4] sm:$0xf]
    %v128 = vld [vmem:[#allocation7 + $0x1b0] sm:$0xf]
    %v129 = vld [vmem:[#allocation7 + $0x1bc] sm:$0xf]
    %v130 = vld [vmem:[#allocation7 + $0x1c8] sm:$0xf]
    %v131 = vld [vmem:[#allocation7 + $0x1d4] sm:$0xf]
    %v132 = vld [vmem:[#allocation7 + $0x1e0] sm:$0xf]
    %v133 = vld [vmem:[#allocation7 + $0x1ec] sm:$0xf]
    %v134 = vld [vmem:[#allocation7 + $0x1f8] sm:$0xf]
    %v135 = vld [vmem:[#allocation7 + $0x204] sm:$0xf]
    %v136 = vld [vmem:[#allocation7 + $0x210] sm:$0xf]
    %v137 = vld [vmem:[#allocation7 + $0x21c] sm:$0xf]
    %v138 = vld [vmem:[#allocation7 + $0x228] sm:$0xf]
    %v139 = vld [vmem:[#allocation7 + $0x234] sm:$0xf]
    %v140 = vld [vmem:[#allocation7 + $0x240] sm:$0xf]
    %v141 = vld [vmem:[#allocation7 + $0x24c] sm:$0xf]
    %v142 = vld [vmem:[#allocation7 + $0x258] sm:$0xf]
    %v143 = vld [vmem:[#allocation7 + $0x264] sm:$0xf]
    %v144 = vld [vmem:[#allocation7 + $0x270] sm:$0xf]
    %v145 = vld [vmem:[#allocation7 + $0x27c] sm:$0xf]
    %v146 = vld [vmem:[#allocation7 + $0x288] sm:$0xf]
    %v147 = vld [vmem:[#allocation7 + $0x294] sm:$0xf]
    %v148 = vld [vmem:[#allocation7 + $0x2a0] sm:$0xf]
    %v149 = vld [vmem:[#allocation7 + $0x2ac] sm:$0xf]
    %v150 = vld [vmem:[#allocation7 + $0x2b8] sm:$0xf]
    %v151 = vld [vmem:[#allocation7 + $0x2c4] sm:$0xf]
    %v152 = vld [vmem:[#allocation7 + $0x2d0] sm:$0xf]
    %v153 = vld [vmem:[#allocation7 + $0x2dc] sm:$0xf]
    %v154 = vld [vmem:[#allocation7 + $0x2e8] sm:$0xf]
    %v155 = vld [vmem:[#allocation7 + $0x2f4] sm:$0xf]
    %v156 = vld [vmem:[#allocation7 + $0x300] sm:$0xf]
    %v157 = vld [vmem:[#allocation7 + $0x30c] sm:$0xf]
    %v158 = vld [vmem:[#allocation7 + $0x318] sm:$0xf]
    %v159 = vld [vmem:[#allocation7 + $0x324] sm:$0xf]
    %v160 = vld [vmem:[#allocation7 + $0x330] sm:$0xf]
    %v161 = vld [vmem:[#allocation7 + $0x33c] sm:$0xf]
    %v162 = vld [vmem:[#allocation7 + $0x348] sm:$0xf]
    %v163 = vld [vmem:[#allocation7 + $0x354] sm:$0xf]
    %v164 = vld [vmem:[#allocation7 + $0x360] sm:$0xf]
    %v165 = vld [vmem:[#allocation7 + $0x36c] sm:$0xf]
    %v166 = vld [vmem:[#allocation7 + $0x378] sm:$0xf]
    %v167 = vld [vmem:[#allocation7 + $0x384] sm:$0xf]
    %v168 = vld [vmem:[#allocation7 + $0x390] sm:$0xf]
    %v169 = vld [vmem:[#allocation7 + $0x39c] sm:$0xf]
    %v170 = vld [vmem:[#allocation7 + $0x3a8] sm:$0xf]
    %v171 = vld [vmem:[#allocation7 + $0x3b4] sm:$0xf]
    %v172 = vld [vmem:[#allocation7 + $0x3c0] sm:$0xf]
    %v173 = vld [vmem:[#allocation7 + $0x3cc] sm:$0xf]
    %v174 = vld [vmem:[#allocation7 + $0x3d8] sm:$0xf]
    %v175 = vld [vmem:[#allocation7 + $0x3e4] sm:$0xf]
    %v176 = vld [vmem:[#allocation7 + $0x3f0] sm:$0xf]
    %v177 = vld [vmem:[#allocation7 + $0x3fc] sm:$0xf]
    %v178 = vld [vmem:[#allocation7 + $0x408] sm:$0xf]
    %v179 = vld [vmem:[#allocation7 + $0x414] sm:$0xf]
    %v180 = vld [vmem:[#allocation7 + $0x420] sm:$0xf]
    %v181 = vld [vmem:[#allocation7 + $0x42c] sm:$0xf]
    %v182 = vld [vmem:[#allocation7 + $0x438] sm:$0xf]
    %v183 = vld [vmem:[#allocation7 + $0x444] sm:$0xf]
    %v184 = vld [vmem:[#allocation7 + $0x450] sm:$0xf]
    %v185 = vld [vmem:[#allocation7 + $0x45c] sm:$0xf]
    %v186 = vld [vmem:[#allocation7 + $0x468] sm:$0xf]
    %v187 = vld [vmem:[#allocation7 + $0x474] sm:$0xf]
    %v188 = vld [vmem:[#allocation7 + $0x480] sm:$0xf]
    %v189 = vld [vmem:[#allocation7 + $0x48c] sm:$0xf]
    %v190 = vld [vmem:[#allocation7 + $0x498] sm:$0xf]
    %v191 = vld [vmem:[#allocation7 + $0x4a4] sm:$0xf]
    %v192 = vld [vmem:[#allocation7 + $0x4b0] sm:$0xf]
    %v193 = vld [vmem:[#allocation7 + $0x4bc] sm:$0xf]
    %v194 = vld [vmem:[#allocation7 + $0x4c8] sm:$0xf]
    %v195 = vld [vmem:[#allocation7 + $0x4d4] sm:$0xf]
    %v196 = vld [vmem:[#allocation7 + $0x4e0] sm:$0xf]
    %v197 = vld [vmem:[#allocation7 + $0x4ec] sm:$0xf]
    %v198 = vld [vmem:[#allocation7 + $0x4f8] sm:$0xf]
    %v199 = vld [vmem:[#allocation7 + $0x504] sm:$0xf]
    %v200 = vld [vmem:[#allocation7 + $0x510] sm:$0xf]
    %v201 = vld [vmem:[#allocation7 + $0x51c] sm:$0xf]
    %v202 = vld [vmem:[#allocation7 + $0x528] sm:$0xf]
    %v203 = vld [vmem:[#allocation7 + $0x534] sm:$0xf]
    %v204 = vld [vmem:[#allocation7 + $0x540] sm:$0xf]
    %v205 = vld [vmem:[#allocation7 + $0x54c] sm:$0xf]
    %v206 = vld [vmem:[#allocation7 + $0x558] sm:$0xf]
    %v207 = vld [vmem:[#allocation7 + $0x564] sm:$0xf]
    %v208 = vld [vmem:[#allocation7 + $0x570] sm:$0xf]
    %v209 = vld [vmem:[#allocation7 + $0x57c] sm:$0xf]
    %v210 = vld [vmem:[#allocation7 + $0x588] sm:$0xf]
    %v211 = vld [vmem:[#allocation7 + $0x594] sm:$0xf]
    %v212 = vld [vmem:[#allocation7 + $0x5a0] sm:$0xf]
    %v213 = vld [vmem:[#allocation7 + $0x5ac] sm:$0xf]
    %v214 = vld [vmem:[#allocation7 + $0x5b8] sm:$0xf]
    %v215 = vld [vmem:[#allocation7 + $0x5c4] sm:$0xf]
    %v216 = vld [vmem:[#allocation7 + $0x5d0] sm:$0xf]
    %v217 = vld [vmem:[#allocation7 + $0x5dc] sm:$0xf]
    %v218 = vld [vmem:[#allocation7 + $0x5e8] sm:$0xf]
    %v219 = vld [vmem:[#allocation7 + $0x5f4] sm:$0xf]
    %v224 = vcombine.high %v88, %v88
    %v225 = vcombine.high %v89, %v89
    %v226 = vcombine.high %v90, %v90
    %v227 = vcombine.high %v91, %v91
    %v232 = vpack.c.bf16 %v88, %v88
    %v233 = vpack.c.bf16 %v224, %v224
    %v234 = vpack.c.bf16 %v89, %v89
    %v235 = vpack.c.bf16 %v225, %v225
    %v236 = vpack.c.bf16 %v90, %v90
    %v237 = vpack.c.bf16 %v226, %v226
    %v238 = vpack.c.bf16 %v91, %v91
    %v239 = vpack.c.bf16 %v227, %v227
    %v240 = vlaneseq
    %v241 = vshrl.u32 %v240, 7
    %v242 = vsub.s32 0, %v241
    %v243 = vrot.slane %v86, %v242
    %v372 = vunpack.c.l.b16 %v92
    %v373 = vunpack.c.l.b16 %v93
    %v374 = vunpack.c.l.b16 %v94
    %v375 = vunpack.c.l.b16 %v95
    %v376 = vunpack.c.l.b16 %v96
    %v377 = vunpack.c.l.b16 %v97
    %v378 = vunpack.c.l.b16 %v98
    %v379 = vunpack.c.l.b16 %v99
    %v380 = vunpack.c.l.b16 %v100
    %v381 = vunpack.c.l.b16 %v101
    %v382 = vunpack.c.l.b16 %v102
    %v383 = vunpack.c.l.b16 %v103
    %v384 = vunpack.c.l.b16 %v104
    %v385 = vunpack.c.l.b16 %v105
    %v386 = vunpack.c.l.b16 %v106
    %v387 = vunpack.c.l.b16 %v107
    %v388 = vunpack.c.l.b16 %v108
    %v389 = vunpack.c.l.b16 %v109
    %v390 = vunpack.c.l.b16 %v110
    %v391 = vunpack.c.l.b16 %v111
    %v392 = vunpack.c.l.b16 %v112
    %v393 = vunpack.c.l.b16 %v113
    %v394 = vunpack.c.l.b16 %v114
    %v395 = vunpack.c.l.b16 %v115
    %v396 = vunpack.c.l.b16 %v116
    %v397 = vunpack.c.l.b16 %v117
    %v398 = vunpack.c.l.b16 %v118
    %v399 = vunpack.c.l.b16 %v119
    %v400 = vunpack.c.l.b16 %v120
    %v401 = vunpack.c.l.b16 %v121
    %v402 = vunpack.c.l.b16 %v122
    %v403 = vunpack.c.l.b16 %v123
    %v404 = vunpack.c.l.b16 %v124
    %v405 = vunpack.c.l.b16 %v125
    %v406 = vunpack.c.l.b16 %v126
    %v407 = vunpack.c.l.b16 %v127
    %v408 = vunpack.c.l.b16 %v128
    %v409 = vunpack.c.l.b16 %v129
    %v410 = vunpack.c.l.b16 %v130
    %v411 = vunpack.c.l.b16 %v131
    %v412 = vunpack.c.l.b16 %v132
    %v413 = vunpack.c.l.b16 %v133
    %v414 = vunpack.c.l.b16 %v134
    %v415 = vunpack.c.l.b16 %v135
    %v416 = vunpack.c.l.b16 %v136
    %v417 = vunpack.c.l.b16 %v137
    %v418 = vunpack.c.l.b16 %v138
    %v419 = vunpack.c.l.b16 %v139
    %v420 = vunpack.c.l.b16 %v140
    %v421 = vunpack.c.l.b16 %v141
    %v422 = vunpack.c.l.b16 %v142
    %v423 = vunpack.c.l.b16 %v143
    %v424 = vunpack.c.l.b16 %v144
    %v425 = vunpack.c.l.b16 %v145
    %v426 = vunpack.c.l.b16 %v146
    %v427 = vunpack.c.l.b16 %v147
    %v428 = vunpack.c.l.b16 %v148
    %v429 = vunpack.c.l.b16 %v149
    %v430 = vunpack.c.l.b16 %v150
    %v431 = vunpack.c.l.b16 %v151
    %v432 = vunpack.c.l.b16 %v152
    %v433 = vunpack.c.l.b16 %v153
    %v434 = vunpack.c.l.b16 %v154
    %v435 = vunpack.c.l.b16 %v155
    %v436 = vunpack.c.l.b16 %v156
    %v437 = vunpack.c.l.b16 %v157
    %v438 = vunpack.c.l.b16 %v158
    %v439 = vunpack.c.l.b16 %v159
    %v440 = vunpack.c.l.b16 %v160
    %v441 = vunpack.c.l.b16 %v161
    %v442 = vunpack.c.l.b16 %v162
    %v443 = vunpack.c.l.b16 %v163
    %v444 = vunpack.c.l.b16 %v164
    %v445 = vunpack.c.l.b16 %v165
    %v446 = vunpack.c.l.b16 %v166
    %v447 = vunpack.c.l.b16 %v167
    %v448 = vunpack.c.l.b16 %v168
    %v449 = vunpack.c.l.b16 %v169
    %v450 = vunpack.c.l.b16 %v170
    %v451 = vunpack.c.l.b16 %v171
    %v452 = vunpack.c.l.b16 %v172
    %v453 = vunpack.c.l.b16 %v173
    %v454 = vunpack.c.l.b16 %v174
    %v455 = vunpack.c.l.b16 %v175
    %v456 = vunpack.c.l.b16 %v176
    %v457 = vunpack.c.l.b16 %v177
    %v458 = vunpack.c.l.b16 %v178
    %v459 = vunpack.c.l.b16 %v179
    %v460 = vunpack.c.l.b16 %v180
    %v461 = vunpack.c.l.b16 %v181
    %v462 = vunpack.c.l.b16 %v182
    %v463 = vunpack.c.l.b16 %v183
    %v464 = vunpack.c.l.b16 %v184
    %v465 = vunpack.c.l.b16 %v185
    %v466 = vunpack.c.l.b16 %v186
    %v467 = vunpack.c.l.b16 %v187
    %v468 = vunpack.c.l.b16 %v188
    %v469 = vunpack.c.l.b16 %v189
    %v470 = vunpack.c.l.b16 %v190
    %v471 = vunpack.c.l.b16 %v191
    %v472 = vunpack.c.l.b16 %v192
    %v473 = vunpack.c.l.b16 %v193
    %v474 = vunpack.c.l.b16 %v194
    %v475 = vunpack.c.l.b16 %v195
    %v476 = vunpack.c.l.b16 %v196
    %v477 = vunpack.c.l.b16 %v197
    %v478 = vunpack.c.l.b16 %v198
    %v479 = vunpack.c.l.b16 %v199
    %v480 = vunpack.c.l.b16 %v200
    %v481 = vunpack.c.l.b16 %v201
    %v482 = vunpack.c.l.b16 %v202
    %v483 = vunpack.c.l.b16 %v203
    %v484 = vunpack.c.l.b16 %v204
    %v485 = vunpack.c.l.b16 %v205
    %v486 = vunpack.c.l.b16 %v206
    %v487 = vunpack.c.l.b16 %v207
    %v488 = vunpack.c.l.b16 %v208
    %v489 = vunpack.c.l.b16 %v209
    %v490 = vunpack.c.l.b16 %v210
    %v491 = vunpack.c.l.b16 %v211
    %v492 = vunpack.c.l.b16 %v212
    %v493 = vunpack.c.l.b16 %v213
    %v494 = vunpack.c.l.b16 %v214
    %v495 = vunpack.c.l.b16 %v215
    %v496 = vunpack.c.l.b16 %v216
    %v497 = vunpack.c.l.b16 %v217
    %v498 = vunpack.c.l.b16 %v218
    %v499 = vunpack.c.l.b16 %v219
    %v500 = vpack.c.b16 %v373, %v372
    %v501 = vpack.c.b16 %v375, %v374
    %v502 = vpack.c.b16 %v377, %v376
    %v503 = vpack.c.b16 %v379, %v378
    %v504 = vpack.c.b16 %v381, %v380
    %v505 = vpack.c.b16 %v383, %v382
    %v506 = vpack.c.b16 %v385, %v384
    %v507 = vpack.c.b16 %v387, %v386
    %v508 = vpack.c.b16 %v389, %v388
    %v509 = vpack.c.b16 %v391, %v390
    %v510 = vpack.c.b16 %v393, %v392
    %v511 = vpack.c.b16 %v395, %v394
    %v512 = vpack.c.b16 %v397, %v396
    %v513 = vpack.c.b16 %v399, %v398
    %v514 = vpack.c.b16 %v401, %v400
    %v515 = vpack.c.b16 %v403, %v402
    %v516 = vpack.c.b16 %v405, %v404
    %v517 = vpack.c.b16 %v407, %v406
    %v518 = vpack.c.b16 %v409, %v408
    %v519 = vpack.c.b16 %v411, %v410
    %v520 = vpack.c.b16 %v413, %v412
    %v521 = vpack.c.b16 %v415, %v414
    %v522 = vpack.c.b16 %v417, %v416
    %v523 = vpack.c.b16 %v419, %v418
    %v524 = vpack.c.b16 %v421, %v420
    %v525 = vpack.c.b16 %v423, %v422
    %v526 = vpack.c.b16 %v425, %v424
    %v527 = vpack.c.b16 %v427, %v426
    %v528 = vpack.c.b16 %v429, %v428
    %v529 = vpack.c.b16 %v431, %v430
    %v530 = vpack.c.b16 %v433, %v432
    %v531 = vpack.c.b16 %v435, %v434
    %v532 = vpack.c.b16 %v437, %v436
    %v533 = vpack.c.b16 %v439, %v438
    %v534 = vpack.c.b16 %v441, %v440
    %v535 = vpack.c.b16 %v443, %v442
    %v536 = vpack.c.b16 %v445, %v444
    %v537 = vpack.c.b16 %v447, %v446
    %v538 = vpack.c.b16 %v449, %v448
    %v539 = vpack.c.b16 %v451, %v450
    %v540 = vpack.c.b16 %v453, %v452
    %v541 = vpack.c.b16 %v455, %v454
    %v542 = vpack.c.b16 %v457, %v456
    %v543 = vpack.c.b16 %v459, %v458
    %v544 = vpack.c.b16 %v461, %v460
    %v545 = vpack.c.b16 %v463, %v462
    %v546 = vpack.c.b16 %v465, %v464
    %v547 = vpack.c.b16 %v467, %v466
    %v548 = vpack.c.b16 %v469, %v468
    %v549 = vpack.c.b16 %v471, %v470
    %v550 = vpack.c.b16 %v473, %v472
    %v551 = vpack.c.b16 %v475, %v474
    %v552 = vpack.c.b16 %v477, %v476
    %v553 = vpack.c.b16 %v479, %v478
    %v554 = vpack.c.b16 %v481, %v480
    %v555 = vpack.c.b16 %v483, %v482
    %v556 = vpack.c.b16 %v485, %v484
    %v557 = vpack.c.b16 %v487, %v486
    %v558 = vpack.c.b16 %v489, %v488
    %v559 = vpack.c.b16 %v491, %v490
    %v560 = vpack.c.b16 %v493, %v492
    %v561 = vpack.c.b16 %v495, %v494
    %v562 = vpack.c.b16 %v497, %v496
    %v563 = vpack.c.b16 %v499, %v498
    %628 = vmatprep.subr.bf16.mxu0 0
    %629 = vmatpush1.bf16.msra.mxu0 %v500
    %630 = vmatprep.subr.bf16.mxu0 0
    %631 = vmatpush1.bf16.msra.mxu0 %v501
    %632 = vmatprep.subr.bf16.mxu0 0
    %633 = vmatpush1.bf16.msra.mxu0 %v502
    %634 = vmatprep.subr.bf16.mxu0 0
    %635 = vmatpush1.bf16.msra.mxu0 %v503
    %636 = vmatprep.subr.bf16.mxu0 0
    %637 = vmatpush1.bf16.msra.mxu0 %v504
    %638 = vmatprep.subr.bf16.mxu0 0
    %639 = vmatpush1.bf16.msra.mxu0 %v505
    %640 = vmatprep.subr.bf16.mxu0 0
    %641 = vmatpush1.bf16.msra.mxu0 %v506
    %642 = vmatprep.subr.bf16.mxu0 0
    %643 = vmatpush1.bf16.msra.mxu0 %v507
    %644 = vmatprep.subr.bf16.mxu0 0
    %645 = vmatpush1.bf16.msra.mxu0 %v508
    %646 = vmatprep.subr.bf16.mxu0 0
    %647 = vmatpush1.bf16.msra.mxu0 %v509
    %648 = vmatprep.subr.bf16.mxu0 0
    %649 = vmatpush1.bf16.msra.mxu0 %v510
    %650 = vmatprep.subr.bf16.mxu0 0
    %651 = vmatpush1.bf16.msra.mxu0 %v511
    %652 = vmatprep.subr.bf16.mxu0 0
    %653 = vmatpush1.bf16.msra.mxu0 %v512
    %654 = vmatprep.subr.bf16.mxu0 0
    %655 = vmatpush1.bf16.msra.mxu0 %v513
    %656 = vmatprep.subr.bf16.mxu0 0
    %657 = vmatpush1.bf16.msra.mxu0 %v514
    %658 = vmatprep.subr.bf16.mxu0 0
    %659 = vmatpush1.bf16.msra.mxu0 %v515
    %660 = vmatprep.mubr.bf16.mxu0 %v233
    %661 = vmatmul.mubr.bf16.gmra.mrb[0].mxu0 %v232
    %v662 = vpop.f32.mrb[0].mxu0
    %v663 = vadd.f32 %v243, %v662
    %v664 = vpop.f32.mrb[0].mxu0
    %v665 = vpop.f32.mrb[0].mxu0
    %v666 = vpop.f32.mrb[0].mxu0
    %667 = vdwg.mxu0
    %668 = vmatprep.subr.bf16.mxu0 0
    %669 = vmatpush1.bf16.msra.mxu0 %v516
    %670 = vmatprep.subr.bf16.mxu0 0
    %671 = vmatpush1.bf16.msra.mxu0 %v517
    %672 = vmatprep.subr.bf16.mxu0 0
    %673 = vmatpush1.bf16.msra.mxu0 %v518
    %674 = vmatprep.subr.bf16.mxu0 0
    %675 = vmatpush1.bf16.msra.mxu0 %v519
    %676 = vmatprep.subr.bf16.mxu0 0
    %677 = vmatpush1.bf16.msra.mxu0 %v520
    %678 = vmatprep.subr.bf16.mxu0 0
    %679 = vmatpush1.bf16.msra.mxu0 %v521
    %680 = vmatprep.subr.bf16.mxu0 0
    %681 = vmatpush1.bf16.msra.mxu0 %v522
    %682 = vmatprep.subr.bf16.mxu0 0
    %683 = vmatpush1.bf16.msra.mxu0 %v523
    %684 = vmatprep.subr.bf16.mxu0 0
    %685 = vmatpush1.bf16.msra.mxu0 %v524
    %686 = vmatprep.subr.bf16.mxu0 0
    %687 = vmatpush1.bf16.msra.mxu0 %v525
    %688 = vmatprep.subr.bf16.mxu0 0
    %689 = vmatpush1.bf16.msra.mxu0 %v526
    %690 = vmatprep.subr.bf16.mxu0 0
    %691 = vmatpush1.bf16.msra.mxu0 %v527
    %692 = vmatprep.subr.bf16.mxu0 0
    %693 = vmatpush1.bf16.msra.mxu0 %v528
    %694 = vmatprep.subr.bf16.mxu0 0
    %695 = vmatpush1.bf16.msra.mxu0 %v529
    %696 = vmatprep.subr.bf16.mxu0 0
    %697 = vmatpush1.bf16.msra.mxu0 %v530
    %698 = vmatprep.subr.bf16.mxu0 0
    %699 = vmatpush1.bf16.msra.mxu0 %v531
    %700 = vmatprep.mubr.bf16.mxu0 %v235
    %701 = vmatmul.mubr.bf16.gmra.mrb[0].mxu0 %v234
    %v702 = vpop.f32.mrb[0].mxu0
    %v703 = vadd.f32 %v663, %v702
    %v704 = vpop.f32.mrb[0].mxu0
    %v705 = vpop.f32.mrb[0].mxu0
    %v706 = vpop.f32.mrb[0].mxu0
    %707 = vdwg.mxu0
    %708 = vmatprep.subr.bf16.mxu0 0
    %709 = vmatpush1.bf16.msra.mxu0 %v532
    %710 = vmatprep.subr.bf16.mxu0 0
    %711 = vmatpush1.bf16.msra.mxu0 %v533
    %712 = vmatprep.subr.bf16.mxu0 0
    %713 = vmatpush1.bf16.msra.mxu0 %v534
    %714 = vmatprep.subr.bf16.mxu0 0
    %715 = vmatpush1.bf16.msra.mxu0 %v535
    %716 = vmatprep.subr.bf16.mxu0 0
    %717 = vmatpush1.bf16.msra.mxu0 %v536
    %718 = vmatprep.subr.bf16.mxu0 0
    %719 = vmatpush1.bf16.msra.mxu0 %v537
    %720 = vmatprep.subr.bf16.mxu0 0
    %721 = vmatpush1.bf16.msra.mxu0 %v538
    %722 = vmatprep.subr.bf16.mxu0 0
    %723 = vmatpush1.bf16.msra.mxu0 %v539
    %724 = vmatprep.subr.bf16.mxu0 0
    %725 = vmatpush1.bf16.msra.mxu0 %v540
    %726 = vmatprep.subr.bf16.mxu0 0
    %727 = vmatpush1.bf16.msra.mxu0 %v541
    %728 = vmatprep.subr.bf16.mxu0 0
    %729 = vmatpush1.bf16.msra.mxu0 %v542
    %730 = vmatprep.subr.bf16.mxu0 0
    %731 = vmatpush1.bf16.msra.mxu0 %v543
    %732 = vmatprep.subr.bf16.mxu0 0
    %733 = vmatpush1.bf16.msra.mxu0 %v544
    %734 = vmatprep.subr.bf16.mxu0 0
    %735 = vmatpush1.bf16.msra.mxu0 %v545
    %736 = vmatprep.subr.bf16.mxu0 0
    %737 = vmatpush1.bf16.msra.mxu0 %v546
    %738 = vmatprep.subr.bf16.mxu0 0
    %739 = vmatpush1.bf16.msra.mxu0 %v547
    %740 = vmatprep.mubr.bf16.mxu0 %v237
    %741 = vmatmul.mubr.bf16.gmra.mrb[0].mxu0 %v236
    %v742 = vpop.f32.mrb[0].mxu0
    %v743 = vadd.f32 %v703, %v742
    %v744 = vpop.f32.mrb[0].mxu0
    %v745 = vpop.f32.mrb[0].mxu0
    %v746 = vpop.f32.mrb[0].mxu0
    %747 = vdwg.mxu0
    %748 = vmatprep.subr.bf16.mxu0 0
    %749 = vmatpush1.bf16.msra.mxu0 %v548
    %750 = vmatprep.subr.bf16.mxu0 0
    %751 = vmatpush1.bf16.msra.mxu0 %v549
    %752 = vmatprep.subr.bf16.mxu0 0
    %753 = vmatpush1.bf16.msra.mxu0 %v550
    %754 = vmatprep.subr.bf16.mxu0 0
    %755 = vmatpush1.bf16.msra.mxu0 %v551
    %756 = vmatprep.subr.bf16.mxu0 0
    %757 = vmatpush1.bf16.msra.mxu0 %v552
    %758 = vmatprep.subr.bf16.mxu0 0
    %759 = vmatpush1.bf16.msra.mxu0 %v553
    %760 = vmatprep.subr.bf16.mxu0 0
    %761 = vmatpush1.bf16.msra.mxu0 %v554
    %762 = vmatprep.subr.bf16.mxu0 0
    %763 = vmatpush1.bf16.msra.mxu0 %v555
    %764 = vmatprep.subr.bf16.mxu0 0
    %765 = vmatpush1.bf16.msra.mxu0 %v556
    %766 = vmatprep.subr.bf16.mxu0 0
    %767 = vmatpush1.bf16.msra.mxu0 %v557
    %768 = vmatprep.subr.bf16.mxu0 0
    %769 = vmatpush1.bf16.msra.mxu0 %v558
    %770 = vmatprep.subr.bf16.mxu0 0
    %771 = vmatpush1.bf16.msra.mxu0 %v559
    %772 = vmatprep.subr.bf16.mxu0 0
    %773 = vmatpush1.bf16.msra.mxu0 %v560
    %774 = vmatprep.subr.bf16.mxu0 0
    %775 = vmatpush1.bf16.msra.mxu0 %v561
    %776 = vmatprep.subr.bf16.mxu0 0
    %777 = vmatpush1.bf16.msra.mxu0 %v562
    %778 = vmatprep.subr.bf16.mxu0 0
    %779 = vmatpush1.bf16.msra.mxu0 %v563
    %780 = vmatprep.mubr.bf16.mxu0 %v239
    %781 = vmatmul.mubr.bf16.gmra.mrb[0].mxu0 %v238
    %v782 = vpop.f32.mrb[0].mxu0
    %v783 = vadd.f32 %v743, %v782
    %v784 = vpop.f32.mrb[0].mxu0
    %v785 = vpop.f32.mrb[0].mxu0
    %v786 = vpop.f32.mrb[0].mxu0
    %787 = vdwg.mxu0
    %v788 = vmax.f32 %v783, 0.0
    %v789 = vld [vmem:[#allocation2 + $0x20] sm:$0xff]
    %v790 = vld [vmem:[#allocation2 + $0x28] sm:$0xff]
    %v791 = vld [vmem:[#allocation2 + $0x30] sm:$0xff]
    %v792 = vld [vmem:[#allocation2 + $0x38] sm:$0xff]
    %v793 = vld [vmem:[#allocation7 + $0x4] sm:$0xf]
    %v794 = vld [vmem:[#allocation7 + $0x10] sm:$0xf]
    %v795 = vld [vmem:[#allocation7 + $0x1c] sm:$0xf]
    %v796 = vld [vmem:[#allocation7 + $0x28] sm:$0xf]
    %v797 = vld [vmem:[#allocation7 + $0x34] sm:$0xf]
    %v798 = vld [vmem:[#allocation7 + $0x40] sm:$0xf]
    %v799 = vld [vmem:[#allocation7 + $0x4c] sm:$0xf]
    %v800 = vld [vmem:[#allocation7 + $0x58] sm:$0xf]
    %v801 = vld [vmem:[#allocation7 + $0x64] sm:$0xf]
    %v802 = vld [vmem:[#allocation7 + $0x70] sm:$0xf]
    %v803 = vld [vmem:[#allocation7 + $0x7c] sm:$0xf]
    %v804 = vld [vmem:[#allocation7 + $0x88] sm:$0xf]
    %v805 = vld [vmem:[#allocation7 + $0x94] sm:$0xf]
    %v806 = vld [vmem:[#allocation7 + $0xa0] sm:$0xf]
    %v807 = vld [vmem:[#allocation7 + $0xac] sm:$0xf]
    %v808 = vld [vmem:[#allocation7 + $0xb8] sm:$0xf]
    %v809 = vld [vmem:[#allocation7 + $0xc4] sm:$0xf]
    %v810 = vld [vmem:[#allocation7 + $0xd0] sm:$0xf]
    %v811 = vld [vmem:[#allocation7 + $0xdc] sm:$0xf]
    %v812 = vld [vmem:[#allocation7 + $0xe8] sm:$0xf]
    %v813 = vld [vmem:[#allocation7 + $0xf4] sm:$0xf]
    %v814 = vld [vmem:[#allocation7 + $0x100] sm:$0xf]
    %v815 = vld [vmem:[#allocation7 + $0x10c] sm:$0xf]
    %v816 = vld [vmem:[#allocation7 + $0x118] sm:$0xf]
    %v817 = vld [vmem:[#allocation7 + $0x124] sm:$0xf]
    %v818 = vld [vmem:[#allocation7 + $0x130] sm:$0xf]
    %v819 = vld [vmem:[#allocation7 + $0x13c] sm:$0xf]
    %v820 = vld [vmem:[#allocation7 + $0x148] sm:$0xf]
    %v821 = vld [vmem:[#allocation7 + $0x154] sm:$0xf]
    %v822 = vld [vmem:[#allocation7 + $0x160] sm:$0xf]
    %v823 = vld [vmem:[#allocation7 + $0x16c] sm:$0xf]
    %v824 = vld [vmem:[#allocation7 + $0x178] sm:$0xf]
    %v825 = vld [vmem:[#allocation7 + $0x184] sm:$0xf]
    %v826 = vld [vmem:[#allocation7 + $0x190] sm:$0xf]
    %v827 = vld [vmem:[#allocation7 + $0x19c] sm:$0xf]
    %v828 = vld [vmem:[#allocation7 + $0x1a8] sm:$0xf]
    %v829 = vld [vmem:[#allocation7 + $0x1b4] sm:$0xf]
    %v830 = vld [vmem:[#allocation7 + $0x1c0] sm:$0xf]
    %v831 = vld [vmem:[#allocation7 + $0x1cc] sm:$0xf]
    %v832 = vld [vmem:[#allocation7 + $0x1d8] sm:$0xf]
    %v833 = vld [vmem:[#allocation7 + $0x1e4] sm:$0xf]
    %v834 = vld [vmem:[#allocation7 + $0x1f0] sm:$0xf]
    %v835 = vld [vmem:[#allocation7 + $0x1fc] sm:$0xf]
    %v836 = vld [vmem:[#allocation7 + $0x208] sm:$0xf]
    %v837 = vld [vmem:[#allocation7 + $0x214] sm:$0xf]
    %v838 = vld [vmem:[#allocation7 + $0x220] sm:$0xf]
    %v839 = vld [vmem:[#allocation7 + $0x22c] sm:$0xf]
    %v840 = vld [vmem:[#allocation7 + $0x238] sm:$0xf]
    %v841 = vld [vmem:[#allocation7 + $0x244] sm:$0xf]
    %v842 = vld [vmem:[#allocation7 + $0x250] sm:$0xf]
    %v843 = vld [vmem:[#allocation7 + $0x25c] sm:$0xf]
    %v844 = vld [vmem:[#allocation7 + $0x268] sm:$0xf]
    %v845 = vld [vmem:[#allocation7 + $0x274] sm:$0xf]
    %v846 = vld [vmem:[#allocation7 + $0x280] sm:$0xf]
    %v847 = vld [vmem:[#allocation7 + $0x28c] sm:$0xf]
    %v848 = vld [vmem:[#allocation7 + $0x298] sm:$0xf]
    %v849 = vld [vmem:[#allocation7 + $0x2a4] sm:$0xf]
    %v850 = vld [vmem:[#allocation7 + $0x2b0] sm:$0xf]
    %v851 = vld [vmem:[#allocation7 + $0x2bc] sm:$0xf]
    %v852 = vld [vmem:[#allocation7 + $0x2c8] sm:$0xf]
    %v853 = vld [vmem:[#allocation7 + $0x2d4] sm:$0xf]
    %v854 = vld [vmem:[#allocation7 + $0x2e0] sm:$0xf]
    %v855 = vld [vmem:[#allocation7 + $0x2ec] sm:$0xf]
    %v856 = vld [vmem:[#allocation7 + $0x2f8] sm:$0xf]
    %v857 = vld [vmem:[#allocation7 + $0x304] sm:$0xf]
    %v858 = vld [vmem:[#allocation7 + $0x310] sm:$0xf]
    %v859 = vld [vmem:[#allocation7 + $0x31c] sm:$0xf]
    %v860 = vld [vmem:[#allocation7 + $0x328] sm:$0xf]
    %v861 = vld [vmem:[#allocation7 + $0x334] sm:$0xf]
    %v862 = vld [vmem:[#allocation7 + $0x340] sm:$0xf]
    %v863 = vld [vmem:[#allocation7 + $0x34c] sm:$0xf]
    %v864 = vld [vmem:[#allocation7 + $0x358] sm:$0xf]
    %v865 = vld [vmem:[#allocation7 + $0x364] sm:$0xf]
    %v866 = vld [vmem:[#allocation7 + $0x370] sm:$0xf]
    %v867 = vld [vmem:[#allocation7 + $0x37c] sm:$0xf]
    %v868 = vld [vmem:[#allocation7 + $0x388] sm:$0xf]
    %v869 = vld [vmem:[#allocation7 + $0x394] sm:$0xf]
    %v870 = vld [vmem:[#allocation7 + $0x3a0] sm:$0xf]
    %v871 = vld [vmem:[#allocation7 + $0x3ac] sm:$0xf]
    %v872 = vld [vmem:[#allocation7 + $0x3b8] sm:$0xf]
    %v873 = vld [vmem:[#allocation7 + $0x3c4] sm:$0xf]
    %v874 = vld [vmem:[#allocation7 + $0x3d0] sm:$0xf]
    %v875 = vld [vmem:[#allocation7 + $0x3dc] sm:$0xf]
    %v876 = vld [vmem:[#allocation7 + $0x3e8] sm:$0xf]
    %v877 = vld [vmem:[#allocation7 + $0x3f4] sm:$0xf]
    %v878 = vld [vmem:[#allocation7 + $0x400] sm:$0xf]
    %v879 = vld [vmem:[#allocation7 + $0x40c] sm:$0xf]
    %v880 = vld [vmem:[#allocation7 + $0x418] sm:$0xf]
    %v881 = vld [vmem:[#allocation7 + $0x424] sm:$0xf]
    %v882 = vld [vmem:[#allocation7 + $0x430] sm:$0xf]
    %v883 = vld [vmem:[#allocation7 + $0x43c] sm:$0xf]
    %v884 = vld [vmem:[#allocation7 + $0x448] sm:$0xf]
    %v885 = vld [vmem:[#allocation7 + $0x454] sm:$0xf]
    %v886 = vld [vmem:[#allocation7 + $0x460] sm:$0xf]
    %v887 = vld [vmem:[#allocation7 + $0x46c] sm:$0xf]
    %v888 = vld [vmem:[#allocation7 + $0x478] sm:$0xf]
    %v889 = vld [vmem:[#allocation7 + $0x484] sm:$0xf]
    %v890 = vld [vmem:[#allocation7 + $0x490] sm:$0xf]
    %v891 = vld [vmem:[#allocation7 + $0x49c] sm:$0xf]
    %v892 = vld [vmem:[#allocation7 + $0x4a8] sm:$0xf]
    %v893 = vld [vmem:[#allocation7 + $0x4b4] sm:$0xf]
    %v894 = vld [vmem:[#allocation7 + $0x4c0] sm:$0xf]
    %v895 = vld [vmem:[#allocation7 + $0x4cc] sm:$0xf]
    %v896 = vld [vmem:[#allocation7 + $0x4d8] sm:$0xf]
    %v897 = vld [vmem:[#allocation7 + $0x4e4] sm:$0xf]
    %v898 = vld [vmem:[#allocation7 + $0x4f0] sm:$0xf]
    %v899 = vld [vmem:[#allocation7 + $0x4fc] sm:$0xf]
    %v900 = vld [vmem:[#allocation7 + $0x508] sm:$0xf]
    %v901 = vld [vmem:[#allocation7 + $0x514] sm:$0xf]
    %v902 = vld [vmem:[#allocation7 + $0x520] sm:$0xf]
    %v903 = vld [vmem:[#allocation7 + $0x52c] sm:$0xf]
    %v904 = vld [vmem:[#allocation7 + $0x538] sm:$0xf]
    %v905 = vld [vmem:[#allocation7 + $0x544] sm:$0xf]
    %v906 = vld [vmem:[#allocation7 + $0x550] sm:$0xf]
    %v907 = vld [vmem:[#allocation7 + $0x55c] sm:$0xf]
    %v908 = vld [vmem:[#allocation7 + $0x568] sm:$0xf]
    %v909 = vld [vmem:[#allocation7 + $0x574] sm:$0xf]
    %v910 = vld [vmem:[#allocation7 + $0x580] sm:$0xf]
    %v911 = vld [vmem:[#allocation7 + $0x58c] sm:$0xf]
    %v912 = vld [vmem:[#allocation7 + $0x598] sm:$0xf]
    %v913 = vld [vmem:[#allocation7 + $0x5a4] sm:$0xf]
    %v914 = vld [vmem:[#allocation7 + $0x5b0] sm:$0xf]
    %v915 = vld [vmem:[#allocation7 + $0x5bc] sm:$0xf]
    %v916 = vld [vmem:[#allocation7 + $0x5c8] sm:$0xf]
    %v917 = vld [vmem:[#allocation7 + $0x5d4] sm:$0xf]
    %v918 = vld [vmem:[#allocation7 + $0x5e0] sm:$0xf]
    %v919 = vld [vmem:[#allocation7 + $0x5ec] sm:$0xf]
    %v920 = vld [vmem:[#allocation7 + $0x5f8] sm:$0xf]
    %v925 = vcombine.high %v789, %v789
    %v926 = vcombine.high %v790, %v790
    %v927 = vcombine.high %v791, %v791
    %v928 = vcombine.high %v792, %v792
    %v933 = vpack.c.bf16 %v789, %v789
    %v934 = vpack.c.bf16 %v925, %v925
    %v935 = vpack.c.bf16 %v790, %v790
    %v936 = vpack.c.bf16 %v926, %v926
    %v937 = vpack.c.bf16 %v791, %v791
    %v938 = vpack.c.bf16 %v927, %v927
    %v939 = vpack.c.bf16 %v792, %v792
    %v940 = vpack.c.bf16 %v928, %v928
    %v941 = vlaneseq
    %v942 = vshrl.u32 %v941, 7
    %v943 = vsub.s32 1, %v942
    %v944 = vrot.slane %v86, %v943
    %v1073 = vunpack.c.l.b16 %v793
    %v1074 = vunpack.c.l.b16 %v794
    %v1075 = vunpack.c.l.b16 %v795
    %v1076 = vunpack.c.l.b16 %v796
    %v1077 = vunpack.c.l.b16 %v797
    %v1078 = vunpack.c.l.b16 %v798
    %v1079 = vunpack.c.l.b16 %v799
    %v1080 = vunpack.c.l.b16 %v800
    %v1081 = vunpack.c.l.b16 %v801
    %v1082 = vunpack.c.l.b16 %v802
    %v1083 = vunpack.c.l.b16 %v803
    %v1084 = vunpack.c.l.b16 %v804
    %v1085 = vunpack.c.l.b16 %v805
    %v1086 = vunpack.c.l.b16 %v806
    %v1087 = vunpack.c.l.b16 %v807
    %v1088 = vunpack.c.l.b16 %v808
    %v1089 = vunpack.c.l.b16 %v809
    %v1090 = vunpack.c.l.b16 %v810
    %v1091 = vunpack.c.l.b16 %v811
    %v1092 = vunpack.c.l.b16 %v812
    %v1093 = vunpack.c.l.b16 %v813
    %v1094 = vunpack.c.l.b16 %v814
    %v1095 = vunpack.c.l.b16 %v815
    %v1096 = vunpack.c.l.b16 %v816
    %v1097 = vunpack.c.l.b16 %v817
    %v1098 = vunpack.c.l.b16 %v818
    %v1099 = vunpack.c.l.b16 %v819
    %v1100 = vunpack.c.l.b16 %v820
    %v1101 = vunpack.c.l.b16 %v821
    %v1102 = vunpack.c.l.b16 %v822
    %v1103 = vunpack.c.l.b16 %v823
    %v1104 = vunpack.c.l.b16 %v824
    %v1105 = vunpack.c.l.b16 %v825
    %v1106 = vunpack.c.l.b16 %v826
    %v1107 = vunpack.c.l.b16 %v827
    %v1108 = vunpack.c.l.b16 %v828
    %v1109 = vunpack.c.l.b16 %v829
    %v1110 = vunpack.c.l.b16 %v830
    %v1111 = vunpack.c.l.b16 %v831
    %v1112 = vunpack.c.l.b16 %v832
    %v1113 = vunpack.c.l.b16 %v833
    %v1114 = vunpack.c.l.b16 %v834
    %v1115 = vunpack.c.l.b16 %v835
    %v1116 = vunpack.c.l.b16 %v836
    %v1117 = vunpack.c.l.b16 %v837
    %v1118 = vunpack.c.l.b16 %v838
    %v1119 = vunpack.c.l.b16 %v839
    %v1120 = vunpack.c.l.b16 %v840
    %v1121 = vunpack.c.l.b16 %v841
    %v1122 = vunpack.c.l.b16 %v842
    %v1123 = vunpack.c.l.b16 %v843
    %v1124 = vunpack.c.l.b16 %v844
    %v1125 = vunpack.c.l.b16 %v845
    %v1126 = vunpack.c.l.b16 %v846
    %v1127 = vunpack.c.l.b16 %v847
    %v1128 = vunpack.c.l.b16 %v848
    %v1129 = vunpack.c.l.b16 %v849
    %v1130 = vunpack.c.l.b16 %v850
    %v1131 = vunpack.c.l.b16 %v851
    %v1132 = vunpack.c.l.b16 %v852
    %v1133 = vunpack.c.l.b16 %v853
    %v1134 = vunpack.c.l.b16 %v854
    %v1135 = vunpack.c.l.b16 %v855
    %v1136 = vunpack.c.l.b16 %v856
    %v1137 = vunpack.c.l.b16 %v857
    %v1138 = vunpack.c.l.b16 %v858
    %v1139 = vunpack.c.l.b16 %v859
    %v1140 = vunpack.c.l.b16 %v860
    %v1141 = vunpack.c.l.b16 %v861
    %v1142 = vunpack.c.l.b16 %v862
    %v1143 = vunpack.c.l.b16 %v863
    %v1144 = vunpack.c.l.b16 %v864
    %v1145 = vunpack.c.l.b16 %v865
    %v1146 = vunpack.c.l.b16 %v866
    %v1147 = vunpack.c.l.b16 %v867
    %v1148 = vunpack.c.l.b16 %v868
    %v1149 = vunpack.c.l.b16 %v869
    %v1150 = vunpack.c.l.b16 %v870
    %v1151 = vunpack.c.l.b16 %v871
    %v1152 = vunpack.c.l.b16 %v872
    %v1153 = vunpack.c.l.b16 %v873
    %v1154 = vunpack.c.l.b16 %v874
    %v1155 = vunpack.c.l.b16 %v875
    %v1156 = vunpack.c.l.b16 %v876
    %v1157 = vunpack.c.l.b16 %v877
    %v1158 = vunpack.c.l.b16 %v878
    %v1159 = vunpack.c.l.b16 %v879
    %v1160 = vunpack.c.l.b16 %v880
    %v1161 = vunpack.c.l.b16 %v881
    %v1162 = vunpack.c.l.b16 %v882
    %v1163 = vunpack.c.l.b16 %v883
    %v1164 = vunpack.c.l.b16 %v884
    %v1165 = vunpack.c.l.b16 %v885
    %v1166 = vunpack.c.l.b16 %v886
    %v1167 = vunpack.c.l.b16 %v887
    %v1168 = vunpack.c.l.b16 %v888
    %v1169 = vunpack.c.l.b16 %v889
    %v1170 = vunpack.c.l.b16 %v890
    %v1171 = vunpack.c.l.b16 %v891
    %v1172 = vunpack.c.l.b16 %v892
    %v1173 = vunpack.c.l.b16 %v893
    %v1174 = vunpack.c.l.b16 %v894
    %v1175 = vunpack.c.l.b16 %v895
    %v1176 = vunpack.c.l.b16 %v896
    %v1177 = vunpack.c.l.b16 %v897
    %v1178 = vunpack.c.l.b16 %v898
    %v1179 = vunpack.c.l.b16 %v899
    %v1180 = vunpack.c.l.b16 %v900
    %v1181 = vunpack.c.l.b16 %v901
    %v1182 = vunpack.c.l.b16 %v902
    %v1183 = vunpack.c.l.b16 %v903
    %v1184 = vunpack.c.l.b16 %v904
    %v1185 = vunpack.c.l.b16 %v905
    %v1186 = vunpack.c.l.b16 %v906
    %v1187 = vunpack.c.l.b16 %v907
    %v1188 = vunpack.c.l.b16 %v908
    %v1189 = vunpack.c.l.b16 %v909
    %v1190 = vunpack.c.l.b16 %v910
    %v1191 = vunpack.c.l.b16 %v911
    %v1192 = vunpack.c.l.b16 %v912
    %v1193 = vunpack.c.l.b16 %v913
    %v1194 = vunpack.c.l.b16 %v914
    %v1195 = vunpack.c.l.b16 %v915
    %v1196 = vunpack.c.l.b16 %v916
    %v1197 = vunpack.c.l.b16 %v917
    %v1198 = vunpack.c.l.b16 %v918
    %v1199 = vunpack.c.l.b16 %v919
    %v1200 = vunpack.c.l.b16 %v920
    %v1201 = vpack.c.b16 %v1074, %v1073
    %v1202 = vpack.c.b16 %v1076, %v1075
    %v1203 = vpack.c.b16 %v1078, %v1077
    %v1204 = vpack.c.b16 %v1080, %v1079
    %v1205 = vpack.c.b16 %v1082, %v1081
    %v1206 = vpack.c.b16 %v1084, %v1083
    %v1207 = vpack.c.b16 %v1086, %v1085
    %v1208 = vpack.c.b16 %v1088, %v1087
    %v1209 = vpack.c.b16 %v1090, %v1089
    %v1210 = vpack.c.b16 %v1092, %v1091
    %v1211 = vpack.c.b16 %v1094, %v1093
    %v1212 = vpack.c.b16 %v1096, %v1095
    %v1213 = vpack.c.b16 %v1098, %v1097
    %v1214 = vpack.c.b16 %v1100, %v1099
    %v1215 = vpack.c.b16 %v1102, %v1101
    %v1216 = vpack.c.b16 %v1104, %v1103
    %v1217 = vpack.c.b16 %v1106, %v1105
    %v1218 = vpack.c.b16 %v1108, %v1107
    %v1219 = vpack.c.b16 %v1110, %v1109
    %v1220 = vpack.c.b16 %v1112, %v1111
    %v1221 = vpack.c.b16 %v1114, %v1113
    %v1222 = vpack.c.b16 %v1116, %v1115
    %v1223 = vpack.c.b16 %v1118, %v1117
    %v1224 = vpack.c.b16 %v1120, %v1119
    %v1225 = vpack.c.b16 %v1122, %v1121
    %v1226 = vpack.c.b16 %v1124, %v1123
    %v1227 = vpack.c.b16 %v1126, %v1125
    %v1228 = vpack.c.b16 %v1128, %v1127
    %v1229 = vpack.c.b16 %v1130, %v1129
    %v1230 = vpack.c.b16 %v1132, %v1131
    %v1231 = vpack.c.b16 %v1134, %v1133
    %v1232 = vpack.c.b16 %v1136, %v1135
    %v1233 = vpack.c.b16 %v1138, %v1137
    %v1234 = vpack.c.b16 %v1140, %v1139
    %v1235 = vpack.c.b16 %v1142, %v1141
    %v1236 = vpack.c.b16 %v1144, %v1143
    %v1237 = vpack.c.b16 %v1146, %v1145
    %v1238 = vpack.c.b16 %v1148, %v1147
    %v1239 = vpack.c.b16 %v1150, %v1149
    %v1240 = vpack.c.b16 %v1152, %v1151
    %v1241 = vpack.c.b16 %v1154, %v1153
    %v1242 = vpack.c.b16 %v1156, %v1155
    %v1243 = vpack.c.b16 %v1158, %v1157
    %v1244 = vpack.c.b16 %v1160, %v1159
    %v1245 = vpack.c.b16 %v1162, %v1161
    %v1246 = vpack.c.b16 %v1164, %v1163
    %v1247 = vpack.c.b16 %v1166, %v1165
    %v1248 = vpack.c.b16 %v1168, %v1167
    %v1249 = vpack.c.b16 %v1170, %v1169
    %v1250 = vpack.c.b16 %v1172, %v1171
    %v1251 = vpack.c.b16 %v1174, %v1173
    %v1252 = vpack.c.b16 %v1176, %v1175
    %v1253 = vpack.c.b16 %v1178, %v1177
    %v1254 = vpack.c.b16 %v1180, %v1179
    %v1255 = vpack.c.b16 %v1182, %v1181
    %v1256 = vpack.c.b16 %v1184, %v1183
    %v1257 = vpack.c.b16 %v1186, %v1185
    %v1258 = vpack.c.b16 %v1188, %v1187
    %v1259 = vpack.c.b16 %v1190, %v1189
    %v1260 = vpack.c.b16 %v1192, %v1191
    %v1261 = vpack.c.b16 %v1194, %v1193
    %v1262 = vpack.c.b16 %v1196, %v1195
    %v1263 = vpack.c.b16 %v1198, %v1197
    %v1264 = vpack.c.b16 %v1200, %v1199
    %1329 = vmatprep.subr.bf16.mxu0 0
    %1330 = vmatpush1.bf16.msra.mxu0 %v1201
    %1331 = vmatprep.subr.bf16.mxu0 0
    %1332 = vmatpush1.bf16.msra.mxu0 %v1202
    %1333 = vmatprep.subr.bf16.mxu0 0
    %1334 = vmatpush1.bf16.msra.mxu0 %v1203
    %1335 = vmatprep.subr.bf16.mxu0 0
    %1336 = vmatpush1.bf16.msra.mxu0 %v1204
    %1337 = vmatprep.subr.bf16.mxu0 0
    %1338 = vmatpush1.bf16.msra.mxu0 %v1205
    %1339 = vmatprep.subr.bf16.mxu0 0
    %1340 = vmatpush1.bf16.msra.mxu0 %v1206
    %1341 = vmatprep.subr.bf16.mxu0 0
    %1342 = vmatpush1.bf16.msra.mxu0 %v1207
    %1343 = vmatprep.subr.bf16.mxu0 0
    %1344 = vmatpush1.bf16.msra.mxu0 %v1208
    %1345 = vmatprep.subr.bf16.mxu0 0
    %1346 = vmatpush1.bf16.msra.mxu0 %v1209
    %1347 = vmatprep.subr.bf16.mxu0 0
    %1348 = vmatpush1.bf16.msra.mxu0 %v1210
    %1349 = vmatprep.subr.bf16.mxu0 0
    %1350 = vmatpush1.bf16.msra.mxu0 %v1211
    %1351 = vmatprep.subr.bf16.mxu0 0
    %1352 = vmatpush1.bf16.msra.mxu0 %v1212
    %1353 = vmatprep.subr.bf16.mxu0 0
    %1354 = vmatpush1.bf16.msra.mxu0 %v1213
    %1355 = vmatprep.subr.bf16.mxu0 0
    %1356 = vmatpush1.bf16.msra.mxu0 %v1214
    %1357 = vmatprep.subr.bf16.mxu0 0
    %1358 = vmatpush1.bf16.msra.mxu0 %v1215
    %1359 = vmatprep.subr.bf16.mxu0 0
    %1360 = vmatpush1.bf16.msra.mxu0 %v1216
    %1361 = vmatprep.mubr.bf16.mxu0 %v934
    %1362 = vmatmul.mubr.bf16.gmra.mrb[0].mxu0 %v933
    %v1363 = vpop.f32.mrb[0].mxu0
    %v1364 = vadd.f32 %v944, %v1363
    %v1365 = vpop.f32.mrb[0].mxu0
    %v1366 = vpop.f32.mrb[0].mxu0
    %v1367 = vpop.f32.mrb[0].mxu0
    %1368 = vdwg.mxu0
    %1369 = vmatprep.subr.bf16.mxu0 0
    %1370 = vmatpush1.bf16.msra.mxu0 %v1217
    %1371 = vmatprep.subr.bf16.mxu0 0
    %1372 = vmatpush1.bf16.msra.mxu0 %v1218
    %1373 = vmatprep.subr.bf16.mxu0 0
    %1374 = vmatpush1.bf16.msra.mxu0 %v1219
    %1375 = vmatprep.subr.bf16.mxu0 0
    %1376 = vmatpush1.bf16.msra.mxu0 %v1220
    %1377 = vmatprep.subr.bf16.mxu0 0
    %1378 = vmatpush1.bf16.msra.mxu0 %v1221
    %1379 = vmatprep.subr.bf16.mxu0 0
    %1380 = vmatpush1.bf16.msra.mxu0 %v1222
    %1381 = vmatprep.subr.bf16.mxu0 0
    %1382 = vmatpush1.bf16.msra.mxu0 %v1223
    %1383 = vmatprep.subr.bf16.mxu0 0
    %1384 = vmatpush1.bf16.msra.mxu0 %v1224
    %1385 = vmatprep.subr.bf16.mxu0 0
    %1386 = vmatpush1.bf16.msra.mxu0 %v1225
    %1387 = vmatprep.subr.bf16.mxu0 0
    %1388 = vmatpush1.bf16.msra.mxu0 %v1226
    %1389 = vmatprep.subr.bf16.mxu0 0
    %1390 = vmatpush1.bf16.msra.mxu0 %v1227
    %1391 = vmatprep.subr.bf16.mxu0 0
    %1392 = vmatpush1.bf16.msra.mxu0 %v1228
    %1393 = vmatprep.subr.bf16.mxu0 0
    %1394 = vmatpush1.bf16.msra.mxu0 %v1229
    %1395 = vmatprep.subr.bf16.mxu0 0
    %1396 = vmatpush1.bf16.msra.mxu0 %v1230
    %1397 = vmatprep.subr.bf16.mxu0 0
    %1398 = vmatpush1.bf16.msra.mxu0 %v1231
    %1399 = vmatprep.subr.bf16.mxu0 0
    %1400 = vmatpush1.bf16.msra.mxu0 %v1232
    %1401 = vmatprep.mubr.bf16.mxu0 %v936
    %1402 = vmatmul.mubr.bf16.gmra.mrb[0].mxu0 %v935
    %v1403 = vpop.f32.mrb[0].mxu0
    %v1404 = vadd.f32 %v1364, %v1403
    %v1405 = vpop.f32.mrb[0].mxu0
    %v1406 = vpop.f32.mrb[0].mxu0
    %v1407 = vpop.f32.mrb[0].mxu0
    %1408 = vdwg.mxu0
    %1409 = vmatprep.subr.bf16.mxu0 0
    %1410 = vmatpush1.bf16.msra.mxu0 %v1233
    %1411 = vmatprep.subr.bf16.mxu0 0
    %1412 = vmatpush1.bf16.msra.mxu0 %v1234
    %1413 = vmatprep.subr.bf16.mxu0 0
    %1414 = vmatpush1.bf16.msra.mxu0 %v1235
    %1415 = vmatprep.subr.bf16.mxu0 0
    %1416 = vmatpush1.bf16.msra.mxu0 %v1236
    %1417 = vmatprep.subr.bf16.mxu0 0
    %1418 = vmatpush1.bf16.msra.mxu0 %v1237
    %1419 = vmatprep.subr.bf16.mxu0 0
    %1420 = vmatpush1.bf16.msra.mxu0 %v1238
    %1421 = vmatprep.subr.bf16.mxu0 0
    %1422 = vmatpush1.bf16.msra.mxu0 %v1239
    %1423 = vmatprep.subr.bf16.mxu0 0
    %1424 = vmatpush1.bf16.msra.mxu0 %v1240
    %1425 = vmatprep.subr.bf16.mxu0 0
    %1426 = vmatpush1.bf16.msra.mxu0 %v1241
    %1427 = vmatprep.subr.bf16.mxu0 0
    %1428 = vmatpush1.bf16.msra.mxu0 %v1242
    %1429 = vmatprep.subr.bf16.mxu0 0
    %1430 = vmatpush1.bf16.msra.mxu0 %v1243
    %1431 = vmatprep.subr.bf16.mxu0 0
    %1432 = vmatpush1.bf16.msra.mxu0 %v1244
    %1433 = vmatprep.subr.bf16.mxu0 0
    %1434 = vmatpush1.bf16.msra.mxu0 %v1245
    %1435 = vmatprep.subr.bf16.mxu0 0
    %1436 = vmatpush1.bf16.msra.mxu0 %v1246
    %1437 = vmatprep.subr.bf16.mxu0 0
    %1438 = vmatpush1.bf16.msra.mxu0 %v1247
    %1439 = vmatprep.subr.bf16.mxu0 0
    %1440 = vmatpush1.bf16.msra.mxu0 %v1248
    %1441 = vmatprep.mubr.bf16.mxu0 %v938
    %1442 = vmatmul.mubr.bf16.gmra.mrb[0].mxu0 %v937
    %v1443 = vpop.f32.mrb[0].mxu0
    %v1444 = vadd.f32 %v1404, %v1443
    %v1445 = vpop.f32.mrb[0].mxu0
    %v1446 = vpop.f32.mrb[0].mxu0
    %v1447 = vpop.f32.mrb[0].mxu0
    %1448 = vdwg.mxu0
    %1449 = vmatprep.subr.bf16.mxu0 0
    %1450 = vmatpush1.bf16.msra.mxu0 %v1249
    %1451 = vmatprep.subr.bf16.mxu0 0
    %1452 = vmatpush1.bf16.msra.mxu0 %v1250
    %1453 = vmatprep.subr.bf16.mxu0 0
    %1454 = vmatpush1.bf16.msra.mxu0 %v1251
    %1455 = vmatprep.subr.bf16.mxu0 0
    %1456 = vmatpush1.bf16.msra.mxu0 %v1252
    %1457 = vmatprep.subr.bf16.mxu0 0
    %1458 = vmatpush1.bf16.msra.mxu0 %v1253
    %1459 = vmatprep.subr.bf16.mxu0 0
    %1460 = vmatpush1.bf16.msra.mxu0 %v1254
    %1461 = vmatprep.subr.bf16.mxu0 0
    %1462 = vmatpush1.bf16.msra.mxu0 %v1255
    %1463 = vmatprep.subr.bf16.mxu0 0
    %1464 = vmatpush1.bf16.msra.mxu0 %v1256
    %1465 = vmatprep.subr.bf16.mxu0 0
    %1466 = vmatpush1.bf16.msra.mxu0 %v1257
    %1467 = vmatprep.subr.bf16.mxu0 0
    %1468 = vmatpush1.bf16.msra.mxu0 %v1258
    %1469 = vmatprep.subr.bf16.mxu0 0
    %1470 = vmatpush1.bf16.msra.mxu0 %v1259
    %1471 = vmatprep.subr.bf16.mxu0 0
    %1472 = vmatpush1.bf16.msra.mxu0 %v1260
    %1473 = vmatprep.subr.bf16.mxu0 0
    %1474 = vmatpush1.bf16.msra.mxu0 %v1261
    %1475 = vmatprep.subr.bf16.mxu0 0
    %1476 = vmatpush1.bf16.msra.mxu0 %v1262
    %1477 = vmatprep.subr.bf16.mxu0 0
    %1478 = vmatpush1.bf16.msra.mxu0 %v1263
    %1479 = vmatprep.subr.bf16.mxu0 0
    %1480 = vmatpush1.bf16.msra.mxu0 %v1264
    %1481 = vmatprep.mubr.bf16.mxu0 %v940
    %1482 = vmatmul.mubr.bf16.gmra.mrb[0].mxu0 %v939
    %v1483 = vpop.f32.mrb[0].mxu0
    %v1484 = vadd.f32 %v1444, %v1483
    %v1485 = vpop.f32.mrb[0].mxu0
    %v1486 = vpop.f32.mrb[0].mxu0
    %v1487 = vpop.f32.mrb[0].mxu0
    %1488 = vdwg.mxu0
    %v1489 = vmax.f32 %v1484, 0.0
    %v1490 = vld [vmem:[#allocation2 + $0x40] sm:$0xff]
    %v1491 = vld [vmem:[#allocation2 + $0x48] sm:$0xff]
    %v1492 = vld [vmem:[#allocation2 + $0x50] sm:$0xff]
    %v1493 = vld [vmem:[#allocation2 + $0x58] sm:$0xff]
    %v1494 = vld [vmem:[#allocation7 + $0x8] sm:$0xf]
    %v1495 = vld [vmem:[#allocation7 + $0x14] sm:$0xf]
    %v1496 = vld [vmem:[#allocation7 + $0x20] sm:$0xf]
    %v1497 = vld [vmem:[#allocation7 + $0x2c] sm:$0xf]
    %v1498 = vld [vmem:[#allocation7 + $0x38] sm:$0xf]
    %v1499 = vld [vmem:[#allocation7 + $0x44] sm:$0xf]
    %v1500 = vld [vmem:[#allocation7 + $0x50] sm:$0xf]
    %v1501 = vld [vmem:[#allocation7 + $0x5c] sm:$0xf]
    %v1502 = vld [vmem:[#allocation7 + $0x68] sm:$0xf]
    %v1503 = vld [vmem:[#allocation7 + $0x74] sm:$0xf]
    %v1504 = vld [vmem:[#allocation7 + $0x80] sm:$0xf]
    %v1505 = vld [vmem:[#allocation7 + $0x8c] sm:$0xf]
    %v1506 = vld [vmem:[#allocation7 + $0x98] sm:$0xf]
    %v1507 = vld [vmem:[#allocation7 + $0xa4] sm:$0xf]
    %v1508 = vld [vmem:[#allocation7 + $0xb0] sm:$0xf]
    %v1509 = vld [vmem:[#allocation7 + $0xbc] sm:$0xf]
    %v1510 = vld [vmem:[#allocation7 + $0xc8] sm:$0xf]
    %v1511 = vld [vmem:[#allocation7 + $0xd4] sm:$0xf]
    %v1512 = vld [vmem:[#allocation7 + $0xe0] sm:$0xf]
    %v1513 = vld [vmem:[#allocation7 + $0xec] sm:$0xf]
    %v1514 = vld [vmem:[#allocation7 + $0xf8] sm:$0xf]
    %v1515 = vld [vmem:[#allocation7 + $0x104] sm:$0xf]
    %v1516 = vld [vmem:[#allocation7 + $0x110] sm:$0xf]
    %v1517 = vld [vmem:[#allocation7 + $0x11c] sm:$0xf]
    %v1518 = vld [vmem:[#allocation7 + $0x128] sm:$0xf]
    %v1519 = vld [vmem:[#allocation7 + $0x134] sm:$0xf]
    %v1520 = vld [vmem:[#allocation7 + $0x140] sm:$0xf]
    %v1521 = vld [vmem:[#allocation7 + $0x14c] sm:$0xf]
    %v1522 = vld [vmem:[#allocation7 + $0x158] sm:$0xf]
    %v1523 = vld [vmem:[#allocation7 + $0x164] sm:$0xf]
    %v1524 = vld [vmem:[#allocation7 + $0x170] sm:$0xf]
    %v1525 = vld [vmem:[#allocation7 + $0x17c] sm:$0xf]
    %v1526 = vld [vmem:[#allocation7 + $0x188] sm:$0xf]
    %v1527 = vld [vmem:[#allocation7 + $0x194] sm:$0xf]
    %v1528 = vld [vmem:[#allocation7 + $0x1a0] sm:$0xf]
    %v1529 = vld [vmem:[#allocation7 + $0x1ac] sm:$0xf]
    %v1530 = vld [vmem:[#allocation7 + $0x1b8] sm:$0xf]
    %v1531 = vld [vmem:[#allocation7 + $0x1c4] sm:$0xf]
    %v1532 = vld [vmem:[#allocation7 + $0x1d0] sm:$0xf]
    %v1533 = vld [vmem:[#allocation7 + $0x1dc] sm:$0xf]
    %v1534 = vld [vmem:[#allocation7 + $0x1e8] sm:$0xf]
    %v1535 = vld [vmem:[#allocation7 + $0x1f4] sm:$0xf]
    %v1536 = vld [vmem:[#allocation7 + $0x200] sm:$0xf]
    %v1537 = vld [vmem:[#allocation7 + $0x20c] sm:$0xf]
    %v1538 = vld [vmem:[#allocation7 + $0x218] sm:$0xf]
    %v1539 = vld [vmem:[#allocation7 + $0x224] sm:$0xf]
    %v1540 = vld [vmem:[#allocation7 + $0x230] sm:$0xf]
    %v1541 = vld [vmem:[#allocation7 + $0x23c] sm:$0xf]
    %v1542 = vld [vmem:[#allocation7 + $0x248] sm:$0xf]
    %v1543 = vld [vmem:[#allocation7 + $0x254] sm:$0xf]
    %v1544 = vld [vmem:[#allocation7 + $0x260] sm:$0xf]
    %v1545 = vld [vmem:[#allocation7 + $0x26c] sm:$0xf]
    %v1546 = vld [vmem:[#allocation7 + $0x278] sm:$0xf]
    %v1547 = vld [vmem:[#allocation7 + $0x284] sm:$0xf]
    %v1548 = vld [vmem:[#allocation7 + $0x290] sm:$0xf]
    %v1549 = vld [vmem:[#allocation7 + $0x29c] sm:$0xf]
    %v1550 = vld [vmem:[#allocation7 + $0x2a8] sm:$0xf]
    %v1551 = vld [vmem:[#allocation7 + $0x2b4] sm:$0xf]
    %v1552 = vld [vmem:[#allocation7 + $0x2c0] sm:$0xf]
    %v1553 = vld [vmem:[#allocation7 + $0x2cc] sm:$0xf]
    %v1554 = vld [vmem:[#allocation7 + $0x2d8] sm:$0xf]
    %v1555 = vld [vmem:[#allocation7 + $0x2e4] sm:$0xf]
    %v1556 = vld [vmem:[#allocation7 + $0x2f0] sm:$0xf]
    %v1557 = vld [vmem:[#allocation7 + $0x2fc] sm:$0xf]
    %v1558 = vld [vmem:[#allocation7 + $0x308] sm:$0xf]
    %v1559 = vld [vmem:[#allocation7 + $0x314] sm:$0xf]
    %v1560 = vld [vmem:[#allocation7 + $0x320] sm:$0xf]
    %v1561 = vld [vmem:[#allocation7 + $0x32c] sm:$0xf]
    %v1562 = vld [vmem:[#allocation7 + $0x338] sm:$0xf]
    %v1563 = vld [vmem:[#allocation7 + $0x344] sm:$0xf]
    %v1564 = vld [vmem:[#allocation7 + $0x350] sm:$0xf]
    %v1565 = vld [vmem:[#allocation7 + $0x35c] sm:$0xf]
    %v1566 = vld [vmem:[#allocation7 + $0x368] sm:$0xf]
    %v1567 = vld [vmem:[#allocation7 + $0x374] sm:$0xf]
    %v1568 = vld [vmem:[#allocation7 + $0x380] sm:$0xf]
    %v1569 = vld [vmem:[#allocation7 + $0x38c] sm:$0xf]
    %v1570 = vld [vmem:[#allocation7 + $0x398] sm:$0xf]
    %v1571 = vld [vmem:[#allocation7 + $0x3a4] sm:$0xf]
    %v1572 = vld [vmem:[#allocation7 + $0x3b0] sm:$0xf]
    %v1573 = vld [vmem:[#allocation7 + $0x3bc] sm:$0xf]
    %v1574 = vld [vmem:[#allocation7 + $0x3c8] sm:$0xf]
    %v1575 = vld [vmem:[#allocation7 + $0x3d4] sm:$0xf]
    %v1576 = vld [vmem:[#allocation7 + $0x3e0] sm:$0xf]
    %v1577 = vld [vmem:[#allocation7 + $0x3ec] sm:$0xf]
    %v1578 = vld [vmem:[#allocation7 + $0x3f8] sm:$0xf]
    %v1579 = vld [vmem:[#allocation7 + $0x404] sm:$0xf]
    %v1580 = vld [vmem:[#allocation7 + $0x410] sm:$0xf]
    %v1581 = vld [vmem:[#allocation7 + $0x41c] sm:$0xf]
    %v1582 = vld [vmem:[#allocation7 + $0x428] sm:$0xf]
    %v1583 = vld [vmem:[#allocation7 + $0x434] sm:$0xf]
    %v1584 = vld [vmem:[#allocation7 + $0x440] sm:$0xf]
    %v1585 = vld [vmem:[#allocation7 + $0x44c] sm:$0xf]
    %v1586 = vld [vmem:[#allocation7 + $0x458] sm:$0xf]
    %v1587 = vld [vmem:[#allocation7 + $0x464] sm:$0xf]
    %v1588 = vld [vmem:[#allocation7 + $0x470] sm:$0xf]
    %v1589 = vld [vmem:[#allocation7 + $0x47c] sm:$0xf]
    %v1590 = vld [vmem:[#allocation7 + $0x488] sm:$0xf]
    %v1591 = vld [vmem:[#allocation7 + $0x494] sm:$0xf]
    %v1592 = vld [vmem:[#allocation7 + $0x4a0] sm:$0xf]
    %v1593 = vld [vmem:[#allocation7 + $0x4ac] sm:$0xf]
    %v1594 = vld [vmem:[#allocation7 + $0x4b8] sm:$0xf]
    %v1595 = vld [vmem:[#allocation7 + $0x4c4] sm:$0xf]
    %v1596 = vld [vmem:[#allocation7 + $0x4d0] sm:$0xf]
    %v1597 = vld [vmem:[#allocation7 + $0x4dc] sm:$0xf]
    %v1598 = vld [vmem:[#allocation7 + $0x4e8] sm:$0xf]
    %v1599 = vld [vmem:[#allocation7 + $0x4f4] sm:$0xf]
    %v1600 = vld [vmem:[#allocation7 + $0x500] sm:$0xf]
    %v1601 = vld [vmem:[#allocation7 + $0x50c] sm:$0xf]
    %v1602 = vld [vmem:[#allocation7 + $0x518] sm:$0xf]
    %v1603 = vld [vmem:[#allocation7 + $0x524] sm:$0xf]
    %v1604 = vld [vmem:[#allocation7 + $0x530] sm:$0xf]
    %v1605 = vld [vmem:[#allocation7 + $0x53c] sm:$0xf]
    %v1606 = vld [vmem:[#allocation7 + $0x548] sm:$0xf]
    %v1607 = vld [vmem:[#allocation7 + $0x554] sm:$0xf]
    %v1608 = vld [vmem:[#allocation7 + $0x560] sm:$0xf]
    %v1609 = vld [vmem:[#allocation7 + $0x56c] sm:$0xf]
    %v1610 = vld [vmem:[#allocation7 + $0x578] sm:$0xf]
    %v1611 = vld [vmem:[#allocation7 + $0x584] sm:$0xf]
    %v1612 = vld [vmem:[#allocation7 + $0x590] sm:$0xf]
    %v1613 = vld [vmem:[#allocation7 + $0x59c] sm:$0xf]
    %v1614 = vld [vmem:[#allocation7 + $0x5a8] sm:$0xf]
    %v1615 = vld [vmem:[#allocation7 + $0x5b4] sm:$0xf]
    %v1616 = vld [vmem:[#allocation7 + $0x5c0] sm:$0xf]
    %v1617 = vld [vmem:[#allocation7 + $0x5cc] sm:$0xf]
    %v1618 = vld [vmem:[#allocation7 + $0x5d8] sm:$0xf]
    %v1619 = vld [vmem:[#allocation7 + $0x5e4] sm:$0xf]
    %v1620 = vld [vmem:[#allocation7 + $0x5f0] sm:$0xf]
    %v1621 = vld [vmem:[#allocation7 + $0x5fc] sm:$0xf]
    %v1626 = vcombine.high %v1490, %v1490
    %v1627 = vcombine.high %v1491, %v1491
    %v1628 = vcombine.high %v1492, %v1492
    %v1629 = vcombine.high %v1493, %v1493
    %v1634 = vpack.c.bf16 %v1490, %v1490
    %v1635 = vpack.c.bf16 %v1626, %v1626
    %v1636 = vpack.c.bf16 %v1491, %v1491
    %v1637 = vpack.c.bf16 %v1627, %v1627
    %v1638 = vpack.c.bf16 %v1492, %v1492
    %v1639 = vpack.c.bf16 %v1628, %v1628
    %v1640 = vpack.c.bf16 %v1493, %v1493
    %v1641 = vpack.c.bf16 %v1629, %v1629
    %v1642 = vlaneseq
    %v1643 = vshrl.u32 %v1642, 7
    %v1644 = vsub.s32 2, %v1643
    %v1645 = vrot.slane %v86, %v1644
    %v1774 = vunpack.c.l.b16 %v1494
    %v1775 = vunpack.c.l.b16 %v1495
    %v1776 = vunpack.c.l.b16 %v1496
    %v1777 = vunpack.c.l.b16 %v1497
    %v1778 = vunpack.c.l.b16 %v1498
    %v1779 = vunpack.c.l.b16 %v1499
    %v1780 = vunpack.c.l.b16 %v1500
    %v1781 = vunpack.c.l.b16 %v1501
    %v1782 = vunpack.c.l.b16 %v1502
    %v1783 = vunpack.c.l.b16 %v1503
    %v1784 = vunpack.c.l.b16 %v1504
    %v1785 = vunpack.c.l.b16 %v1505
    %v1786 = vunpack.c.l.b16 %v1506
    %v1787 = vunpack.c.l.b16 %v1507
    %v1788 = vunpack.c.l.b16 %v1508
    %v1789 = vunpack.c.l.b16 %v1509
    %v1790 = vunpack.c.l.b16 %v1510
    %v1791 = vunpack.c.l.b16 %v1511
    %v1792 = vunpack.c.l.b16 %v1512
    %v1793 = vunpack.c.l.b16 %v1513
    %v1794 = vunpack.c.l.b16 %v1514
    %v1795 = vunpack.c.l.b16 %v1515
    %v1796 = vunpack.c.l.b16 %v1516
    %v1797 = vunpack.c.l.b16 %v1517
    %v1798 = vunpack.c.l.b16 %v1518
    %v1799 = vunpack.c.l.b16 %v1519
    %v1800 = vunpack.c.l.b16 %v1520
    %v1801 = vunpack.c.l.b16 %v1521
    %v1802 = vunpack.c.l.b16 %v1522
    %v1803 = vunpack.c.l.b16 %v1523
    %v1804 = vunpack.c.l.b16 %v1524
    %v1805 = vunpack.c.l.b16 %v1525
    %v1806 = vunpack.c.l.b16 %v1526
    %v1807 = vunpack.c.l.b16 %v1527
    %v1808 = vunpack.c.l.b16 %v1528
    %v1809 = vunpack.c.l.b16 %v1529
    %v1810 = vunpack.c.l.b16 %v1530
    %v1811 = vunpack.c.l.b16 %v1531
    %v1812 = vunpack.c.l.b16 %v1532
    %v1813 = vunpack.c.l.b16 %v1533
    %v1814 = vunpack.c.l.b16 %v1534
    %v1815 = vunpack.c.l.b16 %v1535
    %v1816 = vunpack.c.l.b16 %v1536
    %v1817 = vunpack.c.l.b16 %v1537
    %v1818 = vunpack.c.l.b16 %v1538
    %v1819 = vunpack.c.l.b16 %v1539
    %v1820 = vunpack.c.l.b16 %v1540
    %v1821 = vunpack.c.l.b16 %v1541
    %v1822 = vunpack.c.l.b16 %v1542
    %v1823 = vunpack.c.l.b16 %v1543
    %v1824 = vunpack.c.l.b16 %v1544
    %v1825 = vunpack.c.l.b16 %v1545
    %v1826 = vunpack.c.l.b16 %v1546
    %v1827 = vunpack.c.l.b16 %v1547
    %v1828 = vunpack.c.l.b16 %v1548
    %v1829 = vunpack.c.l.b16 %v1549
    %v1830 = vunpack.c.l.b16 %v1550
    %v1831 = vunpack.c.l.b16 %v1551
    %v1832 = vunpack.c.l.b16 %v1552
    %v1833 = vunpack.c.l.b16 %v1553
    %v1834 = vunpack.c.l.b16 %v1554
    %v1835 = vunpack.c.l.b16 %v1555
    %v1836 = vunpack.c.l.b16 %v1556
    %v1837 = vunpack.c.l.b16 %v1557
    %v1838 = vunpack.c.l.b16 %v1558
    %v1839 = vunpack.c.l.b16 %v1559
    %v1840 = vunpack.c.l.b16 %v1560
    %v1841 = vunpack.c.l.b16 %v1561
    %v1842 = vunpack.c.l.b16 %v1562
    %v1843 = vunpack.c.l.b16 %v1563
    %v1844 = vunpack.c.l.b16 %v1564
    %v1845 = vunpack.c.l.b16 %v1565
    %v1846 = vunpack.c.l.b16 %v1566
    %v1847 = vunpack.c.l.b16 %v1567
    %v1848 = vunpack.c.l.b16 %v1568
    %v1849 = vunpack.c.l.b16 %v1569
    %v1850 = vunpack.c.l.b16 %v1570
    %v1851 = vunpack.c.l.b16 %v1571
    %v1852 = vunpack.c.l.b16 %v1572
    %v1853 = vunpack.c.l.b16 %v1573
    %v1854 = vunpack.c.l.b16 %v1574
    %v1855 = vunpack.c.l.b16 %v1575
    %v1856 = vunpack.c.l.b16 %v1576
    %v1857 = vunpack.c.l.b16 %v1577
    %v1858 = vunpack.c.l.b16 %v1578
    %v1859 = vunpack.c.l.b16 %v1579
    %v1860 = vunpack.c.l.b16 %v1580
    %v1861 = vunpack.c.l.b16 %v1581
    %v1862 = vunpack.c.l.b16 %v1582
    %v1863 = vunpack.c.l.b16 %v1583
    %v1864 = vunpack.c.l.b16 %v1584
    %v1865 = vunpack.c.l.b16 %v1585
    %v1866 = vunpack.c.l.b16 %v1586
    %v1867 = vunpack.c.l.b16 %v1587
    %v1868 = vunpack.c.l.b16 %v1588
    %v1869 = vunpack.c.l.b16 %v1589
    %v1870 = vunpack.c.l.b16 %v1590
    %v1871 = vunpack.c.l.b16 %v1591
    %v1872 = vunpack.c.l.b16 %v1592
    %v1873 = vunpack.c.l.b16 %v1593
    %v1874 = vunpack.c.l.b16 %v1594
    %v1875 = vunpack.c.l.b16 %v1595
    %v1876 = vunpack.c.l.b16 %v1596
    %v1877 = vunpack.c.l.b16 %v1597
    %v1878 = vunpack.c.l.b16 %v1598
    %v1879 = vunpack.c.l.b16 %v1599
    %v1880 = vunpack.c.l.b16 %v1600
    %v1881 = vunpack.c.l.b16 %v1601
    %v1882 = vunpack.c.l.b16 %v1602
    %v1883 = vunpack.c.l.b16 %v1603
    %v1884 = vunpack.c.l.b16 %v1604
    %v1885 = vunpack.c.l.b16 %v1605
    %v1886 = vunpack.c.l.b16 %v1606
    %v1887 = vunpack.c.l.b16 %v1607
    %v1888 = vunpack.c.l.b16 %v1608
    %v1889 = vunpack.c.l.b16 %v1609
    %v1890 = vunpack.c.l.b16 %v1610
    %v1891 = vunpack.c.l.b16 %v1611
    %v1892 = vunpack.c.l.b16 %v1612
    %v1893 = vunpack.c.l.b16 %v1613
    %v1894 = vunpack.c.l.b16 %v1614
    %v1895 = vunpack.c.l.b16 %v1615
    %v1896 = vunpack.c.l.b16 %v1616
    %v1897 = vunpack.c.l.b16 %v1617
    %v1898 = vunpack.c.l.b16 %v1618
    %v1899 = vunpack.c.l.b16 %v1619
    %v1900 = vunpack.c.l.b16 %v1620
    %v1901 = vunpack.c.l.b16 %v1621
    %v1902 = vpack.c.b16 %v1775, %v1774
    %v1903 = vpack.c.b16 %v1777, %v1776
    %v1904 = vpack.c.b16 %v1779, %v1778
    %v1905 = vpack.c.b16 %v1781, %v1780
    %v1906 = vpack.c.b16 %v1783, %v1782
    %v1907 = vpack.c.b16 %v1785, %v1784
    %v1908 = vpack.c.b16 %v1787, %v1786
    %v1909 = vpack.c.b16 %v1789, %v1788
    %v1910 = vpack.c.b16 %v1791, %v1790
    %v1911 = vpack.c.b16 %v1793, %v1792
    %v1912 = vpack.c.b16 %v1795, %v1794
    %v1913 = vpack.c.b16 %v1797, %v1796
    %v1914 = vpack.c.b16 %v1799, %v1798
    %v1915 = vpack.c.b16 %v1801, %v1800
    %v1916 = vpack.c.b16 %v1803, %v1802
    %v1917 = vpack.c.b16 %v1805, %v1804
    %v1918 = vpack.c.b16 %v1807, %v1806
    %v1919 = vpack.c.b16 %v1809, %v1808
    %v1920 = vpack.c.b16 %v1811, %v1810
    %v1921 = vpack.c.b16 %v1813, %v1812
    %v1922 = vpack.c.b16 %v1815, %v1814
    %v1923 = vpack.c.b16 %v1817, %v1816
    %v1924 = vpack.c.b16 %v1819, %v1818
    %v1925 = vpack.c.b16 %v1821, %v1820
    %v1926 = vpack.c.b16 %v1823, %v1822
    %v1927 = vpack.c.b16 %v1825, %v1824
    %v1928 = vpack.c.b16 %v1827, %v1826
    %v1929 = vpack.c.b16 %v1829, %v1828
    %v1930 = vpack.c.b16 %v1831, %v1830
    %v1931 = vpack.c.b16 %v1833, %v1832
    %v1932 = vpack.c.b16 %v1835, %v1834
    %v1933 = vpack.c.b16 %v1837, %v1836
    %v1934 = vpack.c.b16 %v1839, %v1838
    %v1935 = vpack.c.b16 %v1841, %v1840
    %v1936 = vpack.c.b16 %v1843, %v1842
    %v1937 = vpack.c.b16 %v1845, %v1844
    %v1938 = vpack.c.b16 %v1847, %v1846
    %v1939 = vpack.c.b16 %v1849, %v1848
    %v1940 = vpack.c.b16 %v1851, %v1850
    %v1941 = vpack.c.b16 %v1853, %v1852
    %v1942 = vpack.c.b16 %v1855, %v1854
    %v1943 = vpack.c.b16 %v1857, %v1856
    %v1944 = vpack.c.b16 %v1859, %v1858
    %v1945 = vpack.c.b16 %v1861, %v1860
    %v1946 = vpack.c.b16 %v1863, %v1862
    %v1947 = vpack.c.b16 %v1865, %v1864
    %v1948 = vpack.c.b16 %v1867, %v1866
    %v1949 = vpack.c.b16 %v1869, %v1868
    %v1950 = vpack.c.b16 %v1871, %v1870
    %v1951 = vpack.c.b16 %v1873, %v1872
    %v1952 = vpack.c.b16 %v1875, %v1874
    %v1953 = vpack.c.b16 %v1877, %v1876
    %v1954 = vpack.c.b16 %v1879, %v1878
    %v1955 = vpack.c.b16 %v1881, %v1880
    %v1956 = vpack.c.b16 %v1883, %v1882
    %v1957 = vpack.c.b16 %v1885, %v1884
    %v1958 = vpack.c.b16 %v1887, %v1886
    %v1959 = vpack.c.b16 %v1889, %v1888
    %v1960 = vpack.c.b16 %v1891, %v1890
    %v1961 = vpack.c.b16 %v1893, %v1892
    %v1962 = vpack.c.b16 %v1895, %v1894
    %v1963 = vpack.c.b16 %v1897, %v1896
    %v1964 = vpack.c.b16 %v1899, %v1898
    %v1965 = vpack.c.b16 %v1901, %v1900
    %2030 = vmatprep.subr.bf16.mxu0 0
    %2031 = vmatpush1.bf16.msra.mxu0 %v1902
    %2032 = vmatprep.subr.bf16.mxu0 0
    %2033 = vmatpush1.bf16.msra.mxu0 %v1903
    %2034 = vmatprep.subr.bf16.mxu0 0
    %2035 = vmatpush1.bf16.msra.mxu0 %v1904
    %2036 = vmatprep.subr.bf16.mxu0 0
    %2037 = vmatpush1.bf16.msra.mxu0 %v1905
    %2038 = vmatprep.subr.bf16.mxu0 0
    %2039 = vmatpush1.bf16.msra.mxu0 %v1906
    %2040 = vmatprep.subr.bf16.mxu0 0
    %2041 = vmatpush1.bf16.msra.mxu0 %v1907
    %2042 = vmatprep.subr.bf16.mxu0 0
    %2043 = vmatpush1.bf16.msra.mxu0 %v1908
    %2044 = vmatprep.subr.bf16.mxu0 0
    %2045 = vmatpush1.bf16.msra.mxu0 %v1909
    %2046 = vmatprep.subr.bf16.mxu0 0
    %2047 = vmatpush1.bf16.msra.mxu0 %v1910
    %2048 = vmatprep.subr.bf16.mxu0 0
    %2049 = vmatpush1.bf16.msra.mxu0 %v1911
    %2050 = vmatprep.subr.bf16.mxu0 0
    %2051 = vmatpush1.bf16.msra.mxu0 %v1912
    %2052 = vmatprep.subr.bf16.mxu0 0
    %2053 = vmatpush1.bf16.msra.mxu0 %v1913
    %2054 = vmatprep.subr.bf16.mxu0 0
    %2055 = vmatpush1.bf16.msra.mxu0 %v1914
    %2056 = vmatprep.subr.bf16.mxu0 0
    %2057 = vmatpush1.bf16.msra.mxu0 %v1915
    %2058 = vmatprep.subr.bf16.mxu0 0
    %2059 = vmatpush1.bf16.msra.mxu0 %v1916
    %2060 = vmatprep.subr.bf16.mxu0 0
    %2061 = vmatpush1.bf16.msra.mxu0 %v1917
    %2062 = vmatprep.mubr.bf16.mxu0 %v1635
    %2063 = vmatmul.mubr.bf16.gmra.mrb[0].mxu0 %v1634
    %v2064 = vpop.f32.mrb[0].mxu0
    %v2065 = vadd.f32 %v1645, %v2064
    %v2066 = vpop.f32.mrb[0].mxu0
    %v2067 = vpop.f32.mrb[0].mxu0
    %v2068 = vpop.f32.mrb[0].mxu0
    %2069 = vdwg.mxu0
    %2070 = vmatprep.subr.bf16.mxu0 0
    %2071 = vmatpush1.bf16.msra.mxu0 %v1918
    %2072 = vmatprep.subr.bf16.mxu0 0
    %2073 = vmatpush1.bf16.msra.mxu0 %v1919
    %2074 = vmatprep.subr.bf16.mxu0 0
    %2075 = vmatpush1.bf16.msra.mxu0 %v1920
    %2076 = vmatprep.subr.bf16.mxu0 0
    %2077 = vmatpush1.bf16.msra.mxu0 %v1921
    %2078 = vmatprep.subr.bf16.mxu0 0
    %2079 = vmatpush1.bf16.msra.mxu0 %v1922
    %2080 = vmatprep.subr.bf16.mxu0 0
    %2081 = vmatpush1.bf16.msra.mxu0 %v1923
    %2082 = vmatprep.subr.bf16.mxu0 0
    %2083 = vmatpush1.bf16.msra.mxu0 %v1924
    %2084 = vmatprep.subr.bf16.mxu0 0
    %2085 = vmatpush1.bf16.msra.mxu0 %v1925
    %2086 = vmatprep.subr.bf16.mxu0 0
    %2087 = vmatpush1.bf16.msra.mxu0 %v1926
    %2088 = vmatprep.subr.bf16.mxu0 0
    %2089 = vmatpush1.bf16.msra.mxu0 %v1927
    %2090 = vmatprep.subr.bf16.mxu0 0
    %2091 = vmatpush1.bf16.msra.mxu0 %v1928
    %2092 = vmatprep.subr.bf16.mxu0 0
    %2093 = vmatpush1.bf16.msra.mxu0 %v1929
    %2094 = vmatprep.subr.bf16.mxu0 0
    %2095 = vmatpush1.bf16.msra.mxu0 %v1930
    %2096 = vmatprep.subr.bf16.mxu0 0
    %2097 = vmatpush1.bf16.msra.mxu0 %v1931
    %2098 = vmatprep.subr.bf16.mxu0 0
    %2099 = vmatpush1.bf16.msra.mxu0 %v1932
    %2100 = vmatprep.subr.bf16.mxu0 0
    %2101 = vmatpush1.bf16.msra.mxu0 %v1933
    %2102 = vmatprep.mubr.bf16.mxu0 %v1637
    %2103 = vmatmul.mubr.bf16.gmra.mrb[0].mxu0 %v1636
    %v2104 = vpop.f32.mrb[0].mxu0
    %v2105 = vadd.f32 %v2065, %v2104
    %v2106 = vpop.f32.mrb[0].mxu0
    %v2107 = vpop.f32.mrb[0].mxu0
    %v2108 = vpop.f32.mrb[0].mxu0
    %2109 = vdwg.mxu0
    %2110 = vmatprep.subr.bf16.mxu0 0
    %2111 = vmatpush1.bf16.msra.mxu0 %v1934
    %2112 = vmatprep.subr.bf16.mxu0 0
    %2113 = vmatpush1.bf16.msra.mxu0 %v1935
    %2114 = vmatprep.subr.bf16.mxu0 0
    %2115 = vmatpush1.bf16.msra.mxu0 %v1936
    %2116 = vmatprep.subr.bf16.mxu0 0
    %2117 = vmatpush1.bf16.msra.mxu0 %v1937
    %2118 = vmatprep.subr.bf16.mxu0 0
    %2119 = vmatpush1.bf16.msra.mxu0 %v1938
    %2120 = vmatprep.subr.bf16.mxu0 0
    %2121 = vmatpush1.bf16.msra.mxu0 %v1939
    %2122 = vmatprep.subr.bf16.mxu0 0
    %2123 = vmatpush1.bf16.msra.mxu0 %v1940
    %2124 = vmatprep.subr.bf16.mxu0 0
    %2125 = vmatpush1.bf16.msra.mxu0 %v1941
    %2126 = vmatprep.subr.bf16.mxu0 0
    %2127 = vmatpush1.bf16.msra.mxu0 %v1942
    %2128 = vmatprep.subr.bf16.mxu0 0
    %2129 = vmatpush1.bf16.msra.mxu0 %v1943
    %2130 = vmatprep.subr.bf16.mxu0 0
    %2131 = vmatpush1.bf16.msra.mxu0 %v1944
    %2132 = vmatprep.subr.bf16.mxu0 0
    %2133 = vmatpush1.bf16.msra.mxu0 %v1945
    %2134 = vmatprep.subr.bf16.mxu0 0
    %2135 = vmatpush1.bf16.msra.mxu0 %v1946
    %2136 = vmatprep.subr.bf16.mxu0 0
    %2137 = vmatpush1.bf16.msra.mxu0 %v1947
    %2138 = vmatprep.subr.bf16.mxu0 0
    %2139 = vmatpush1.bf16.msra.mxu0 %v1948
    %2140 = vmatprep.subr.bf16.mxu0 0
    %2141 = vmatpush1.bf16.msra.mxu0 %v1949
    %2142 = vmatprep.mubr.bf16.mxu0 %v1639
    %2143 = vmatmul.mubr.bf16.gmra.mrb[0].mxu0 %v1638
    %v2144 = vpop.f32.mrb[0].mxu0
    %v2145 = vadd.f32 %v2105, %v2144
    %v2146 = vpop.f32.mrb[0].mxu0
    %v2147 = vpop.f32.mrb[0].mxu0
    %v2148 = vpop.f32.mrb[0].mxu0
    %2149 = vdwg.mxu0
    %2150 = vmatprep.subr.bf16.mxu0 0
    %2151 = vmatpush1.bf16.msra.mxu0 %v1950
    %2152 = vmatprep.subr.bf16.mxu0 0
    %2153 = vmatpush1.bf16.msra.mxu0 %v1951
    %2154 = vmatprep.subr.bf16.mxu0 0
    %2155 = vmatpush1.bf16.msra.mxu0 %v1952
    %2156 = vmatprep.subr.bf16.mxu0 0
    %2157 = vmatpush1.bf16.msra.mxu0 %v1953
    %2158 = vmatprep.subr.bf16.mxu0 0
    %2159 = vmatpush1.bf16.msra.mxu0 %v1954
    %2160 = vmatprep.subr.bf16.mxu0 0
    %2161 = vmatpush1.bf16.msra.mxu0 %v1955
    %2162 = vmatprep.subr.bf16.mxu0 0
    %2163 = vmatpush1.bf16.msra.mxu0 %v1956
    %2164 = vmatprep.subr.bf16.mxu0 0
    %2165 = vmatpush1.bf16.msra.mxu0 %v1957
    %2166 = vmatprep.subr.bf16.mxu0 0
    %2167 = vmatpush1.bf16.msra.mxu0 %v1958
    %2168 = vmatprep.subr.bf16.mxu0 0
    %2169 = vmatpush1.bf16.msra.mxu0 %v1959
    %2170 = vmatprep.subr.bf16.mxu0 0
    %2171 = vmatpush1.bf16.msra.mxu0 %v1960
    %2172 = vmatprep.subr.bf16.mxu0 0
    %2173 = vmatpush1.bf16.msra.mxu0 %v1961
    %2174 = vmatprep.subr.bf16.mxu0 0
    %2175 = vmatpush1.bf16.msra.mxu0 %v1962
    %2176 = vmatprep.subr.bf16.mxu0 0
    %2177 = vmatpush1.bf16.msra.mxu0 %v1963
    %2178 = vmatprep.subr.bf16.mxu0 0
    %2179 = vmatpush1.bf16.msra.mxu0 %v1964
    %2180 = vmatprep.subr.bf16.mxu0 0
    %2181 = vmatpush1.bf16.msra.mxu0 %v1965
    %2182 = vmatprep.mubr.bf16.mxu0 %v1641
    %2183 = vmatmul.mubr.bf16.gmra.mrb[0].mxu0 %v1640
    %v2184 = vpop.f32.mrb[0].mxu0
    %v2185 = vadd.f32 %v2145, %v2184
    %v2186 = vpop.f32.mrb[0].mxu0
    %v2187 = vpop.f32.mrb[0].mxu0
    %v2188 = vpop.f32.mrb[0].mxu0
    %2189 = vdwg.mxu0
    %v2190 = vmax.f32 %v2185, 0.0
    %v2191 = vld [vmem:[#allocation8] sm:$0xf]
    %v2192 = vld [vmem:[#allocation8 + $0x4] sm:$0xf]
    %v2193 = vld [vmem:[#allocation8 + $0x8] sm:$0xf]
    %v2194 = vld [vmem:[#allocation8 + $0xc] sm:$0xf]
    %v2195 = vld [vmem:[#allocation8 + $0x10] sm:$0xf]
    %v2196 = vld [vmem:[#allocation8 + $0x14] sm:$0xf]
    %v2197 = vld [vmem:[#allocation8 + $0x18] sm:$0xf]
    %v2198 = vld [vmem:[#allocation8 + $0x1c] sm:$0xf]
    %v2199 = vld [vmem:[#allocation8 + $0x20] sm:$0xf]
    %v2200 = vld [vmem:[#allocation8 + $0x24] sm:$0xf]
    %v2201 = vld [vmem:[#allocation8 + $0x28] sm:$0xf]
    %v2202 = vld [vmem:[#allocation8 + $0x2c] sm:$0xf]
    %v2203 = vld [vmem:[#allocation8 + $0x30] sm:$0xf]
    %v2204 = vld [vmem:[#allocation8 + $0x34] sm:$0xf]
    %v2205 = vld [vmem:[#allocation8 + $0x38] sm:$0xf]
    %v2206 = vld [vmem:[#allocation8 + $0x3c] sm:$0xf]
    %v2207 = vld [vmem:[#allocation8 + $0x40] sm:$0xf]
    %v2208 = vld [vmem:[#allocation8 + $0x44] sm:$0xf]
    %v2209 = vld [vmem:[#allocation8 + $0x48] sm:$0xf]
    %v2210 = vld [vmem:[#allocation8 + $0x4c] sm:$0xf]
    %v2211 = vld [vmem:[#allocation8 + $0x50] sm:$0xf]
    %v2212 = vld [vmem:[#allocation8 + $0x54] sm:$0xf]
    %v2213 = vld [vmem:[#allocation8 + $0x58] sm:$0xf]
    %v2214 = vld [vmem:[#allocation8 + $0x5c] sm:$0xf]
    %v2215 = vld [vmem:[#allocation8 + $0x60] sm:$0xf]
    %v2216 = vld [vmem:[#allocation8 + $0x64] sm:$0xf]
    %v2217 = vld [vmem:[#allocation8 + $0x68] sm:$0xf]
    %v2218 = vld [vmem:[#allocation8 + $0x6c] sm:$0xf]
    %v2219 = vld [vmem:[#allocation8 + $0x70] sm:$0xf]
    %v2220 = vld [vmem:[#allocation8 + $0x74] sm:$0xf]
    %v2221 = vld [vmem:[#allocation8 + $0x78] sm:$0xf]
    %v2222 = vld [vmem:[#allocation8 + $0x7c] sm:$0xf]
    %v2223 = vld [vmem:[#allocation8 + $0x80] sm:$0xf]
    %v2224 = vld [vmem:[#allocation8 + $0x84] sm:$0xf]
    %v2225 = vld [vmem:[#allocation8 + $0x88] sm:$0xf]
    %v2226 = vld [vmem:[#allocation8 + $0x8c] sm:$0xf]
    %v2227 = vld [vmem:[#allocation8 + $0x90] sm:$0xf]
    %v2228 = vld [vmem:[#allocation8 + $0x94] sm:$0xf]
    %v2229 = vld [vmem:[#allocation8 + $0x98] sm:$0xf]
    %v2230 = vld [vmem:[#allocation8 + $0x9c] sm:$0xf]
    %v2231 = vld [vmem:[#allocation8 + $0xa0] sm:$0xf]
    %v2232 = vld [vmem:[#allocation8 + $0xa4] sm:$0xf]
    %v2233 = vld [vmem:[#allocation8 + $0xa8] sm:$0xf]
    %v2234 = vld [vmem:[#allocation8 + $0xac] sm:$0xf]
    %v2235 = vld [vmem:[#allocation8 + $0xb0] sm:$0xf]
    %v2236 = vld [vmem:[#allocation8 + $0xb4] sm:$0xf]
    %v2237 = vld [vmem:[#allocation8 + $0xb8] sm:$0xf]
    %v2238 = vld [vmem:[#allocation8 + $0xbc] sm:$0xf]
    %v2239 = vpack.c.bf16 %v788, %v788
    %v2240 = vpack.c.bf16 %v1489, %v1489
    %v2241 = vpack.c.bf16 %v2190, %v2190
    %v2242 = vlaneseq
    %v2243 = vshrl.u32 %v2242, 7
    %v2244 = vsub.s32 3, %v2243
    %v2245 = vrot.slane %v86, %v2244
    %v2294 = vunpack.c.l.b16 %v2191
    %v2295 = vunpack.c.l.b16 %v2192
    %v2296 = vunpack.c.l.b16 %v2193
    %v2297 = vunpack.c.l.b16 %v2194
    %v2298 = vunpack.c.l.b16 %v2195
    %v2299 = vunpack.c.l.b16 %v2196
    %v2300 = vunpack.c.l.b16 %v2197
    %v2301 = vunpack.c.l.b16 %v2198
    %v2302 = vunpack.c.l.b16 %v2199
    %v2303 = vunpack.c.l.b16 %v2200
    %v2304 = vunpack.c.l.b16 %v2201
    %v2305 = vunpack.c.l.b16 %v2202
    %v2306 = vunpack.c.l.b16 %v2203
    %v2307 = vunpack.c.l.b16 %v2204
    %v2308 = vunpack.c.l.b16 %v2205
    %v2309 = vunpack.c.l.b16 %v2206
    %v2310 = vunpack.c.l.b16 %v2207
    %v2311 = vunpack.c.l.b16 %v2208
    %v2312 = vunpack.c.l.b16 %v2209
    %v2313 = vunpack.c.l.b16 %v2210
    %v2314 = vunpack.c.l.b16 %v2211
    %v2315 = vunpack.c.l.b16 %v2212
    %v2316 = vunpack.c.l.b16 %v2213
    %v2317 = vunpack.c.l.b16 %v2214
    %v2318 = vunpack.c.l.b16 %v2215
    %v2319 = vunpack.c.l.b16 %v2216
    %v2320 = vunpack.c.l.b16 %v2217
    %v2321 = vunpack.c.l.b16 %v2218
    %v2322 = vunpack.c.l.b16 %v2219
    %v2323 = vunpack.c.l.b16 %v2220
    %v2324 = vunpack.c.l.b16 %v2221
    %v2325 = vunpack.c.l.b16 %v2222
    %v2326 = vunpack.c.l.b16 %v2223
    %v2327 = vunpack.c.l.b16 %v2224
    %v2328 = vunpack.c.l.b16 %v2225
    %v2329 = vunpack.c.l.b16 %v2226
    %v2330 = vunpack.c.l.b16 %v2227
    %v2331 = vunpack.c.l.b16 %v2228
    %v2332 = vunpack.c.l.b16 %v2229
    %v2333 = vunpack.c.l.b16 %v2230
    %v2334 = vunpack.c.l.b16 %v2231
    %v2335 = vunpack.c.l.b16 %v2232
    %v2336 = vunpack.c.l.b16 %v2233
    %v2337 = vunpack.c.l.b16 %v2234
    %v2338 = vunpack.c.l.b16 %v2235
    %v2339 = vunpack.c.l.b16 %v2236
    %v2340 = vunpack.c.l.b16 %v2237
    %v2341 = vunpack.c.l.b16 %v2238
    %v2342 = vpack.c.b16 %v2295, %v2294
    %v2343 = vpack.c.b16 %v2297, %v2296
    %v2344 = vpack.c.b16 %v2299, %v2298
    %v2345 = vpack.c.b16 %v2301, %v2300
    %v2346 = vpack.c.b16 %v2303, %v2302
    %v2347 = vpack.c.b16 %v2305, %v2304
    %v2348 = vpack.c.b16 %v2307, %v2306
    %v2349 = vpack.c.b16 %v2309, %v2308
    %v2350 = vpack.c.b16 %v2311, %v2310
    %v2351 = vpack.c.b16 %v2313, %v2312
    %v2352 = vpack.c.b16 %v2315, %v2314
    %v2353 = vpack.c.b16 %v2317, %v2316
    %v2354 = vpack.c.b16 %v2319, %v2318
    %v2355 = vpack.c.b16 %v2321, %v2320
    %v2356 = vpack.c.b16 %v2323, %v2322
    %v2357 = vpack.c.b16 %v2325, %v2324
    %v2358 = vpack.c.b16 %v2327, %v2326
    %v2359 = vpack.c.b16 %v2329, %v2328
    %v2360 = vpack.c.b16 %v2331, %v2330
    %v2361 = vpack.c.b16 %v2333, %v2332
    %v2362 = vpack.c.b16 %v2335, %v2334
    %v2363 = vpack.c.b16 %v2337, %v2336
    %v2364 = vpack.c.b16 %v2339, %v2338
    %v2365 = vpack.c.b16 %v2341, %v2340
    %2390 = vmatprep.subr.bf16.mxu0 0
    %2391 = vmatpush1.bf16.msra.mxu0 %v2342
    %2392 = vmatprep.subr.bf16.mxu0 0
    %2393 = vmatpush1.bf16.msra.mxu0 %v2343
    %2394 = vmatprep.subr.bf16.mxu0 0
    %2395 = vmatpush1.bf16.msra.mxu0 %v2344
    %2396 = vmatprep.subr.bf16.mxu0 0
    %2397 = vmatpush1.bf16.msra.mxu0 %v2345
    %2398 = vmatprep.subr.bf16.mxu0 0
    %2399 = vmatpush1.bf16.msra.mxu0 %v2346
    %2400 = vmatprep.subr.bf16.mxu0 0
    %2401 = vmatpush1.bf16.msra.mxu0 %v2347
    %2402 = vmatprep.subr.bf16.mxu0 0
    %2403 = vmatpush1.bf16.msra.mxu0 %v2348
    %2404 = vmatprep.subr.bf16.mxu0 0
    %2405 = vmatpush1.bf16.msra.mxu0 %v2349
    %2406 = vmatprep.subr.bf16.mxu0 0
    %2407 = vmatpush1.bf16.msra.mxu0 %v2350
    %2408 = vmatprep.subr.bf16.mxu0 0
    %2409 = vmatpush1.bf16.msra.mxu0 %v2351
    %2410 = vmatprep.subr.bf16.mxu0 0
    %2411 = vmatpush1.bf16.msra.mxu0 %v2352
    %2412 = vmatprep.subr.bf16.mxu0 0
    %2413 = vmatpush1.bf16.msra.mxu0 %v2353
    %2414 = vmatprep.subr.bf16.mxu0 0
    %2415 = vmatpush1.bf16.msra.mxu0 %v2354
    %2416 = vmatprep.subr.bf16.mxu0 0
    %2417 = vmatpush1.bf16.msra.mxu0 %v2355
    %2418 = vmatprep.subr.bf16.mxu0 0
    %2419 = vmatpush1.bf16.msra.mxu0 %v2356
    %2420 = vmatprep.subr.bf16.mxu0 0
    %2421 = vmatpush1.bf16.msra.mxu0 %v2357
    %2422 = vmatprep.mubr.bf16.mxu0 %v2240
    %2423 = vmatmul.mubr.bf16.gmra.mrb[0].mxu0 %v2239
    %v2424 = vpop.f32.mrb[0].mxu0
    %v2425 = vadd.f32 %v2245, %v2424
    %v2426 = vpop.f32.mrb[0].mxu0
    %v2427 = vpop.f32.mrb[0].mxu0
    %v2428 = vpop.f32.mrb[0].mxu0
    %2429 = vdwg.mxu0
    %2430 = vmatprep.subr.bf16.mxu0 0
    %2431 = vmatpush1.bf16.msra.mxu0 %v2358
    %2432 = vmatprep.subr.bf16.mxu0 0
    %2433 = vmatpush1.bf16.msra.mxu0 %v2359
    %2434 = vmatprep.subr.bf16.mxu0 0
    %2435 = vmatpush1.bf16.msra.mxu0 %v2360
    %2436 = vmatprep.subr.bf16.mxu0 0
    %2437 = vmatpush1.bf16.msra.mxu0 %v2361
    %2438 = vmatprep.subr.bf16.mxu0 0
    %2439 = vmatpush1.bf16.msra.mxu0 %v2362
    %2440 = vmatprep.subr.bf16.mxu0 0
    %2441 = vmatpush1.bf16.msra.mxu0 %v2363
    %2442 = vmatprep.subr.bf16.mxu0 0
    %2443 = vmatpush1.bf16.msra.mxu0 %v2364
    %2444 = vmatprep.subr.bf16.mxu0 0
    %2445 = vmatpush1.bf16.msra.mxu0 %v2365
    %2446 = vmatprep.subr.bf16.mxu0 0
    %2447 = vmatpush1.bf16.msra.mxu0 0
    %2448 = vmatprep.subr.bf16.mxu0 0
    %2449 = vmatpush1.bf16.msra.mxu0 0
    %2450 = vmatprep.subr.bf16.mxu0 0
    %2451 = vmatpush1.bf16.msra.mxu0 0
    %2452 = vmatprep.subr.bf16.mxu0 0
    %2453 = vmatpush1.bf16.msra.mxu0 0
    %2454 = vmatprep.subr.bf16.mxu0 0
    %2455 = vmatpush1.bf16.msra.mxu0 0
    %2456 = vmatprep.subr.bf16.mxu0 0
    %2457 = vmatpush1.bf16.msra.mxu0 0
    %2458 = vmatprep.subr.bf16.mxu0 0
    %2459 = vmatpush1.bf16.msra.mxu0 0
    %2460 = vmatprep.subr.bf16.mxu0 0
    %2461 = vmatpush1.bf16.msra.mxu0 0
    %2462 = vmatprep.mubr.bf16.mxu0 0
    %2463 = vmatmul.mubr.bf16.gmra.mrb[0].mxu0 %v2241
    %v2464 = vpop.f32.mrb[0].mxu0
    %v2465 = vadd.f32 %v2425, %v2464
    %v2466 = vpop.f32.mrb[0].mxu0
    %v2467 = vpop.f32.mrb[0].mxu0
    %v2468 = vpop.f32.mrb[0].mxu0
    %2469 = vdwg.mxu0
    %v2470 = vmax.f32 %v2465, 0.0
    %v2471 = vld [vmem:[#allocation8 + $0xc0] sm:$0xf]
    %v2472 = vld [vmem:[#allocation8 + $0xc4] sm:$0xf]
    %v2473 = vld [vmem:[#allocation8 + $0xc8] sm:$0xf]
    %v2474 = vld [vmem:[#allocation8 + $0xcc] sm:$0xf]
    %v2475 = vld [vmem:[#allocation8 + $0xd0] sm:$0xf]
    %v2476 = vld [vmem:[#allocation8 + $0xd4] sm:$0xf]
    %v2477 = vld [vmem:[#allocation8 + $0xd8] sm:$0xf]
    %v2478 = vld [vmem:[#allocation8 + $0xdc] sm:$0xf]
    %v2479 = vld [vmem:[#allocation8 + $0xe0] sm:$0xf]
    %v2480 = vld [vmem:[#allocation8 + $0xe4] sm:$0xf]
    %v2481 = vld [vmem:[#allocation8 + $0xe8] sm:$0xf]
    %v2482 = vld [vmem:[#allocation8 + $0xec] sm:$0xf]
    %v2483 = vld [vmem:[#allocation8 + $0xf0] sm:$0xf]
    %v2484 = vld [vmem:[#allocation8 + $0xf4] sm:$0xf]
    %v2485 = vld [vmem:[#allocation8 + $0xf8] sm:$0xf]
    %v2486 = vld [vmem:[#allocation8 + $0xfc] sm:$0xf]
    %v2487 = vpack.c.bf16 %v2470, %v2470
    %v2488 = vlaneseq
    %v2489 = vshrl.u32 %v2488, 7
    %v2490 = vsub.s32 4, %v2489
    %v2491 = vrot.slane %v86, %v2490
    %v2508 = vunpack.c.l.b16 %v2471
    %v2509 = vunpack.c.l.b16 %v2472
    %v2510 = vunpack.c.l.b16 %v2473
    %v2511 = vunpack.c.l.b16 %v2474
    %v2512 = vunpack.c.l.b16 %v2475
    %v2513 = vunpack.c.l.b16 %v2476
    %v2514 = vunpack.c.l.b16 %v2477
    %v2515 = vunpack.c.l.b16 %v2478
    %v2516 = vunpack.c.l.b16 %v2479
    %v2517 = vunpack.c.l.b16 %v2480
    %v2518 = vunpack.c.l.b16 %v2481
    %v2519 = vunpack.c.l.b16 %v2482
    %v2520 = vunpack.c.l.b16 %v2483
    %v2521 = vunpack.c.l.b16 %v2484
    %v2522 = vunpack.c.l.b16 %v2485
    %v2523 = vunpack.c.l.b16 %v2486
    %v2524 = vpack.c.b16 %v2509, %v2508
    %v2525 = vpack.c.b16 %v2511, %v2510
    %v2526 = vpack.c.b16 %v2513, %v2512
    %v2527 = vpack.c.b16 %v2515, %v2514
    %v2528 = vpack.c.b16 %v2517, %v2516
    %v2529 = vpack.c.b16 %v2519, %v2518
    %v2530 = vpack.c.b16 %v2521, %v2520
    %v2531 = vpack.c.b16 %v2523, %v2522
    %2540 = vmatprep.subr.bf16.mxu0 0
    %2541 = vmatpush1.bf16.msra.mxu0 %v2524
    %2542 = vmatprep.subr.bf16.mxu0 0
    %2543 = vmatpush1.bf16.msra.mxu0 %v2525
    %2544 = vmatprep.subr.bf16.mxu0 0
    %2545 = vmatpush1.bf16.msra.mxu0 %v2526
    %2546 = vmatprep.subr.bf16.mxu0 0
    %2547 = vmatpush1.bf16.msra.mxu0 %v2527
    %2548 = vmatprep.subr.bf16.mxu0 0
    %2549 = vmatpush1.bf16.msra.mxu0 %v2528
    %2550 = vmatprep.subr.bf16.mxu0 0
    %2551 = vmatpush1.bf16.msra.mxu0 %v2529
    %2552 = vmatprep.subr.bf16.mxu0 0
    %2553 = vmatpush1.bf16.msra.mxu0 %v2530
    %2554 = vmatprep.subr.bf16.mxu0 0
    %2555 = vmatpush1.bf16.msra.mxu0 %v2531
    %2556 = vmatprep.subr.bf16.mxu0 0
    %2557 = vmatpush1.bf16.msra.mxu0 0
    %2558 = vmatprep.subr.bf16.mxu0 0
    %2559 = vmatpush1.bf16.msra.mxu0 0
    %2560 = vmatprep.subr.bf16.mxu0 0
    %2561 = vmatpush1.bf16.msra.mxu0 0
    %2562 = vmatprep.subr.bf16.mxu0 0
    %2563 = vmatpush1.bf16.msra.mxu0 0
    %2564 = vmatprep.subr.bf16.mxu0 0
    %2565 = vmatpush1.bf16.msra.mxu0 0
    %2566 = vmatprep.subr.bf16.mxu0 0
    %2567 = vmatpush1.bf16.msra.mxu0 0
    %2568 = vmatprep.subr.bf16.mxu0 0
    %2569 = vmatpush1.bf16.msra.mxu0 0
    %2570 = vmatprep.subr.bf16.mxu0 0
    %2571 = vmatpush1.bf16.msra.mxu0 0
    %2572 = vmatprep.mubr.bf16.mxu0 0
    %2573 = vmatmul.mubr.bf16.gmra.mrb[0].mxu0 %v2487
    %v2574 = vpop.f32.mrb[0].mxu0
    %v2575 = vadd.f32 %v2491, %v2574
    %v2576 = vpop.f32.mrb[0].mxu0
    %v2577 = vpop.f32.mrb[0].mxu0
    %v2578 = vpop.f32.mrb[0].mxu0
    %2579 = vdwg.mxu0
    %v2580 = vmax.f32 %v2575, 0.0
    %v2581 = vld [vmem:[#allocation5] sm:$0xf]
    %v2582 = vld [vmem:[#allocation8 + $0x100] sm:$0xf]
    %v2583 = vpack.c.bf16 %v2581, %v2581
    %v2584 = vlaneseq
    %v2585 = vshrl.u32 %v2584, 7
    %v2586 = vsub.s32 5, %v2585
    %v2587 = vrot.slane %v86, %v2586
    %vm2588 = vcmask 64512
    %v2590 = vsel %vm2588, %v2583, 0
    %vm2592 = vcmask 1043456
    %v2594 = vsel %vm2592, %v2582, 0
    %2596 = vmatprep.subr.bf16.mxu0 0
    %2597 = vmatpush1.bf16.msra.mxu0 %v2594
    %2598 = vmatprep.subr.bf16.mxu0 0
    %2599 = vmatpush1.bf16.msra.mxu0 0
    %2600 = vmatprep.subr.bf16.mxu0 0
    %2601 = vmatpush1.bf16.msra.mxu0 0
    %2602 = vmatprep.subr.bf16.mxu0 0
    %2603 = vmatpush1.bf16.msra.mxu0 0
    %2604 = vmatprep.subr.bf16.mxu0 0
    %2605 = vmatpush1.bf16.msra.mxu0 0
    %2606 = vmatprep.subr.bf16.mxu0 0
    %2607 = vmatpush1.bf16.msra.mxu0 0
    %2608 = vmatprep.subr.bf16.mxu0 0
    %2609 = vmatpush1.bf16.msra.mxu0 0
    %2610 = vmatprep.subr.bf16.mxu0 0
    %2611 = vmatpush1.bf16.msra.mxu0 0
    %2612 = vmatprep.subr.bf16.mxu0 0
    %2613 = vmatpush1.bf16.msra.mxu0 0
    %2614 = vmatprep.subr.bf16.mxu0 0
    %2615 = vmatpush1.bf16.msra.mxu0 0
    %2616 = vmatprep.subr.bf16.mxu0 0
    %2617 = vmatpush1.bf16.msra.mxu0 0
    %2618 = vmatprep.subr.bf16.mxu0 0
    %2619 = vmatpush1.bf16.msra.mxu0 0
    %2620 = vmatprep.subr.bf16.mxu0 0
    %2621 = vmatpush1.bf16.msra.mxu0 0
    %2622 = vmatprep.subr.bf16.mxu0 0
    %2623 = vmatpush1.bf16.msra.mxu0 0
    %2624 = vmatprep.subr.bf16.mxu0 0
    %2625 = vmatpush1.bf16.msra.mxu0 0
    %2626 = vmatprep.subr.bf16.mxu0 0
    %2627 = vmatpush1.bf16.msra.mxu0 0
    %2628 = vmatprep.mubr.bf16.mxu0 0
    %2629 = vmatmul.mubr.bf16.gmra.mrb[0].mxu0 %v2590
    %v2630 = vpop.f32.mrb[0].mxu0
    %v2631 = vadd.f32 %v2587, %v2630
    %v2632 = vpop.f32.mrb[0].mxu0
    %v2633 = vpop.f32.mrb[0].mxu0
    %v2634 = vpop.f32.mrb[0].mxu0
    %2635 = vdwg.mxu0
    %v2636 = vmax.f32 %v2631, 0.0
    %v2637 = vld [vmem:[#allocation8 + $0x104] sm:$0xf]
    %v2638 = vld [vmem:[#allocation8 + $0x108] sm:$0xf]
    %v2639 = vld [vmem:[#allocation8 + $0x10c] sm:$0xf]
    %v2640 = vld [vmem:[#allocation8 + $0x110] sm:$0xf]
    %v2641 = vld [vmem:[#allocation8 + $0x114] sm:$0xf]
    %v2642 = vld [vmem:[#allocation8 + $0x118] sm:$0xf]
    %v2643 = vld [vmem:[#allocation8 + $0x11c] sm:$0xf]
    %v2644 = vld [vmem:[#allocation8 + $0x120] sm:$0xf]
    %v2645 = vld [vmem:[#allocation8 + $0x124] sm:$0xf]
    %v2646 = vld [vmem:[#allocation8 + $0x128] sm:$0xf]
    %v2647 = vld [vmem:[#allocation8 + $0x12c] sm:$0xf]
    %v2648 = vld [vmem:[#allocation8 + $0x130] sm:$0xf]
    %v2649 = vld [vmem:[#allocation8 + $0x134] sm:$0xf]
    %v2650 = vld [vmem:[#allocation8 + $0x138] sm:$0xf]
    %v2651 = vld [vmem:[#allocation8 + $0x13c] sm:$0xf]
    %v2652 = vld [vmem:[#allocation8 + $0x140] sm:$0xf]
    %v2653 = vpack.c.bf16 %v2636, %v2636
    %v2654 = vlaneseq
    %v2655 = vshrl.u32 %v2654, 7
    %v2656 = vsub.s32 6, %v2655
    %v2657 = vrot.slane %v86, %v2656
    %v2674 = vunpack.c.l.b16 %v2637
    %v2675 = vunpack.c.l.b16 %v2638
    %v2676 = vunpack.c.l.b16 %v2639
    %v2677 = vunpack.c.l.b16 %v2640
    %v2678 = vunpack.c.l.b16 %v2641
    %v2679 = vunpack.c.l.b16 %v2642
    %v2680 = vunpack.c.l.b16 %v2643
    %v2681 = vunpack.c.l.b16 %v2644
    %v2682 = vunpack.c.l.b16 %v2645
    %v2683 = vunpack.c.l.b16 %v2646
    %v2684 = vunpack.c.l.b16 %v2647
    %v2685 = vunpack.c.l.b16 %v2648
    %v2686 = vunpack.c.l.b16 %v2649
    %v2687 = vunpack.c.l.b16 %v2650
    %v2688 = vunpack.c.l.b16 %v2651
    %v2689 = vunpack.c.l.b16 %v2652
    %v2690 = vpack.c.b16 %v2675, %v2674
    %v2691 = vpack.c.b16 %v2677, %v2676
    %v2692 = vpack.c.b16 %v2679, %v2678
    %v2693 = vpack.c.b16 %v2681, %v2680
    %v2694 = vpack.c.b16 %v2683, %v2682
    %v2695 = vpack.c.b16 %v2685, %v2684
    %v2696 = vpack.c.b16 %v2687, %v2686
    %v2697 = vpack.c.b16 %v2689, %v2688
    %2706 = vmatprep.subr.bf16.mxu0 0
    %2707 = vmatpush1.bf16.msra.mxu0 %v2690
    %2708 = vmatprep.subr.bf16.mxu0 0
    %2709 = vmatpush1.bf16.msra.mxu0 %v2691
    %2710 = vmatprep.subr.bf16.mxu0 0
    %2711 = vmatpush1.bf16.msra.mxu0 %v2692
    %2712 = vmatprep.subr.bf16.mxu0 0
    %2713 = vmatpush1.bf16.msra.mxu0 %v2693
    %2714 = vmatprep.subr.bf16.mxu0 0
    %2715 = vmatpush1.bf16.msra.mxu0 %v2694
    %2716 = vmatprep.subr.bf16.mxu0 0
    %2717 = vmatpush1.bf16.msra.mxu0 %v2695
    %2718 = vmatprep.subr.bf16.mxu0 0
    %2719 = vmatpush1.bf16.msra.mxu0 %v2696
    %2720 = vmatprep.subr.bf16.mxu0 0
    %2721 = vmatpush1.bf16.msra.mxu0 %v2697
    %2722 = vmatprep.subr.bf16.mxu0 0
    %2723 = vmatpush1.bf16.msra.mxu0 0
    %2724 = vmatprep.subr.bf16.mxu0 0
    %2725 = vmatpush1.bf16.msra.mxu0 0
    %2726 = vmatprep.subr.bf16.mxu0 0
    %2727 = vmatpush1.bf16.msra.mxu0 0
    %2728 = vmatprep.subr.bf16.mxu0 0
    %2729 = vmatpush1.bf16.msra.mxu0 0
    %2730 = vmatprep.subr.bf16.mxu0 0
    %2731 = vmatpush1.bf16.msra.mxu0 0
    %2732 = vmatprep.subr.bf16.mxu0 0
    %2733 = vmatpush1.bf16.msra.mxu0 0
    %2734 = vmatprep.subr.bf16.mxu0 0
    %2735 = vmatpush1.bf16.msra.mxu0 0
    %2736 = vmatprep.subr.bf16.mxu0 0
    %2737 = vmatpush1.bf16.msra.mxu0 0
    %2738 = vmatprep.mubr.bf16.mxu0 0
    %2739 = vmatmul.mubr.bf16.gmra.mrb[0].mxu0 %v2653
    %v2740 = vpop.f32.mrb[0].mxu0
    %v2741 = vadd.f32 %v2657, %v2740
    %v2742 = vpop.f32.mrb[0].mxu0
    %v2743 = vpop.f32.mrb[0].mxu0
    %v2744 = vpop.f32.mrb[0].mxu0
    %2745 = vdwg.mxu0
    %v2746 = vmax.f32 %v2741, 0.0
    %v2747 = vadd.f32 %v2746, %v2580
    %v2748 = vld [vmem:[#allocation8 + $0x144] sm:$0xf]
    %v2749 = vld [vmem:[#allocation8 + $0x148] sm:$0xf]
    %v2750 = vld [vmem:[#allocation8 + $0x14c] sm:$0xf]
    %v2751 = vld [vmem:[#allocation8 + $0x150] sm:$0xf]
    %v2752 = vld [vmem:[#allocation8 + $0x154] sm:$0xf]
    %v2753 = vld [vmem:[#allocation8 + $0x158] sm:$0xf]
    %v2754 = vld [vmem:[#allocation8 + $0x15c] sm:$0xf]
    %v2755 = vld [vmem:[#allocation8 + $0x160] sm:$0xf]
    %v2756 = vld [vmem:[#allocation8 + $0x164] sm:$0xf]
    %v2757 = vld [vmem:[#allocation8 + $0x168] sm:$0xf]
    %v2758 = vld [vmem:[#allocation8 + $0x16c] sm:$0xf]
    %v2759 = vld [vmem:[#allocation8 + $0x170] sm:$0xf]
    %v2760 = vld [vmem:[#allocation8 + $0x174] sm:$0xf]
    %v2761 = vld [vmem:[#allocation8 + $0x178] sm:$0xf]
    %v2762 = vld [vmem:[#allocation8 + $0x17c] sm:$0xf]
    %v2763 = vld [vmem:[#allocation8 + $0x180] sm:$0xf]
    %v2764 = vpack.c.bf16 %v2747, %v2747
    %v2765 = vlaneseq
    %v2766 = vshrl.u32 %v2765, 7
    %v2767 = vsub.s32 7, %v2766
    %v2768 = vrot.slane %v86, %v2767
    %v2785 = vunpack.c.l.b16 %v2748
    %v2786 = vunpack.c.l.b16 %v2749
    %v2787 = vunpack.c.l.b16 %v2750
    %v2788 = vunpack.c.l.b16 %v2751
    %v2789 = vunpack.c.l.b16 %v2752
    %v2790 = vunpack.c.l.b16 %v2753
    %v2791 = vunpack.c.l.b16 %v2754
    %v2792 = vunpack.c.l.b16 %v2755
    %v2793 = vunpack.c.l.b16 %v2756
    %v2794 = vunpack.c.l.b16 %v2757
    %v2795 = vunpack.c.l.b16 %v2758
    %v2796 = vunpack.c.l.b16 %v2759
    %v2797 = vunpack.c.l.b16 %v2760
    %v2798 = vunpack.c.l.b16 %v2761
    %v2799 = vunpack.c.l.b16 %v2762
    %v2800 = vunpack.c.l.b16 %v2763
    %v2801 = vpack.c.b16 %v2786, %v2785
    %v2802 = vpack.c.b16 %v2788, %v2787
    %v2803 = vpack.c.b16 %v2790, %v2789
    %v2804 = vpack.c.b16 %v2792, %v2791
    %v2805 = vpack.c.b16 %v2794, %v2793
    %v2806 = vpack.c.b16 %v2796, %v2795
    %v2807 = vpack.c.b16 %v2798, %v2797
    %v2808 = vpack.c.b16 %v2800, %v2799
    %2817 = vmatprep.subr.bf16.mxu0 0
    %2818 = vmatpush1.bf16.msra.mxu0 %v2801
    %2819 = vmatprep.subr.bf16.mxu0 0
    %2820 = vmatpush1.bf16.msra.mxu0 %v2802
    %2821 = vmatprep.subr.bf16.mxu0 0
    %2822 = vmatpush1.bf16.msra.mxu0 %v2803
    %2823 = vmatprep.subr.bf16.mxu0 0
    %2824 = vmatpush1.bf16.msra.mxu0 %v2804
    %2825 = vmatprep.subr.bf16.mxu0 0
    %2826 = vmatpush1.bf16.msra.mxu0 %v2805
    %2827 = vmatprep.subr.bf16.mxu0 0
    %2828 = vmatpush1.bf16.msra.mxu0 %v2806
    %2829 = vmatprep.subr.bf16.mxu0 0
    %2830 = vmatpush1.bf16.msra.mxu0 %v2807
    %2831 = vmatprep.subr.bf16.mxu0 0
    %2832 = vmatpush1.bf16.msra.mxu0 %v2808
    %2833 = vmatprep.subr.bf16.mxu0 0
    %2834 = vmatpush1.bf16.msra.mxu0 0
    %2835 = vmatprep.subr.bf16.mxu0 0
    %2836 = vmatpush1.bf16.msra.mxu0 0
    %2837 = vmatprep.subr.bf16.mxu0 0
    %2838 = vmatpush1.bf16.msra.mxu0 0
    %2839 = vmatprep.subr.bf16.mxu0 0
    %2840 = vmatpush1.bf16.msra.mxu0 0
    %2841 = vmatprep.subr.bf16.mxu0 0
    %2842 = vmatpush1.bf16.msra.mxu0 0
    %2843 = vmatprep.subr.bf16.mxu0 0
    %2844 = vmatpush1.bf16.msra.mxu0 0
    %2845 = vmatprep.subr.bf16.mxu0 0
    %2846 = vmatpush1.bf16.msra.mxu0 0
    %2847 = vmatprep.subr.bf16.mxu0 0
    %2848 = vmatpush1.bf16.msra.mxu0 0
    %2849 = vmatprep.mubr.bf16.mxu0 0
    %2850 = vmatmul.mubr.bf16.gmra.mrb[0].mxu0 %v2764
    %v2851 = vpop.f32.mrb[0].mxu0
    %v2852 = vadd.f32 %v2768, %v2851
    %v2853 = vpop.f32.mrb[0].mxu0
    %v2854 = vpop.f32.mrb[0].mxu0
    %v2855 = vpop.f32.mrb[0].mxu0
    %2856 = vdwg.mxu0
    %v2857 = vmax.f32 %v2852, 0.0
    %v2858 = vld [vmem:[#allocation8 + $0x184] sm:$0xf]
    %v2859 = vld [vmem:[#allocation8 + $0x188] sm:$0xf]
    %v2860 = vld [vmem:[#allocation8 + $0x18c] sm:$0xf]
    %v2861 = vld [vmem:[#allocation8 + $0x190] sm:$0xf]
    %v2862 = vld [vmem:[#allocation8 + $0x194] sm:$0xf]
    %v2863 = vld [vmem:[#allocation8 + $0x198] sm:$0xf]
    %v2864 = vld [vmem:[#allocation8 + $0x19c] sm:$0xf]
    %v2865 = vld [vmem:[#allocation8 + $0x1a0] sm:$0xf]
    %v2866 = vld [vmem:[#allocation8 + $0x1a4] sm:$0xf]
    %v2867 = vld [vmem:[#allocation8 + $0x1a8] sm:$0xf]
    %v2868 = vld [vmem:[#allocation8 + $0x1ac] sm:$0xf]
    %v2869 = vld [vmem:[#allocation8 + $0x1b0] sm:$0xf]
    %v2870 = vld [vmem:[#allocation8 + $0x1b4] sm:$0xf]
    %v2871 = vld [vmem:[#allocation8 + $0x1b8] sm:$0xf]
    %v2872 = vld [vmem:[#allocation8 + $0x1bc] sm:$0xf]
    %v2873 = vld [vmem:[#allocation8 + $0x1c0] sm:$0xf]
    %v2874 = vpack.c.bf16 %v2857, %v2857
    %v2875 = vlaneseq
    %v2876 = vshrl.u32 %v2875, 7
    %v2877 = vsub.s32 0, %v2876
    %v2878 = vrot.slane %v87, %v2877
    %v2895 = vunpack.c.l.b16 %v2858
    %v2896 = vunpack.c.l.b16 %v2859
    %v2897 = vunpack.c.l.b16 %v2860
    %v2898 = vunpack.c.l.b16 %v2861
    %v2899 = vunpack.c.l.b16 %v2862
    %v2900 = vunpack.c.l.b16 %v2863
    %v2901 = vunpack.c.l.b16 %v2864
    %v2902 = vunpack.c.l.b16 %v2865
    %v2903 = vunpack.c.l.b16 %v2866
    %v2904 = vunpack.c.l.b16 %v2867
    %v2905 = vunpack.c.l.b16 %v2868
    %v2906 = vunpack.c.l.b16 %v2869
    %v2907 = vunpack.c.l.b16 %v2870
    %v2908 = vunpack.c.l.b16 %v2871
    %v2909 = vunpack.c.l.b16 %v2872
    %v2910 = vunpack.c.l.b16 %v2873
    %v2911 = vpack.c.b16 %v2896, %v2895
    %v2912 = vpack.c.b16 %v2898, %v2897
    %v2913 = vpack.c.b16 %v2900, %v2899
    %v2914 = vpack.c.b16 %v2902, %v2901
    %v2915 = vpack.c.b16 %v2904, %v2903
    %v2916 = vpack.c.b16 %v2906, %v2905
    %v2917 = vpack.c.b16 %v2908, %v2907
    %v2918 = vpack.c.b16 %v2910, %v2909
    %2927 = vmatprep.subr.bf16.mxu0 0
    %2928 = vmatpush1.bf16.msra.mxu0 %v2911
    %2929 = vmatprep.subr.bf16.mxu0 0
    %2930 = vmatpush1.bf16.msra.mxu0 %v2912
    %2931 = vmatprep.subr.bf16.mxu0 0
    %2932 = vmatpush1.bf16.msra.mxu0 %v2913
    %2933 = vmatprep.subr.bf16.mxu0 0
    %2934 = vmatpush1.bf16.msra.mxu0 %v2914
    %2935 = vmatprep.subr.bf16.mxu0 0
    %2936 = vmatpush1.bf16.msra.mxu0 %v2915
    %2937 = vmatprep.subr.bf16.mxu0 0
    %2938 = vmatpush1.bf16.msra.mxu0 %v2916
    %2939 = vmatprep.subr.bf16.mxu0 0
    %2940 = vmatpush1.bf16.msra.mxu0 %v2917
    %2941 = vmatprep.subr.bf16.mxu0 0
    %2942 = vmatpush1.bf16.msra.mxu0 %v2918
    %2943 = vmatprep.subr.bf16.mxu0 0
    %2944 = vmatpush1.bf16.msra.mxu0 0
    %2945 = vmatprep.subr.bf16.mxu0 0
    %2946 = vmatpush1.bf16.msra.mxu0 0
    %2947 = vmatprep.subr.bf16.mxu0 0
    %2948 = vmatpush1.bf16.msra.mxu0 0
    %2949 = vmatprep.subr.bf16.mxu0 0
    %2950 = vmatpush1.bf16.msra.mxu0 0
    %2951 = vmatprep.subr.bf16.mxu0 0
    %2952 = vmatpush1.bf16.msra.mxu0 0
    %2953 = vmatprep.subr.bf16.mxu0 0
    %2954 = vmatpush1.bf16.msra.mxu0 0
    %2955 = vmatprep.subr.bf16.mxu0 0
    %2956 = vmatpush1.bf16.msra.mxu0 0
    %2957 = vmatprep.subr.bf16.mxu0 0
    %2958 = vmatpush1.bf16.msra.mxu0 0
    %2959 = vmatprep.mubr.bf16.mxu0 0
    %2960 = vmatmul.mubr.bf16.gmra.mrb[0].mxu0 %v2874
    %v2961 = vpop.f32.mrb[0].mxu0
    %v2962 = vadd.f32 %v2878, %v2961
    %v2963 = vpop.f32.mrb[0].mxu0
    %v2964 = vpop.f32.mrb[0].mxu0
    %v2965 = vpop.f32.mrb[0].mxu0
    %2966 = vdwg.mxu0
    %v2967 = vmax.f32 %v2962, 0.0
    %v2968 = vld [vmem:[#allocation8 + $0x1c4] sm:$0xf]
    %v2969 = vld [vmem:[#allocation8 + $0x1c8] sm:$0xf]
    %v2970 = vld [vmem:[#allocation8 + $0x1cc] sm:$0xf]
    %v2971 = vld [vmem:[#allocation8 + $0x1d0] sm:$0xf]
    %v2972 = vld [vmem:[#allocation8 + $0x1d4] sm:$0xf]
    %v2973 = vld [vmem:[#allocation8 + $0x1d8] sm:$0xf]
    %v2974 = vld [vmem:[#allocation8 + $0x1dc] sm:$0xf]
    %v2975 = vld [vmem:[#allocation8 + $0x1e0] sm:$0xf]
    %v2976 = vld [vmem:[#allocation8 + $0x1e4] sm:$0xf]
    %v2977 = vld [vmem:[#allocation8 + $0x1e8] sm:$0xf]
    %v2978 = vld [vmem:[#allocation8 + $0x1ec] sm:$0xf]
    %v2979 = vld [vmem:[#allocation8 + $0x1f0] sm:$0xf]
    %v2980 = vld [vmem:[#allocation8 + $0x1f4] sm:$0xf]
    %v2981 = vld [vmem:[#allocation8 + $0x1f8] sm:$0xf]
    %v2982 = vld [vmem:[#allocation8 + $0x1fc] sm:$0xf]
    %v2983 = vld [vmem:[#allocation8 + $0x200] sm:$0xf]
    %v2984 = vpack.c.bf16 %v2967, %v2967
    %v2985 = vlaneseq
    %v2986 = vshrl.u32 %v2985, 7
    %v2987 = vsub.s32 1, %v2986
    %v2988 = vrot.slane %v87, %v2987
    %v3005 = vunpack.c.l.b16 %v2968
    %v3006 = vunpack.c.l.b16 %v2969
    %v3007 = vunpack.c.l.b16 %v2970
    %v3008 = vunpack.c.l.b16 %v2971
    %v3009 = vunpack.c.l.b16 %v2972
    %v3010 = vunpack.c.l.b16 %v2973
    %v3011 = vunpack.c.l.b16 %v2974
    %v3012 = vunpack.c.l.b16 %v2975
    %v3013 = vunpack.c.l.b16 %v2976
    %v3014 = vunpack.c.l.b16 %v2977
    %v3015 = vunpack.c.l.b16 %v2978
    %v3016 = vunpack.c.l.b16 %v2979
    %v3017 = vunpack.c.l.b16 %v2980
    %v3018 = vunpack.c.l.b16 %v2981
    %v3019 = vunpack.c.l.b16 %v2982
    %v3020 = vunpack.c.l.b16 %v2983
    %v3021 = vpack.c.b16 %v3006, %v3005
    %v3022 = vpack.c.b16 %v3008, %v3007
    %v3023 = vpack.c.b16 %v3010, %v3009
    %v3024 = vpack.c.b16 %v3012, %v3011
    %v3025 = vpack.c.b16 %v3014, %v3013
    %v3026 = vpack.c.b16 %v3016, %v3015
    %v3027 = vpack.c.b16 %v3018, %v3017
    %v3028 = vpack.c.b16 %v3020, %v3019
    %3037 = vmatprep.subr.bf16.mxu0 0
    %3038 = vmatpush1.bf16.msra.mxu0 %v3021
    %3039 = vmatprep.subr.bf16.mxu0 0
    %3040 = vmatpush1.bf16.msra.mxu0 %v3022
    %3041 = vmatprep.subr.bf16.mxu0 0
    %3042 = vmatpush1.bf16.msra.mxu0 %v3023
    %3043 = vmatprep.subr.bf16.mxu0 0
    %3044 = vmatpush1.bf16.msra.mxu0 %v3024
    %3045 = vmatprep.subr.bf16.mxu0 0
    %3046 = vmatpush1.bf16.msra.mxu0 %v3025
    %3047 = vmatprep.subr.bf16.mxu0 0
    %3048 = vmatpush1.bf16.msra.mxu0 %v3026
    %3049 = vmatprep.subr.bf16.mxu0 0
    %3050 = vmatpush1.bf16.msra.mxu0 %v3027
    %3051 = vmatprep.subr.bf16.mxu0 0
    %3052 = vmatpush1.bf16.msra.mxu0 %v3028
    %3053 = vmatprep.subr.bf16.mxu0 0
    %3054 = vmatpush1.bf16.msra.mxu0 0
    %3055 = vmatprep.subr.bf16.mxu0 0
    %3056 = vmatpush1.bf16.msra.mxu0 0
    %3057 = vmatprep.subr.bf16.mxu0 0
    %3058 = vmatpush1.bf16.msra.mxu0 0
    %3059 = vmatprep.subr.bf16.mxu0 0
    %3060 = vmatpush1.bf16.msra.mxu0 0
    %3061 = vmatprep.subr.bf16.mxu0 0
    %3062 = vmatpush1.bf16.msra.mxu0 0
    %3063 = vmatprep.subr.bf16.mxu0 0
    %3064 = vmatpush1.bf16.msra.mxu0 0
    %3065 = vmatprep.subr.bf16.mxu0 0
    %3066 = vmatpush1.bf16.msra.mxu0 0
    %3067 = vmatprep.subr.bf16.mxu0 0
    %3068 = vmatpush1.bf16.msra.mxu0 0
    %3069 = vmatprep.mubr.bf16.mxu0 0
    %3070 = vmatmul.mubr.bf16.gmra.mrb[0].mxu0 %v2984
    %v3071 = vpop.f32.mrb[0].mxu0
    %v3072 = vadd.f32 %v2988, %v3071
    %v3073 = vpop.f32.mrb[0].mxu0
    %v3074 = vpop.f32.mrb[0].mxu0
    %v3075 = vpop.f32.mrb[0].mxu0
    %3076 = vdwg.mxu0
    %3077 = vst [vmem:[#allocation11] sm:$0xf] %v3072
    // Predicated region
    $region42: #{tpu_custom_call.1} parent=1 // pred_check
      _
    $region43: #{tpu_custom_call.1} parent=1 // pred_check_branch
      %3079 = sbr.rel (0) target = $region45
    $region44: #{tpu_custom_call.1} parent=1 // pred_region
      %s3081 = ssub.s32 64, 64
      %3082 = vsyncadd [#allocation4], %s3081
      %s3084 = sshll.u32 [#allocation11], 4
      %s3085 = int_to_ptr.vmem [resolvable:$true] %s3084
      %3087 = dma.vmem_to_hbm [thread:$0]  %s3085, 64, %s5, [#allocation4]
    $region45: #{tpu_custom_call.1} parent=1 // pred_fallthru
      _
    // Predicated region
    $region46: #{tpu_custom_call.1} parent=1 // pred_check
      _
    $region47: #{tpu_custom_call.1} parent=1 // pred_check_branch
      %3089 = sbr.rel (0) target = $region49
    $region48: #{tpu_custom_call.1} parent=1 // pred_region
      %3090 = dma.done [#allocation4], 64
    $region49: #{tpu_custom_call.1} parent=1 // pred_fallthru
      _
    %3091 = vsyncpa [#allocation3], 1
    %3092 = vsyncpa [#allocation6], 1
    %3093 = vsyncpa [#allocation9], 1
    %3094 = vsyncpa [#allocation4], 1

// kernel: tpu_custom_call.1
$region0: #{tpu_custom_call.1}
  #allocation0 [shape = 'u32[]', space=smem, size = 0x4, offset = 0x4, fixed_abs, tag = 'smem constant byte address 0x4 - core index']
  #allocation1 [shape = 'u32[144,128]{1,0:T(1,128)}', space=vmem, size = 0x12000, scoped, tag = 'internal scratch']
  %s0 = inlined_call_operand.hbm [shape: f32[4,3072], index: 0, kind: input, shape index: {}]
  %s1 = inlined_call_operand.hbm [shape: f32[4,8], index: 1, kind: input, shape index: {}]
  %s2 = inlined_call_operand.hbm [shape: bf16[1024,384], index: 2, kind: input, shape index: {}]
  %s3 = inlined_call_operand.hbm [shape: bf16[1032,128], index: 3, kind: input, shape index: {}]
  %s4 = inlined_call_operand.hbm [shape: f32[16,128], index: 4, kind: input, shape index: {}]
  %s5 = inlined_call_operand.hbm [shape: f32[4,128], index: 5, kind: output, shape index: {}]
  %s6 = sld [smem:[#allocation0]]
  $region50: #{tpu_custom_call.1} parent=0
    _
  %s8 = ssub.s32 1, %s6
  %s9 = scalar_select 0, %s8, %s6
  $region1: #{tpu_custom_call.1} parent=0
    #allocation2 [shape = 'u8[49152]{0}', space=vmem, size = 0xc000, scoped, tag = 'input window, operand 0, single buffered']
    #allocation3 [shape = 's32[1]{0}', space=sflag, size = 0x4, scoped, tag = 'scoped memory for tpu_custom_call.1']
    #allocation4 [shape = 's32[1]{0}', space=sflag, size = 0x4, scoped, tag = 'scoped memory for tpu_custom_call.1']
    #allocation5 [shape = 'u8[2048]{0}', space=vmem, size = 0x800, scoped, tag = 'input window, operand 1, single buffered']
    #allocation6 [shape = 's32[1]{0}', space=sflag, size = 0x4, scoped, tag = 'scoped memory for tpu_custom_call.1']
    #allocation7 [shape = 'u8[786432]{0}', space=vmem, size = 0xc0000, scoped, tag = 'input window, operand 2, single buffered']
    #allocation8 [shape = 'u8[264192]{0}', space=vmem, size = 0x40800, scoped, tag = 'input window, operand 3, single buffered']
    #allocation9 [shape = 's32[1]{0}', space=sflag, size = 0x4, scoped, tag = 'scoped memory for tpu_custom_call.1']
    #allocation10 [shape = 'u8[8192]{0}', space=vmem, size = 0x2000, scoped, tag = 'input window, operand 4, single buffered']
    #allocation11 [shape = 'u8[2048]{0}', space=vmem, size = 0x800, scoped, tag = 'output window, operand 0, single buffered']
    %10 = vsyncpa [#allocation3], 0
    %11 = vsyncpa [#allocation6], 0
    %12 = vsyncpa [#allocation9], 0
    %13 = vsyncpa [#allocation4], 0
    // Predicated region
    $region2: #{tpu_custom_call.1} parent=1 // pred_check
      _
    $region3: #{tpu_custom_call.1} parent=1 // pred_check_branch
      %15 = sbr.rel (0) target = $region5
    $region4: #{tpu_custom_call.1} parent=1 // pred_region
      %s17 = ssub.s32 1536, 1536
      %18 = vsyncadd [#allocation3], %s17
      %s20 = sshll.u32 [#allocation2], 4
      %s21 = int_to_ptr.vmem [resolvable:$true] %s20
      %23 = dma.hbm_to_vmem [thread:$0]  %s0, 1536, %s21, [#allocation3]
    $region5: #{tpu_custom_call.1} parent=1 // pred_fallthru
      _
    // Predicated region
    $region6: #{tpu_custom_call.1} parent=1 // pred_check
      _
    $region7: #{tpu_custom_call.1} parent=1 // pred_check_branch
      %25 = sbr.rel (0) target = $region9
    $region8: #{tpu_custom_call.1} parent=1 // pred_region
      %s27 = ssub.s32 64, 64
      %28 = vsyncadd [#allocation6], %s27
      %s30 = sshll.u32 [#allocation5], 4
      %s31 = int_to_ptr.vmem [resolvable:$true] %s30
      %33 = dma.hbm_to_vmem [thread:$0]  %s1, 64, %s31, [#allocation6]
    $region9: #{tpu_custom_call.1} parent=1 // pred_fallthru
      _
    // Predicated region
    $region10: #{tpu_custom_call.1} parent=1 // pred_check
      _
    $region11: #{tpu_custom_call.1} parent=1 // pred_check_branch
      %35 = sbr.rel (0) target = $region13
    $region12: #{tpu_custom_call.1} parent=1 // pred_region
      %s37 = ssub.s32 24576, 24576
      %38 = vsyncadd [#allocation6], %s37
      %s39 = sshll.u32 [#allocation7], 4
      %s40 = int_to_ptr.vmem [resolvable:$true] %s39
      %45 = dma.hbm_to_vmem [thread:$0]  %s2, 24576, %s40, [#allocation6], 192, 192, 12
    $region13: #{tpu_custom_call.1} parent=1 // pred_fallthru
      _
    // Predicated region
    $region14: #{tpu_custom_call.1} parent=1 // pred_check
      _
    $region15: #{tpu_custom_call.1} parent=1 // pred_check_branch
      %47 = sbr.rel (0) target = $region17
    $region16: #{tpu_custom_call.1} parent=1 // pred_region
      %s49 = ssub.s32 8256, 8256
      %50 = vsyncadd [#allocation9], %s49
      %s51 = sshll.u32 [#allocation8], 4
      %s52 = int_to_ptr.vmem [resolvable:$true] %s51
      %57 = dma.hbm_to_vmem [thread:$0]  %s3, 8256, %s52, [#allocation9], 64, 64, 4
    $region17: #{tpu_custom_call.1} parent=1 // pred_fallthru
      _
    // Predicated region
    $region18: #{tpu_custom_call.1} parent=1 // pred_check
      _
    $region19: #{tpu_custom_call.1} parent=1 // pred_check_branch
      %59 = sbr.rel (0) target = $region21
    $region20: #{tpu_custom_call.1} parent=1 // pred_region
      %s61 = ssub.s32 256, 256
      %62 = vsyncadd [#allocation9], %s61
      %s63 = sshll.u32 [#allocation10], 4
      %s64 = int_to_ptr.vmem [resolvable:$true] %s63
      %69 = dma.hbm_to_vmem [thread:$0]  %s4, 256, %s64, [#allocation9], 128, 128, 8
    $region21: #{tpu_custom_call.1} parent=1 // pred_fallthru
      _
    // Predicated region
    $region22: #{tpu_custom_call.1} parent=1 // pred_check
      _
    $region23: #{tpu_custom_call.1} parent=1 // pred_check_branch
      %71 = sbr.rel (0) target = $region25
    $region24: #{tpu_custom_call.1} parent=1 // pred_region
      %72 = dma.done [#allocation3], 1536
    $region25: #{tpu_custom_call.1} parent=1 // pred_fallthru
      _
    // Predicated region
    $region26: #{tpu_custom_call.1} parent=1 // pred_check
      _
    $region27: #{tpu_custom_call.1} parent=1 // pred_check_branch
      %74 = sbr.rel (0) target = $region29
    $region28: #{tpu_custom_call.1} parent=1 // pred_region
      %75 = dma.done [#allocation6], 64
    $region29: #{tpu_custom_call.1} parent=1 // pred_fallthru
      _
    // Predicated region
    $region30: #{tpu_custom_call.1} parent=1 // pred_check
      _
    $region31: #{tpu_custom_call.1} parent=1 // pred_check_branch
      %77 = sbr.rel (0) target = $region33
    $region32: #{tpu_custom_call.1} parent=1 // pred_region
      %78 = dma.done [#allocation6], 24576
    $region33: #{tpu_custom_call.1} parent=1 // pred_fallthru
      _
    // Predicated region
    $region34: #{tpu_custom_call.1} parent=1 // pred_check
      _
    $region35: #{tpu_custom_call.1} parent=1 // pred_check_branch
      %80 = sbr.rel (0) target = $region37
    $region36: #{tpu_custom_call.1} parent=1 // pred_region
      %81 = dma.done [#allocation9], 8256
    $region37: #{tpu_custom_call.1} parent=1 // pred_fallthru
      _
    // Predicated region
    $region38: #{tpu_custom_call.1} parent=1 // pred_check
      _
    $region39: #{tpu_custom_call.1} parent=1 // pred_check_branch
      %83 = sbr.rel (0) target = $region41
    $region40: #{tpu_custom_call.1} parent=1 // pred_region
      %84 = dma.done [#allocation9], 256
    $region41: #{tpu_custom_call.1} parent=1 // pred_fallthru
      _
    %v86 = vld [vmem:[#allocation10] sm:$0xff]
    %v87 = vld [vmem:[#allocation10 + $0x8] sm:$0xff]
    %v88 = vld [vmem:[#allocation2] sm:$0xff]
    %v89 = vld [vmem:[#allocation2 + $0x8] sm:$0xff]
    %v90 = vld [vmem:[#allocation2 + $0x10] sm:$0xff]
    %v91 = vld [vmem:[#allocation2 + $0x18] sm:$0xff]
    %v92 = vld [vmem:[#allocation7] sm:$0xf]
    %v93 = vld [vmem:[#allocation7 + $0xc] sm:$0xf]
    %v94 = vld [vmem:[#allocation7 + $0x18] sm:$0xf]
    %v95 = vld [vmem:[#allocation7 + $0x24] sm:$0xf]
    %v96 = vld [vmem:[#allocation7 + $0x30] sm:$0xf]
    %v97 = vld [vmem:[#allocation7 + $0x3c] sm:$0xf]
    %v98 = vld [vmem:[#allocation7 + $0x48] sm:$0xf]
    %v99 = vld [vmem:[#allocation7 + $0x54] sm:$0xf]
    %v100 = vld [vmem:[#allocation7 + $0x60] sm:$0xf]
    %v101 = vld [vmem:[#allocation7 + $0x6c] sm:$0xf]
    %v102 = vld [vmem:[#allocation7 + $0x78] sm:$0xf]
    %v103 = vld [vmem:[#allocation7 + $0x84] sm:$0xf]
    %v104 = vld [vmem:[#allocation7 + $0x90] sm:$0xf]
    %v105 = vld [vmem:[#allocation7 + $0x9c] sm:$0xf]
    %v106 = vld [vmem:[#allocation7 + $0xa8] sm:$0xf]
    %v107 = vld [vmem:[#allocation7 + $0xb4] sm:$0xf]
    %v108 = vld [vmem:[#allocation7 + $0xc0] sm:$0xf]
    %v109 = vld [vmem:[#allocation7 + $0xcc] sm:$0xf]
    %v110 = vld [vmem:[#allocation7 + $0xd8] sm:$0xf]
    %v111 = vld [vmem:[#allocation7 + $0xe4] sm:$0xf]
    %v112 = vld [vmem:[#allocation7 + $0xf0] sm:$0xf]
    %v113 = vld [vmem:[#allocation7 + $0xfc] sm:$0xf]
    %v114 = vld [vmem:[#allocation7 + $0x108] sm:$0xf]
    %v115 = vld [vmem:[#allocation7 + $0x114] sm:$0xf]
    %v116 = vld [vmem:[#allocation7 + $0x120] sm:$0xf]
    %v117 = vld [vmem:[#allocation7 + $0x12c] sm:$0xf]
    %v118 = vld [vmem:[#allocation7 + $0x138] sm:$0xf]
    %v119 = vld [vmem:[#allocation7 + $0x144] sm:$0xf]
    %v120 = vld [vmem:[#allocation7 + $0x150] sm:$0xf]
    %v121 = vld [vmem:[#allocation7 + $0x15c] sm:$0xf]
    %v122 = vld [vmem:[#allocation7 + $0x168] sm:$0xf]
    %v123 = vld [vmem:[#allocation7 + $0x174] sm:$0xf]
    %v124 = vld [vmem:[#allocation7 + $0x180] sm:$0xf]
    %v125 = vld [vmem:[#allocation7 + $0x18c] sm:$0xf]
    %v126 = vld [vmem:[#allocation7 + $0x198] sm:$0xf]
    %v127 = vld [vmem:[#allocation7 + $0x1a4] sm:$0xf]
    %v128 = vld [vmem:[#allocation7 + $0x1b0] sm:$0xf]
    %v129 = vld [vmem:[#allocation7 + $0x1bc] sm:$0xf]
    %v130 = vld [vmem:[#allocation7 + $0x1c8] sm:$0xf]
    %v131 = vld [vmem:[#allocation7 + $0x1d4] sm:$0xf]
    %v132 = vld [vmem:[#allocation7 + $0x1e0] sm:$0xf]
    %v133 = vld [vmem:[#allocation7 + $0x1ec] sm:$0xf]
    %v134 = vld [vmem:[#allocation7 + $0x1f8] sm:$0xf]
    %v135 = vld [vmem:[#allocation7 + $0x204] sm:$0xf]
    %v136 = vld [vmem:[#allocation7 + $0x210] sm:$0xf]
    %v137 = vld [vmem:[#allocation7 + $0x21c] sm:$0xf]
    %v138 = vld [vmem:[#allocation7 + $0x228] sm:$0xf]
    %v139 = vld [vmem:[#allocation7 + $0x234] sm:$0xf]
    %v140 = vld [vmem:[#allocation7 + $0x240] sm:$0xf]
    %v141 = vld [vmem:[#allocation7 + $0x24c] sm:$0xf]
    %v142 = vld [vmem:[#allocation7 + $0x258] sm:$0xf]
    %v143 = vld [vmem:[#allocation7 + $0x264] sm:$0xf]
    %v144 = vld [vmem:[#allocation7 + $0x270] sm:$0xf]
    %v145 = vld [vmem:[#allocation7 + $0x27c] sm:$0xf]
    %v146 = vld [vmem:[#allocation7 + $0x288] sm:$0xf]
    %v147 = vld [vmem:[#allocation7 + $0x294] sm:$0xf]
    %v148 = vld [vmem:[#allocation7 + $0x2a0] sm:$0xf]
    %v149 = vld [vmem:[#allocation7 + $0x2ac] sm:$0xf]
    %v150 = vld [vmem:[#allocation7 + $0x2b8] sm:$0xf]
    %v151 = vld [vmem:[#allocation7 + $0x2c4] sm:$0xf]
    %v152 = vld [vmem:[#allocation7 + $0x2d0] sm:$0xf]
    %v153 = vld [vmem:[#allocation7 + $0x2dc] sm:$0xf]
    %v154 = vld [vmem:[#allocation7 + $0x2e8] sm:$0xf]
    %v155 = vld [vmem:[#allocation7 + $0x2f4] sm:$0xf]
    %v156 = vld [vmem:[#allocation7 + $0x300] sm:$0xf]
    %v157 = vld [vmem:[#allocation7 + $0x30c] sm:$0xf]
    %v158 = vld [vmem:[#allocation7 + $0x318] sm:$0xf]
    %v159 = vld [vmem:[#allocation7 + $0x324] sm:$0xf]
    %v160 = vld [vmem:[#allocation7 + $0x330] sm:$0xf]
    %v161 = vld [vmem:[#allocation7 + $0x33c] sm:$0xf]
    %v162 = vld [vmem:[#allocation7 + $0x348] sm:$0xf]
    %v163 = vld [vmem:[#allocation7 + $0x354] sm:$0xf]
    %v164 = vld [vmem:[#allocation7 + $0x360] sm:$0xf]
    %v165 = vld [vmem:[#allocation7 + $0x36c] sm:$0xf]
    %v166 = vld [vmem:[#allocation7 + $0x378] sm:$0xf]
    %v167 = vld [vmem:[#allocation7 + $0x384] sm:$0xf]
    %v168 = vld [vmem:[#allocation7 + $0x390] sm:$0xf]
    %v169 = vld [vmem:[#allocation7 + $0x39c] sm:$0xf]
    %v170 = vld [vmem:[#allocation7 + $0x3a8] sm:$0xf]
    %v171 = vld [vmem:[#allocation7 + $0x3b4] sm:$0xf]
    %v172 = vld [vmem:[#allocation7 + $0x3c0] sm:$0xf]
    %v173 = vld [vmem:[#allocation7 + $0x3cc] sm:$0xf]
    %v174 = vld [vmem:[#allocation7 + $0x3d8] sm:$0xf]
    %v175 = vld [vmem:[#allocation7 + $0x3e4] sm:$0xf]
    %v176 = vld [vmem:[#allocation7 + $0x3f0] sm:$0xf]
    %v177 = vld [vmem:[#allocation7 + $0x3fc] sm:$0xf]
    %v178 = vld [vmem:[#allocation7 + $0x408] sm:$0xf]
    %v179 = vld [vmem:[#allocation7 + $0x414] sm:$0xf]
    %v180 = vld [vmem:[#allocation7 + $0x420] sm:$0xf]
    %v181 = vld [vmem:[#allocation7 + $0x42c] sm:$0xf]
    %v182 = vld [vmem:[#allocation7 + $0x438] sm:$0xf]
    %v183 = vld [vmem:[#allocation7 + $0x444] sm:$0xf]
    %v184 = vld [vmem:[#allocation7 + $0x450] sm:$0xf]
    %v185 = vld [vmem:[#allocation7 + $0x45c] sm:$0xf]
    %v186 = vld [vmem:[#allocation7 + $0x468] sm:$0xf]
    %v187 = vld [vmem:[#allocation7 + $0x474] sm:$0xf]
    %v188 = vld [vmem:[#allocation7 + $0x480] sm:$0xf]
    %v189 = vld [vmem:[#allocation7 + $0x48c] sm:$0xf]
    %v190 = vld [vmem:[#allocation7 + $0x498] sm:$0xf]
    %v191 = vld [vmem:[#allocation7 + $0x4a4] sm:$0xf]
    %v192 = vld [vmem:[#allocation7 + $0x4b0] sm:$0xf]
    %v193 = vld [vmem:[#allocation7 + $0x4bc] sm:$0xf]
    %v194 = vld [vmem:[#allocation7 + $0x4c8] sm:$0xf]
    %v195 = vld [vmem:[#allocation7 + $0x4d4] sm:$0xf]
    %v196 = vld [vmem:[#allocation7 + $0x4e0] sm:$0xf]
    %v197 = vld [vmem:[#allocation7 + $0x4ec] sm:$0xf]
    %v198 = vld [vmem:[#allocation7 + $0x4f8] sm:$0xf]
    %v199 = vld [vmem:[#allocation7 + $0x504] sm:$0xf]
    %v200 = vld [vmem:[#allocation7 + $0x510] sm:$0xf]
    %v201 = vld [vmem:[#allocation7 + $0x51c] sm:$0xf]
    %v202 = vld [vmem:[#allocation7 + $0x528] sm:$0xf]
    %v203 = vld [vmem:[#allocation7 + $0x534] sm:$0xf]
    %v204 = vld [vmem:[#allocation7 + $0x540] sm:$0xf]
    %v205 = vld [vmem:[#allocation7 + $0x54c] sm:$0xf]
    %v206 = vld [vmem:[#allocation7 + $0x558] sm:$0xf]
    %v207 = vld [vmem:[#allocation7 + $0x564] sm:$0xf]
    %v208 = vld [vmem:[#allocation7 + $0x570] sm:$0xf]
    %v209 = vld [vmem:[#allocation7 + $0x57c] sm:$0xf]
    %v210 = vld [vmem:[#allocation7 + $0x588] sm:$0xf]
    %v211 = vld [vmem:[#allocation7 + $0x594] sm:$0xf]
    %v212 = vld [vmem:[#allocation7 + $0x5a0] sm:$0xf]
    %v213 = vld [vmem:[#allocation7 + $0x5ac] sm:$0xf]
    %v214 = vld [vmem:[#allocation7 + $0x5b8] sm:$0xf]
    %v215 = vld [vmem:[#allocation7 + $0x5c4] sm:$0xf]
    %v216 = vld [vmem:[#allocation7 + $0x5d0] sm:$0xf]
    %v217 = vld [vmem:[#allocation7 + $0x5dc] sm:$0xf]
    %v218 = vld [vmem:[#allocation7 + $0x5e8] sm:$0xf]
    %v219 = vld [vmem:[#allocation7 + $0x5f4] sm:$0xf]
    %v224 = vcombine.high %v88, %v88
    %v225 = vcombine.high %v89, %v89
    %v226 = vcombine.high %v90, %v90
    %v227 = vcombine.high %v91, %v91
    %v232 = vpack.c.bf16 %v88, %v88
    %v233 = vpack.c.bf16 %v224, %v224
    %v234 = vpack.c.bf16 %v89, %v89
    %v235 = vpack.c.bf16 %v225, %v225
    %v236 = vpack.c.bf16 %v90, %v90
    %v237 = vpack.c.bf16 %v226, %v226
    %v238 = vpack.c.bf16 %v91, %v91
    %v239 = vpack.c.bf16 %v227, %v227
    %v240 = vlaneseq
    %v241 = vshrl.u32 %v240, 7
    %v242 = vsub.s32 0, %v241
    %v243 = vrot.slane %v86, %v242
    %v372 = vunpack.c.l.b16 %v92
    %v373 = vunpack.c.l.b16 %v93
    %v374 = vunpack.c.l.b16 %v94
    %v375 = vunpack.c.l.b16 %v95
    %v376 = vunpack.c.l.b16 %v96
    %v377 = vunpack.c.l.b16 %v97
    %v378 = vunpack.c.l.b16 %v98
    %v379 = vunpack.c.l.b16 %v99
    %v380 = vunpack.c.l.b16 %v100
    %v381 = vunpack.c.l.b16 %v101
    %v382 = vunpack.c.l.b16 %v102
    %v383 = vunpack.c.l.b16 %v103
    %v384 = vunpack.c.l.b16 %v104
    %v385 = vunpack.c.l.b16 %v105
    %v386 = vunpack.c.l.b16 %v106
    %v387 = vunpack.c.l.b16 %v107
    %v388 = vunpack.c.l.b16 %v108
    %v389 = vunpack.c.l.b16 %v109
    %v390 = vunpack.c.l.b16 %v110
    %v391 = vunpack.c.l.b16 %v111
    %v392 = vunpack.c.l.b16 %v112
    %v393 = vunpack.c.l.b16 %v113
    %v394 = vunpack.c.l.b16 %v114
    %v395 = vunpack.c.l.b16 %v115
    %v396 = vunpack.c.l.b16 %v116
    %v397 = vunpack.c.l.b16 %v117
    %v398 = vunpack.c.l.b16 %v118
    %v399 = vunpack.c.l.b16 %v119
    %v400 = vunpack.c.l.b16 %v120
    %v401 = vunpack.c.l.b16 %v121
    %v402 = vunpack.c.l.b16 %v122
    %v403 = vunpack.c.l.b16 %v123
    %v404 = vunpack.c.l.b16 %v124
    %v405 = vunpack.c.l.b16 %v125
    %v406 = vunpack.c.l.b16 %v126
    %v407 = vunpack.c.l.b16 %v127
    %v408 = vunpack.c.l.b16 %v128
    %v409 = vunpack.c.l.b16 %v129
    %v410 = vunpack.c.l.b16 %v130
    %v411 = vunpack.c.l.b16 %v131
    %v412 = vunpack.c.l.b16 %v132
    %v413 = vunpack.c.l.b16 %v133
    %v414 = vunpack.c.l.b16 %v134
    %v415 = vunpack.c.l.b16 %v135
    %v416 = vunpack.c.l.b16 %v136
    %v417 = vunpack.c.l.b16 %v137
    %v418 = vunpack.c.l.b16 %v138
    %v419 = vunpack.c.l.b16 %v139
    %v420 = vunpack.c.l.b16 %v140
    %v421 = vunpack.c.l.b16 %v141
    %v422 = vunpack.c.l.b16 %v142
    %v423 = vunpack.c.l.b16 %v143
    %v424 = vunpack.c.l.b16 %v144
    %v425 = vunpack.c.l.b16 %v145
    %v426 = vunpack.c.l.b16 %v146
    %v427 = vunpack.c.l.b16 %v147
    %v428 = vunpack.c.l.b16 %v148
    %v429 = vunpack.c.l.b16 %v149
    %v430 = vunpack.c.l.b16 %v150
    %v431 = vunpack.c.l.b16 %v151
    %v432 = vunpack.c.l.b16 %v152
    %v433 = vunpack.c.l.b16 %v153
    %v434 = vunpack.c.l.b16 %v154
    %v435 = vunpack.c.l.b16 %v155
    %v436 = vunpack.c.l.b16 %v156
    %v437 = vunpack.c.l.b16 %v157
    %v438 = vunpack.c.l.b16 %v158
    %v439 = vunpack.c.l.b16 %v159
    %v440 = vunpack.c.l.b16 %v160
    %v441 = vunpack.c.l.b16 %v161
    %v442 = vunpack.c.l.b16 %v162
    %v443 = vunpack.c.l.b16 %v163
    %v444 = vunpack.c.l.b16 %v164
    %v445 = vunpack.c.l.b16 %v165
    %v446 = vunpack.c.l.b16 %v166
    %v447 = vunpack.c.l.b16 %v167
    %v448 = vunpack.c.l.b16 %v168
    %v449 = vunpack.c.l.b16 %v169
    %v450 = vunpack.c.l.b16 %v170
    %v451 = vunpack.c.l.b16 %v171
    %v452 = vunpack.c.l.b16 %v172
    %v453 = vunpack.c.l.b16 %v173
    %v454 = vunpack.c.l.b16 %v174
    %v455 = vunpack.c.l.b16 %v175
    %v456 = vunpack.c.l.b16 %v176
    %v457 = vunpack.c.l.b16 %v177
    %v458 = vunpack.c.l.b16 %v178
    %v459 = vunpack.c.l.b16 %v179
    %v460 = vunpack.c.l.b16 %v180
    %v461 = vunpack.c.l.b16 %v181
    %v462 = vunpack.c.l.b16 %v182
    %v463 = vunpack.c.l.b16 %v183
    %v464 = vunpack.c.l.b16 %v184
    %v465 = vunpack.c.l.b16 %v185
    %v466 = vunpack.c.l.b16 %v186
    %v467 = vunpack.c.l.b16 %v187
    %v468 = vunpack.c.l.b16 %v188
    %v469 = vunpack.c.l.b16 %v189
    %v470 = vunpack.c.l.b16 %v190
    %v471 = vunpack.c.l.b16 %v191
    %v472 = vunpack.c.l.b16 %v192
    %v473 = vunpack.c.l.b16 %v193
    %v474 = vunpack.c.l.b16 %v194
    %v475 = vunpack.c.l.b16 %v195
    %v476 = vunpack.c.l.b16 %v196
    %v477 = vunpack.c.l.b16 %v197
    %v478 = vunpack.c.l.b16 %v198
    %v479 = vunpack.c.l.b16 %v199
    %v480 = vunpack.c.l.b16 %v200
    %v481 = vunpack.c.l.b16 %v201
    %v482 = vunpack.c.l.b16 %v202
    %v483 = vunpack.c.l.b16 %v203
    %v484 = vunpack.c.l.b16 %v204
    %v485 = vunpack.c.l.b16 %v205
    %v486 = vunpack.c.l.b16 %v206
    %v487 = vunpack.c.l.b16 %v207
    %v488 = vunpack.c.l.b16 %v208
    %v489 = vunpack.c.l.b16 %v209
    %v490 = vunpack.c.l.b16 %v210
    %v491 = vunpack.c.l.b16 %v211
    %v492 = vunpack.c.l.b16 %v212
    %v493 = vunpack.c.l.b16 %v213
    %v494 = vunpack.c.l.b16 %v214
    %v495 = vunpack.c.l.b16 %v215
    %v496 = vunpack.c.l.b16 %v216
    %v497 = vunpack.c.l.b16 %v217
    %v498 = vunpack.c.l.b16 %v218
    %v499 = vunpack.c.l.b16 %v219
    %v500 = vpack.c.b16 %v373, %v372
    %v501 = vpack.c.b16 %v375, %v374
    %v502 = vpack.c.b16 %v377, %v376
    %v503 = vpack.c.b16 %v379, %v378
    %v504 = vpack.c.b16 %v381, %v380
    %v505 = vpack.c.b16 %v383, %v382
    %v506 = vpack.c.b16 %v385, %v384
    %v507 = vpack.c.b16 %v387, %v386
    %v508 = vpack.c.b16 %v389, %v388
    %v509 = vpack.c.b16 %v391, %v390
    %v510 = vpack.c.b16 %v393, %v392
    %v511 = vpack.c.b16 %v395, %v394
    %v512 = vpack.c.b16 %v397, %v396
    %v513 = vpack.c.b16 %v399, %v398
    %v514 = vpack.c.b16 %v401, %v400
    %v515 = vpack.c.b16 %v403, %v402
    %v516 = vpack.c.b16 %v405, %v404
    %v517 = vpack.c.b16 %v407, %v406
    %v518 = vpack.c.b16 %v409, %v408
    %v519 = vpack.c.b16 %v411, %v410
    %v520 = vpack.c.b16 %v413, %v412
    %v521 = vpack.c.b16 %v415, %v414
    %v522 = vpack.c.b16 %v417, %v416
    %v523 = vpack.c.b16 %v419, %v418
    %v524 = vpack.c.b16 %v421, %v420
    %v525 = vpack.c.b16 %v423, %v422
    %v526 = vpack.c.b16 %v425, %v424
    %v527 = vpack.c.b16 %v427, %v426
    %v528 = vpack.c.b16 %v429, %v428
    %v529 = vpack.c.b16 %v431, %v430
    %v530 = vpack.c.b16 %v433, %v432
    %v531 = vpack.c.b16 %v435, %v434
    %v532 = vpack.c.b16 %v437, %v436
    %v533 = vpack.c.b16 %v439, %v438
    %v534 = vpack.c.b16 %v441, %v440
    %v535 = vpack.c.b16 %v443, %v442
    %v536 = vpack.c.b16 %v445, %v444
    %v537 = vpack.c.b16 %v447, %v446
    %v538 = vpack.c.b16 %v449, %v448
    %v539 = vpack.c.b16 %v451, %v450
    %v540 = vpack.c.b16 %v453, %v452
    %v541 = vpack.c.b16 %v455, %v454
    %v542 = vpack.c.b16 %v457, %v456
    %v543 = vpack.c.b16 %v459, %v458
    %v544 = vpack.c.b16 %v461, %v460
    %v545 = vpack.c.b16 %v463, %v462
    %v546 = vpack.c.b16 %v465, %v464
    %v547 = vpack.c.b16 %v467, %v466
    %v548 = vpack.c.b16 %v469, %v468
    %v549 = vpack.c.b16 %v471, %v470
    %v550 = vpack.c.b16 %v473, %v472
    %v551 = vpack.c.b16 %v475, %v474
    %v552 = vpack.c.b16 %v477, %v476
    %v553 = vpack.c.b16 %v479, %v478
    %v554 = vpack.c.b16 %v481, %v480
    %v555 = vpack.c.b16 %v483, %v482
    %v556 = vpack.c.b16 %v485, %v484
    %v557 = vpack.c.b16 %v487, %v486
    %v558 = vpack.c.b16 %v489, %v488
    %v559 = vpack.c.b16 %v491, %v490
    %v560 = vpack.c.b16 %v493, %v492
    %v561 = vpack.c.b16 %v495, %v494
    %v562 = vpack.c.b16 %v497, %v496
    %v563 = vpack.c.b16 %v499, %v498
    %628 = vmatprep.subr.bf16.mxu0 0
    %629 = vmatpush1.bf16.msra.mxu0 %v500
    %630 = vmatprep.subr.bf16.mxu0 0
    %631 = vmatpush1.bf16.msra.mxu0 %v501
    %632 = vmatprep.subr.bf16.mxu0 0
    %633 = vmatpush1.bf16.msra.mxu0 %v502
    %634 = vmatprep.subr.bf16.mxu0 0
    %635 = vmatpush1.bf16.msra.mxu0 %v503
    %636 = vmatprep.subr.bf16.mxu0 0
    %637 = vmatpush1.bf16.msra.mxu0 %v504
    %638 = vmatprep.subr.bf16.mxu0 0
    %639 = vmatpush1.bf16.msra.mxu0 %v505
    %640 = vmatprep.subr.bf16.mxu0 0
    %641 = vmatpush1.bf16.msra.mxu0 %v506
    %642 = vmatprep.subr.bf16.mxu0 0
    %643 = vmatpush1.bf16.msra.mxu0 %v507
    %644 = vmatprep.subr.bf16.mxu0 0
    %645 = vmatpush1.bf16.msra.mxu0 %v508
    %646 = vmatprep.subr.bf16.mxu0 0
    %647 = vmatpush1.bf16.msra.mxu0 %v509
    %648 = vmatprep.subr.bf16.mxu0 0
    %649 = vmatpush1.bf16.msra.mxu0 %v510
    %650 = vmatprep.subr.bf16.mxu0 0
    %651 = vmatpush1.bf16.msra.mxu0 %v511
    %652 = vmatprep.subr.bf16.mxu0 0
    %653 = vmatpush1.bf16.msra.mxu0 %v512
    %654 = vmatprep.subr.bf16.mxu0 0
    %655 = vmatpush1.bf16.msra.mxu0 %v513
    %656 = vmatprep.subr.bf16.mxu0 0
    %657 = vmatpush1.bf16.msra.mxu0 %v514
    %658 = vmatprep.subr.bf16.mxu0 0
    %659 = vmatpush1.bf16.msra.mxu0 %v515
    %660 = vmatprep.mubr.bf16.mxu0 %v233
    %661 = vmatmul.mubr.bf16.gmra.mrb[0].mxu0 %v232
    %v662 = vpop.f32.mrb[0].mxu0
    %v663 = vadd.f32 %v243, %v662
    %v664 = vpop.f32.mrb[0].mxu0
    %v665 = vpop.f32.mrb[0].mxu0
    %v666 = vpop.f32.mrb[0].mxu0
    %667 = vdwg.mxu0
    %668 = vmatprep.subr.bf16.mxu0 0
    %669 = vmatpush1.bf16.msra.mxu0 %v516
    %670 = vmatprep.subr.bf16.mxu0 0
    %671 = vmatpush1.bf16.msra.mxu0 %v517
    %672 = vmatprep.subr.bf16.mxu0 0
    %673 = vmatpush1.bf16.msra.mxu0 %v518
    %674 = vmatprep.subr.bf16.mxu0 0
    %675 = vmatpush1.bf16.msra.mxu0 %v519
    %676 = vmatprep.subr.bf16.mxu0 0
    %677 = vmatpush1.bf16.msra.mxu0 %v520
    %678 = vmatprep.subr.bf16.mxu0 0
    %679 = vmatpush1.bf16.msra.mxu0 %v521
    %680 = vmatprep.subr.bf16.mxu0 0
    %681 = vmatpush1.bf16.msra.mxu0 %v522
    %682 = vmatprep.subr.bf16.mxu0 0
    %683 = vmatpush1.bf16.msra.mxu0 %v523
    %684 = vmatprep.subr.bf16.mxu0 0
    %685 = vmatpush1.bf16.msra.mxu0 %v524
    %686 = vmatprep.subr.bf16.mxu0 0
    %687 = vmatpush1.bf16.msra.mxu0 %v525
    %688 = vmatprep.subr.bf16.mxu0 0
    %689 = vmatpush1.bf16.msra.mxu0 %v526
    %690 = vmatprep.subr.bf16.mxu0 0
    %691 = vmatpush1.bf16.msra.mxu0 %v527
    %692 = vmatprep.subr.bf16.mxu0 0
    %693 = vmatpush1.bf16.msra.mxu0 %v528
    %694 = vmatprep.subr.bf16.mxu0 0
    %695 = vmatpush1.bf16.msra.mxu0 %v529
    %696 = vmatprep.subr.bf16.mxu0 0
    %697 = vmatpush1.bf16.msra.mxu0 %v530
    %698 = vmatprep.subr.bf16.mxu0 0
    %699 = vmatpush1.bf16.msra.mxu0 %v531
    %700 = vmatprep.mubr.bf16.mxu0 %v235
    %701 = vmatmul.mubr.bf16.gmra.mrb[0].mxu0 %v234
    %v702 = vpop.f32.mrb[0].mxu0
    %v703 = vadd.f32 %v663, %v702
    %v704 = vpop.f32.mrb[0].mxu0
    %v705 = vpop.f32.mrb[0].mxu0
    %v706 = vpop.f32.mrb[0].mxu0
    %707 = vdwg.mxu0
    %708 = vmatprep.subr.bf16.mxu0 0
    %709 = vmatpush1.bf16.msra.mxu0 %v532
    %710 = vmatprep.subr.bf16.mxu0 0
    %711 = vmatpush1.bf16.msra.mxu0 %v533
    %712 = vmatprep.subr.bf16.mxu0 0
    %713 = vmatpush1.bf16.msra.mxu0 %v534
    %714 = vmatprep.subr.bf16.mxu0 0
    %715 = vmatpush1.bf16.msra.mxu0 %v535
    %716 = vmatprep.subr.bf16.mxu0 0
    %717 = vmatpush1.bf16.msra.mxu0 %v536
    %718 = vmatprep.subr.bf16.mxu0 0
    %719 = vmatpush1.bf16.msra.mxu0 %v537
    %720 = vmatprep.subr.bf16.mxu0 0
    %721 = vmatpush1.bf16.msra.mxu0 %v538
    %722 = vmatprep.subr.bf16.mxu0 0
    %723 = vmatpush1.bf16.msra.mxu0 %v539
    %724 = vmatprep.subr.bf16.mxu0 0
    %725 = vmatpush1.bf16.msra.mxu0 %v540
    %726 = vmatprep.subr.bf16.mxu0 0
    %727 = vmatpush1.bf16.msra.mxu0 %v541
    %728 = vmatprep.subr.bf16.mxu0 0
    %729 = vmatpush1.bf16.msra.mxu0 %v542
    %730 = vmatprep.subr.bf16.mxu0 0
    %731 = vmatpush1.bf16.msra.mxu0 %v543
    %732 = vmatprep.subr.bf16.mxu0 0
    %733 = vmatpush1.bf16.msra.mxu0 %v544
    %734 = vmatprep.subr.bf16.mxu0 0
    %735 = vmatpush1.bf16.msra.mxu0 %v545
    %736 = vmatprep.subr.bf16.mxu0 0
    %737 = vmatpush1.bf16.msra.mxu0 %v546
    %738 = vmatprep.subr.bf16.mxu0 0
    %739 = vmatpush1.bf16.msra.mxu0 %v547
    %740 = vmatprep.mubr.bf16.mxu0 %v237
    %741 = vmatmul.mubr.bf16.gmra.mrb[0].mxu0 %v236
    %v742 = vpop.f32.mrb[0].mxu0
    %v743 = vadd.f32 %v703, %v742
    %v744 = vpop.f32.mrb[0].mxu0
    %v745 = vpop.f32.mrb[0].mxu0
    %v746 = vpop.f32.mrb[0].mxu0
    %747 = vdwg.mxu0
    %748 = vmatprep.subr.bf16.mxu0 0
    %749 = vmatpush1.bf16.msra.mxu0 %v548
    %750 = vmatprep.subr.bf16.mxu0 0
    %751 = vmatpush1.bf16.msra.mxu0 %v549
    %752 = vmatprep.subr.bf16.mxu0 0
    %753 = vmatpush1.bf16.msra.mxu0 %v550
    %754 = vmatprep.subr.bf16.mxu0 0
    %755 = vmatpush1.bf16.msra.mxu0 %v551
    %756 = vmatprep.subr.bf16.mxu0 0
    %757 = vmatpush1.bf16.msra.mxu0 %v552
    %758 = vmatprep.subr.bf16.mxu0 0
    %759 = vmatpush1.bf16.msra.mxu0 %v553
    %760 = vmatprep.subr.bf16.mxu0 0
    %761 = vmatpush1.bf16.msra.mxu0 %v554
    %762 = vmatprep.subr.bf16.mxu0 0
    %763 = vmatpush1.bf16.msra.mxu0 %v555
    %764 = vmatprep.subr.bf16.mxu0 0
    %765 = vmatpush1.bf16.msra.mxu0 %v556
    %766 = vmatprep.subr.bf16.mxu0 0
    %767 = vmatpush1.bf16.msra.mxu0 %v557
    %768 = vmatprep.subr.bf16.mxu0 0
    %769 = vmatpush1.bf16.msra.mxu0 %v558
    %770 = vmatprep.subr.bf16.mxu0 0
    %771 = vmatpush1.bf16.msra.mxu0 %v559
    %772 = vmatprep.subr.bf16.mxu0 0
    %773 = vmatpush1.bf16.msra.mxu0 %v560
    %774 = vmatprep.subr.bf16.mxu0 0
    %775 = vmatpush1.bf16.msra.mxu0 %v561
    %776 = vmatprep.subr.bf16.mxu0 0
    %777 = vmatpush1.bf16.msra.mxu0 %v562
    %778 = vmatprep.subr.bf16.mxu0 0
    %779 = vmatpush1.bf16.msra.mxu0 %v563
    %780 = vmatprep.mubr.bf16.mxu0 %v239
    %781 = vmatmul.mubr.bf16.gmra.mrb[0].mxu0 %v238
    %v782 = vpop.f32.mrb[0].mxu0
    %v783 = vadd.f32 %v743, %v782
    %v784 = vpop.f32.mrb[0].mxu0
    %v785 = vpop.f32.mrb[0].mxu0
    %v786 = vpop.f32.mrb[0].mxu0
    %787 = vdwg.mxu0
    %v788 = vmax.f32 %v783, 0.0
    %v789 = vld [vmem:[#allocation2 + $0x20] sm:$0xff]
    %v790 = vld [vmem:[#allocation2 + $0x28] sm:$0xff]
    %v791 = vld [vmem:[#allocation2 + $0x30] sm:$0xff]
    %v792 = vld [vmem:[#allocation2 + $0x38] sm:$0xff]
    %v793 = vld [vmem:[#allocation7 + $0x4] sm:$0xf]
    %v794 = vld [vmem:[#allocation7 + $0x10] sm:$0xf]
    %v795 = vld [vmem:[#allocation7 + $0x1c] sm:$0xf]
    %v796 = vld [vmem:[#allocation7 + $0x28] sm:$0xf]
    %v797 = vld [vmem:[#allocation7 + $0x34] sm:$0xf]
    %v798 = vld [vmem:[#allocation7 + $0x40] sm:$0xf]
    %v799 = vld [vmem:[#allocation7 + $0x4c] sm:$0xf]
    %v800 = vld [vmem:[#allocation7 + $0x58] sm:$0xf]
    %v801 = vld [vmem:[#allocation7 + $0x64] sm:$0xf]
    %v802 = vld [vmem:[#allocation7 + $0x70] sm:$0xf]
    %v803 = vld [vmem:[#allocation7 + $0x7c] sm:$0xf]
    %v804 = vld [vmem:[#allocation7 + $0x88] sm:$0xf]
    %v805 = vld [vmem:[#allocation7 + $0x94] sm:$0xf]
    %v806 = vld [vmem:[#allocation7 + $0xa0] sm:$0xf]
    %v807 = vld [vmem:[#allocation7 + $0xac] sm:$0xf]
    %v808 = vld [vmem:[#allocation7 + $0xb8] sm:$0xf]
    %v809 = vld [vmem:[#allocation7 + $0xc4] sm:$0xf]
    %v810 = vld [vmem:[#allocation7 + $0xd0] sm:$0xf]
    %v811 = vld [vmem:[#allocation7 + $0xdc] sm:$0xf]
    %v812 = vld [vmem:[#allocation7 + $0xe8] sm:$0xf]
    %v813 = vld [vmem:[#allocation7 + $0xf4] sm:$0xf]
    %v814 = vld [vmem:[#allocation7 + $0x100] sm:$0xf]
    %v815 = vld [vmem:[#allocation7 + $0x10c] sm:$0xf]
    %v816 = vld [vmem:[#allocation7 + $0x118] sm:$0xf]
    %v817 = vld [vmem:[#allocation7 + $0x124] sm:$0xf]
    %v818 = vld [vmem:[#allocation7 + $0x130] sm:$0xf]
    %v819 = vld [vmem:[#allocation7 + $0x13c] sm:$0xf]
    %v820 = vld [vmem:[#allocation7 + $0x148] sm:$0xf]
    %v821 = vld [vmem:[#allocation7 + $0x154] sm:$0xf]
    %v822 = vld [vmem:[#allocation7 + $0x160] sm:$0xf]
    %v823 = vld [vmem:[#allocation7 + $0x16c] sm:$0xf]
    %v824 = vld [vmem:[#allocation7 + $0x178] sm:$0xf]
    %v825 = vld [vmem:[#allocation7 + $0x184] sm:$0xf]
    %v826 = vld [vmem:[#allocation7 + $0x190] sm:$0xf]
    %v827 = vld [vmem:[#allocation7 + $0x19c] sm:$0xf]
    %v828 = vld [vmem:[#allocation7 + $0x1a8] sm:$0xf]
    %v829 = vld [vmem:[#allocation7 + $0x1b4] sm:$0xf]
    %v830 = vld [vmem:[#allocation7 + $0x1c0] sm:$0xf]
    %v831 = vld [vmem:[#allocation7 + $0x1cc] sm:$0xf]
    %v832 = vld [vmem:[#allocation7 + $0x1d8] sm:$0xf]
    %v833 = vld [vmem:[#allocation7 + $0x1e4] sm:$0xf]
    %v834 = vld [vmem:[#allocation7 + $0x1f0] sm:$0xf]
    %v835 = vld [vmem:[#allocation7 + $0x1fc] sm:$0xf]
    %v836 = vld [vmem:[#allocation7 + $0x208] sm:$0xf]
    %v837 = vld [vmem:[#allocation7 + $0x214] sm:$0xf]
    %v838 = vld [vmem:[#allocation7 + $0x220] sm:$0xf]
    %v839 = vld [vmem:[#allocation7 + $0x22c] sm:$0xf]
    %v840 = vld [vmem:[#allocation7 + $0x238] sm:$0xf]
    %v841 = vld [vmem:[#allocation7 + $0x244] sm:$0xf]
    %v842 = vld [vmem:[#allocation7 + $0x250] sm:$0xf]
    %v843 = vld [vmem:[#allocation7 + $0x25c] sm:$0xf]
    %v844 = vld [vmem:[#allocation7 + $0x268] sm:$0xf]
    %v845 = vld [vmem:[#allocation7 + $0x274] sm:$0xf]
    %v846 = vld [vmem:[#allocation7 + $0x280] sm:$0xf]
    %v847 = vld [vmem:[#allocation7 + $0x28c] sm:$0xf]
    %v848 = vld [vmem:[#allocation7 + $0x298] sm:$0xf]
    %v849 = vld [vmem:[#allocation7 + $0x2a4] sm:$0xf]
    %v850 = vld [vmem:[#allocation7 + $0x2b0] sm:$0xf]
    %v851 = vld [vmem:[#allocation7 + $0x2bc] sm:$0xf]
    %v852 = vld [vmem:[#allocation7 + $0x2c8] sm:$0xf]
    %v853 = vld [vmem:[#allocation7 + $0x2d4] sm:$0xf]
    %v854 = vld [vmem:[#allocation7 + $0x2e0] sm:$0xf]
    %v855 = vld [vmem:[#allocation7 + $0x2ec] sm:$0xf]
    %v856 = vld [vmem:[#allocation7 + $0x2f8] sm:$0xf]
    %v857 = vld [vmem:[#allocation7 + $0x304] sm:$0xf]
    %v858 = vld [vmem:[#allocation7 + $0x310] sm:$0xf]
    %v859 = vld [vmem:[#allocation7 + $0x31c] sm:$0xf]
    %v860 = vld [vmem:[#allocation7 + $0x328] sm:$0xf]
    %v861 = vld [vmem:[#allocation7 + $0x334] sm:$0xf]
    %v862 = vld [vmem:[#allocation7 + $0x340] sm:$0xf]
    %v863 = vld [vmem:[#allocation7 + $0x34c] sm:$0xf]
    %v864 = vld [vmem:[#allocation7 + $0x358] sm:$0xf]
    %v865 = vld [vmem:[#allocation7 + $0x364] sm:$0xf]
    %v866 = vld [vmem:[#allocation7 + $0x370] sm:$0xf]
    %v867 = vld [vmem:[#allocation7 + $0x37c] sm:$0xf]
    %v868 = vld [vmem:[#allocation7 + $0x388] sm:$0xf]
    %v869 = vld [vmem:[#allocation7 + $0x394] sm:$0xf]
    %v870 = vld [vmem:[#allocation7 + $0x3a0] sm:$0xf]
    %v871 = vld [vmem:[#allocation7 + $0x3ac] sm:$0xf]
    %v872 = vld [vmem:[#allocation7 + $0x3b8] sm:$0xf]
    %v873 = vld [vmem:[#allocation7 + $0x3c4] sm:$0xf]
    %v874 = vld [vmem:[#allocation7 + $0x3d0] sm:$0xf]
    %v875 = vld [vmem:[#allocation7 + $0x3dc] sm:$0xf]
    %v876 = vld [vmem:[#allocation7 + $0x3e8] sm:$0xf]
    %v877 = vld [vmem:[#allocation7 + $0x3f4] sm:$0xf]
    %v878 = vld [vmem:[#allocation7 + $0x400] sm:$0xf]
    %v879 = vld [vmem:[#allocation7 + $0x40c] sm:$0xf]
    %v880 = vld [vmem:[#allocation7 + $0x418] sm:$0xf]
    %v881 = vld [vmem:[#allocation7 + $0x424] sm:$0xf]
    %v882 = vld [vmem:[#allocation7 + $0x430] sm:$0xf]
    %v883 = vld [vmem:[#allocation7 + $0x43c] sm:$0xf]
    %v884 = vld [vmem:[#allocation7 + $0x448] sm:$0xf]
    %v885 = vld [vmem:[#allocation7 + $0x454] sm:$0xf]
    %v886 = vld [vmem:[#allocation7 + $0x460] sm:$0xf]
    %v887 = vld [vmem:[#allocation7 + $0x46c] sm:$0xf]
    %v888 = vld [vmem:[#allocation7 + $0x478] sm:$0xf]
    %v889 = vld [vmem:[#allocation7 + $0x484] sm:$0xf]
    %v890 = vld [vmem:[#allocation7 + $0x490] sm:$0xf]
    %v891 = vld [vmem:[#allocation7 + $0x49c] sm:$0xf]
    %v892 = vld [vmem:[#allocation7 + $0x4a8] sm:$0xf]
    %v893 = vld [vmem:[#allocation7 + $0x4b4] sm:$0xf]
    %v894 = vld [vmem:[#allocation7 + $0x4c0] sm:$0xf]
    %v895 = vld [vmem:[#allocation7 + $0x4cc] sm:$0xf]
    %v896 = vld [vmem:[#allocation7 + $0x4d8] sm:$0xf]
    %v897 = vld [vmem:[#allocation7 + $0x4e4] sm:$0xf]
    %v898 = vld [vmem:[#allocation7 + $0x4f0] sm:$0xf]
    %v899 = vld [vmem:[#allocation7 + $0x4fc] sm:$0xf]
    %v900 = vld [vmem:[#allocation7 + $0x508] sm:$0xf]
    %v901 = vld [vmem:[#allocation7 + $0x514] sm:$0xf]
    %v902 = vld [vmem:[#allocation7 + $0x520] sm:$0xf]
    %v903 = vld [vmem:[#allocation7 + $0x52c] sm:$0xf]
    %v904 = vld [vmem:[#allocation7 + $0x538] sm:$0xf]
    %v905 = vld [vmem:[#allocation7 + $0x544] sm:$0xf]
    %v906 = vld [vmem:[#allocation7 + $0x550] sm:$0xf]
    %v907 = vld [vmem:[#allocation7 + $0x55c] sm:$0xf]
    %v908 = vld [vmem:[#allocation7 + $0x568] sm:$0xf]
    %v909 = vld [vmem:[#allocation7 + $0x574] sm:$0xf]
    %v910 = vld [vmem:[#allocation7 + $0x580] sm:$0xf]
    %v911 = vld [vmem:[#allocation7 + $0x58c] sm:$0xf]
    %v912 = vld [vmem:[#allocation7 + $0x598] sm:$0xf]
    %v913 = vld [vmem:[#allocation7 + $0x5a4] sm:$0xf]
    %v914 = vld [vmem:[#allocation7 + $0x5b0] sm:$0xf]
    %v915 = vld [vmem:[#allocation7 + $0x5bc] sm:$0xf]
    %v916 = vld [vmem:[#allocation7 + $0x5c8] sm:$0xf]
    %v917 = vld [vmem:[#allocation7 + $0x5d4] sm:$0xf]
    %v918 = vld [vmem:[#allocation7 + $0x5e0] sm:$0xf]
    %v919 = vld [vmem:[#allocation7 + $0x5ec] sm:$0xf]
    %v920 = vld [vmem:[#allocation7 + $0x5f8] sm:$0xf]
    %v925 = vcombine.high %v789, %v789
    %v926 = vcombine.high %v790, %v790
    %v927 = vcombine.high %v791, %v791
    %v928 = vcombine.high %v792, %v792
    %v933 = vpack.c.bf16 %v789, %v789
    %v934 = vpack.c.bf16 %v925, %v925
    %v935 = vpack.c.bf16 %v790, %v790
    %v936 = vpack.c.bf16 %v926, %v926
    %v937 = vpack.c.bf16 %v791, %v791
    %v938 = vpack.c.bf16 %v927, %v927
    %v939 = vpack.c.bf16 %v792, %v792
    %v940 = vpack.c.bf16 %v928, %v928
    %v941 = vlaneseq
    %v942 = vshrl.u32 %v941, 7
    %v943 = vsub.s32 1, %v942
    %v944 = vrot.slane %v86, %v943
    %v1073 = vunpack.c.l.b16 %v793
    %v1074 = vunpack.c.l.b16 %v794
    %v1075 = vunpack.c.l.b16 %v795
    %v1076 = vunpack.c.l.b16 %v796
    %v1077 = vunpack.c.l.b16 %v797
    %v1078 = vunpack.c.l.b16 %v798
    %v1079 = vunpack.c.l.b16 %v799
    %v1080 = vunpack.c.l.b16 %v800
    %v1081 = vunpack.c.l.b16 %v801
    %v1082 = vunpack.c.l.b16 %v802
    %v1083 = vunpack.c.l.b16 %v803
    %v1084 = vunpack.c.l.b16 %v804
    %v1085 = vunpack.c.l.b16 %v805
    %v1086 = vunpack.c.l.b16 %v806
    %v1087 = vunpack.c.l.b16 %v807
    %v1088 = vunpack.c.l.b16 %v808
    %v1089 = vunpack.c.l.b16 %v809
    %v1090 = vunpack.c.l.b16 %v810
    %v1091 = vunpack.c.l.b16 %v811
    %v1092 = vunpack.c.l.b16 %v812
    %v1093 = vunpack.c.l.b16 %v813
    %v1094 = vunpack.c.l.b16 %v814
    %v1095 = vunpack.c.l.b16 %v815
    %v1096 = vunpack.c.l.b16 %v816
    %v1097 = vunpack.c.l.b16 %v817
    %v1098 = vunpack.c.l.b16 %v818
    %v1099 = vunpack.c.l.b16 %v819
    %v1100 = vunpack.c.l.b16 %v820
    %v1101 = vunpack.c.l.b16 %v821
    %v1102 = vunpack.c.l.b16 %v822
    %v1103 = vunpack.c.l.b16 %v823
    %v1104 = vunpack.c.l.b16 %v824
    %v1105 = vunpack.c.l.b16 %v825
    %v1106 = vunpack.c.l.b16 %v826
    %v1107 = vunpack.c.l.b16 %v827
    %v1108 = vunpack.c.l.b16 %v828
    %v1109 = vunpack.c.l.b16 %v829
    %v1110 = vunpack.c.l.b16 %v830
    %v1111 = vunpack.c.l.b16 %v831
    %v1112 = vunpack.c.l.b16 %v832
    %v1113 = vunpack.c.l.b16 %v833
    %v1114 = vunpack.c.l.b16 %v834
    %v1115 = vunpack.c.l.b16 %v835
    %v1116 = vunpack.c.l.b16 %v836
    %v1117 = vunpack.c.l.b16 %v837
    %v1118 = vunpack.c.l.b16 %v838
    %v1119 = vunpack.c.l.b16 %v839
    %v1120 = vunpack.c.l.b16 %v840
    %v1121 = vunpack.c.l.b16 %v841
    %v1122 = vunpack.c.l.b16 %v842
    %v1123 = vunpack.c.l.b16 %v843
    %v1124 = vunpack.c.l.b16 %v844
    %v1125 = vunpack.c.l.b16 %v845
    %v1126 = vunpack.c.l.b16 %v846
    %v1127 = vunpack.c.l.b16 %v847
    %v1128 = vunpack.c.l.b16 %v848
    %v1129 = vunpack.c.l.b16 %v849
    %v1130 = vunpack.c.l.b16 %v850
    %v1131 = vunpack.c.l.b16 %v851
    %v1132 = vunpack.c.l.b16 %v852
    %v1133 = vunpack.c.l.b16 %v853
    %v1134 = vunpack.c.l.b16 %v854
    %v1135 = vunpack.c.l.b16 %v855
    %v1136 = vunpack.c.l.b16 %v856
    %v1137 = vunpack.c.l.b16 %v857
    %v1138 = vunpack.c.l.b16 %v858
    %v1139 = vunpack.c.l.b16 %v859
    %v1140 = vunpack.c.l.b16 %v860
    %v1141 = vunpack.c.l.b16 %v861
    %v1142 = vunpack.c.l.b16 %v862
    %v1143 = vunpack.c.l.b16 %v863
    %v1144 = vunpack.c.l.b16 %v864
    %v1145 = vunpack.c.l.b16 %v865
    %v1146 = vunpack.c.l.b16 %v866
    %v1147 = vunpack.c.l.b16 %v867
    %v1148 = vunpack.c.l.b16 %v868
    %v1149 = vunpack.c.l.b16 %v869
    %v1150 = vunpack.c.l.b16 %v870
    %v1151 = vunpack.c.l.b16 %v871
    %v1152 = vunpack.c.l.b16 %v872
    %v1153 = vunpack.c.l.b16 %v873
    %v1154 = vunpack.c.l.b16 %v874
    %v1155 = vunpack.c.l.b16 %v875
    %v1156 = vunpack.c.l.b16 %v876
    %v1157 = vunpack.c.l.b16 %v877
    %v1158 = vunpack.c.l.b16 %v878
    %v1159 = vunpack.c.l.b16 %v879
    %v1160 = vunpack.c.l.b16 %v880
    %v1161 = vunpack.c.l.b16 %v881
    %v1162 = vunpack.c.l.b16 %v882
    %v1163 = vunpack.c.l.b16 %v883
    %v1164 = vunpack.c.l.b16 %v884
    %v1165 = vunpack.c.l.b16 %v885
    %v1166 = vunpack.c.l.b16 %v886
    %v1167 = vunpack.c.l.b16 %v887
    %v1168 = vunpack.c.l.b16 %v888
    %v1169 = vunpack.c.l.b16 %v889
    %v1170 = vunpack.c.l.b16 %v890
    %v1171 = vunpack.c.l.b16 %v891
    %v1172 = vunpack.c.l.b16 %v892
    %v1173 = vunpack.c.l.b16 %v893
    %v1174 = vunpack.c.l.b16 %v894
    %v1175 = vunpack.c.l.b16 %v895
    %v1176 = vunpack.c.l.b16 %v896
    %v1177 = vunpack.c.l.b16 %v897
    %v1178 = vunpack.c.l.b16 %v898
    %v1179 = vunpack.c.l.b16 %v899
    %v1180 = vunpack.c.l.b16 %v900
    %v1181 = vunpack.c.l.b16 %v901
    %v1182 = vunpack.c.l.b16 %v902
    %v1183 = vunpack.c.l.b16 %v903
    %v1184 = vunpack.c.l.b16 %v904
    %v1185 = vunpack.c.l.b16 %v905
    %v1186 = vunpack.c.l.b16 %v906
    %v1187 = vunpack.c.l.b16 %v907
    %v1188 = vunpack.c.l.b16 %v908
    %v1189 = vunpack.c.l.b16 %v909
    %v1190 = vunpack.c.l.b16 %v910
    %v1191 = vunpack.c.l.b16 %v911
    %v1192 = vunpack.c.l.b16 %v912
    %v1193 = vunpack.c.l.b16 %v913
    %v1194 = vunpack.c.l.b16 %v914
    %v1195 = vunpack.c.l.b16 %v915
    %v1196 = vunpack.c.l.b16 %v916
    %v1197 = vunpack.c.l.b16 %v917
    %v1198 = vunpack.c.l.b16 %v918
    %v1199 = vunpack.c.l.b16 %v919
    %v1200 = vunpack.c.l.b16 %v920
    %v1201 = vpack.c.b16 %v1074, %v1073
    %v1202 = vpack.c.b16 %v1076, %v1075
    %v1203 = vpack.c.b16 %v1078, %v1077
    %v1204 = vpack.c.b16 %v1080, %v1079
    %v1205 = vpack.c.b16 %v1082, %v1081
    %v1206 = vpack.c.b16 %v1084, %v1083
    %v1207 = vpack.c.b16 %v1086, %v1085
    %v1208 = vpack.c.b16 %v1088, %v1087
    %v1209 = vpack.c.b16 %v1090, %v1089
    %v1210 = vpack.c.b16 %v1092, %v1091
    %v1211 = vpack.c.b16 %v1094, %v1093
    %v1212 = vpack.c.b16 %v1096, %v1095
    %v1213 = vpack.c.b16 %v1098, %v1097
    %v1214 = vpack.c.b16 %v1100, %v1099
    %v1215 = vpack.c.b16 %v1102, %v1101
    %v1216 = vpack.c.b16 %v1104, %v1103
    %v1217 = vpack.c.b16 %v1106, %v1105
    %v1218 = vpack.c.b16 %v1108, %v1107
    %v1219 = vpack.c.b16 %v1110, %v1109
    %v1220 = vpack.c.b16 %v1112, %v1111
    %v1221 = vpack.c.b16 %v1114, %v1113
    %v1222 = vpack.c.b16 %v1116, %v1115
    %v1223 = vpack.c.b16 %v1118, %v1117
    %v1224 = vpack.c.b16 %v1120, %v1119
    %v1225 = vpack.c.b16 %v1122, %v1121
    %v1226 = vpack.c.b16 %v1124, %v1123
    %v1227 = vpack.c.b16 %v1126, %v1125
    %v1228 = vpack.c.b16 %v1128, %v1127
    %v1229 = vpack.c.b16 %v1130, %v1129
    %v1230 = vpack.c.b16 %v1132, %v1131
    %v1231 = vpack.c.b16 %v1134, %v1133
    %v1232 = vpack.c.b16 %v1136, %v1135
    %v1233 = vpack.c.b16 %v1138, %v1137
    %v1234 = vpack.c.b16 %v1140, %v1139
    %v1235 = vpack.c.b16 %v1142, %v1141
    %v1236 = vpack.c.b16 %v1144, %v1143
    %v1237 = vpack.c.b16 %v1146, %v1145
    %v1238 = vpack.c.b16 %v1148, %v1147
    %v1239 = vpack.c.b16 %v1150, %v1149
    %v1240 = vpack.c.b16 %v1152, %v1151
    %v1241 = vpack.c.b16 %v1154, %v1153
    %v1242 = vpack.c.b16 %v1156, %v1155
    %v1243 = vpack.c.b16 %v1158, %v1157
    %v1244 = vpack.c.b16 %v1160, %v1159
    %v1245 = vpack.c.b16 %v1162, %v1161
    %v1246 = vpack.c.b16 %v1164, %v1163
    %v1247 = vpack.c.b16 %v1166, %v1165
    %v1248 = vpack.c.b16 %v1168, %v1167
    %v1249 = vpack.c.b16 %v1170, %v1169
    %v1250 = vpack.c.b16 %v1172, %v1171
    %v1251 = vpack.c.b16 %v1174, %v1173
    %v1252 = vpack.c.b16 %v1176, %v1175
    %v1253 = vpack.c.b16 %v1178, %v1177
    %v1254 = vpack.c.b16 %v1180, %v1179
    %v1255 = vpack.c.b16 %v1182, %v1181
    %v1256 = vpack.c.b16 %v1184, %v1183
    %v1257 = vpack.c.b16 %v1186, %v1185
    %v1258 = vpack.c.b16 %v1188, %v1187
    %v1259 = vpack.c.b16 %v1190, %v1189
    %v1260 = vpack.c.b16 %v1192, %v1191
    %v1261 = vpack.c.b16 %v1194, %v1193
    %v1262 = vpack.c.b16 %v1196, %v1195
    %v1263 = vpack.c.b16 %v1198, %v1197
    %v1264 = vpack.c.b16 %v1200, %v1199
    %1329 = vmatprep.subr.bf16.mxu0 0
    %1330 = vmatpush1.bf16.msra.mxu0 %v1201
    %1331 = vmatprep.subr.bf16.mxu0 0
    %1332 = vmatpush1.bf16.msra.mxu0 %v1202
    %1333 = vmatprep.subr.bf16.mxu0 0
    %1334 = vmatpush1.bf16.msra.mxu0 %v1203
    %1335 = vmatprep.subr.bf16.mxu0 0
    %1336 = vmatpush1.bf16.msra.mxu0 %v1204
    %1337 = vmatprep.subr.bf16.mxu0 0
    %1338 = vmatpush1.bf16.msra.mxu0 %v1205
    %1339 = vmatprep.subr.bf16.mxu0 0
    %1340 = vmatpush1.bf16.msra.mxu0 %v1206
    %1341 = vmatprep.subr.bf16.mxu0 0
    %1342 = vmatpush1.bf16.msra.mxu0 %v1207
    %1343 = vmatprep.subr.bf16.mxu0 0
    %1344 = vmatpush1.bf16.msra.mxu0 %v1208
    %1345 = vmatprep.subr.bf16.mxu0 0
    %1346 = vmatpush1.bf16.msra.mxu0 %v1209
    %1347 = vmatprep.subr.bf16.mxu0 0
    %1348 = vmatpush1.bf16.msra.mxu0 %v1210
    %1349 = vmatprep.subr.bf16.mxu0 0
    %1350 = vmatpush1.bf16.msra.mxu0 %v1211
    %1351 = vmatprep.subr.bf16.mxu0 0
    %1352 = vmatpush1.bf16.msra.mxu0 %v1212
    %1353 = vmatprep.subr.bf16.mxu0 0
    %1354 = vmatpush1.bf16.msra.mxu0 %v1213
    %1355 = vmatprep.subr.bf16.mxu0 0
    %1356 = vmatpush1.bf16.msra.mxu0 %v1214
    %1357 = vmatprep.subr.bf16.mxu0 0
    %1358 = vmatpush1.bf16.msra.mxu0 %v1215
    %1359 = vmatprep.subr.bf16.mxu0 0
    %1360 = vmatpush1.bf16.msra.mxu0 %v1216
    %1361 = vmatprep.mubr.bf16.mxu0 %v934
    %1362 = vmatmul.mubr.bf16.gmra.mrb[0].mxu0 %v933
    %v1363 = vpop.f32.mrb[0].mxu0
    %v1364 = vadd.f32 %v944, %v1363
    %v1365 = vpop.f32.mrb[0].mxu0
    %v1366 = vpop.f32.mrb[0].mxu0
    %v1367 = vpop.f32.mrb[0].mxu0
    %1368 = vdwg.mxu0
    %1369 = vmatprep.subr.bf16.mxu0 0
    %1370 = vmatpush1.bf16.msra.mxu0 %v1217
    %1371 = vmatprep.subr.bf16.mxu0 0
    %1372 = vmatpush1.bf16.msra.mxu0 %v1218
    %1373 = vmatprep.subr.bf16.mxu0 0
    %1374 = vmatpush1.bf16.msra.mxu0 %v1219
    %1375 = vmatprep.subr.bf16.mxu0 0
    %1376 = vmatpush1.bf16.msra.mxu0 %v1220
    %1377 = vmatprep.subr.bf16.mxu0 0
    %1378 = vmatpush1.bf16.msra.mxu0 %v1221
    %1379 = vmatprep.subr.bf16.mxu0 0
    %1380 = vmatpush1.bf16.msra.mxu0 %v1222
    %1381 = vmatprep.subr.bf16.mxu0 0
    %1382 = vmatpush1.bf16.msra.mxu0 %v1223
    %1383 = vmatprep.subr.bf16.mxu0 0
    %1384 = vmatpush1.bf16.msra.mxu0 %v1224
    %1385 = vmatprep.subr.bf16.mxu0 0
    %1386 = vmatpush1.bf16.msra.mxu0 %v1225
    %1387 = vmatprep.subr.bf16.mxu0 0
    %1388 = vmatpush1.bf16.msra.mxu0 %v1226
    %1389 = vmatprep.subr.bf16.mxu0 0
    %1390 = vmatpush1.bf16.msra.mxu0 %v1227
    %1391 = vmatprep.subr.bf16.mxu0 0
    %1392 = vmatpush1.bf16.msra.mxu0 %v1228
    %1393 = vmatprep.subr.bf16.mxu0 0
    %1394 = vmatpush1.bf16.msra.mxu0 %v1229
    %1395 = vmatprep.subr.bf16.mxu0 0
    %1396 = vmatpush1.bf16.msra.mxu0 %v1230
    %1397 = vmatprep.subr.bf16.mxu0 0
    %1398 = vmatpush1.bf16.msra.mxu0 %v1231
    %1399 = vmatprep.subr.bf16.mxu0 0
    %1400 = vmatpush1.bf16.msra.mxu0 %v1232
    %1401 = vmatprep.mubr.bf16.mxu0 %v936
    %1402 = vmatmul.mubr.bf16.gmra.mrb[0].mxu0 %v935
    %v1403 = vpop.f32.mrb[0].mxu0
    %v1404 = vadd.f32 %v1364, %v1403
    %v1405 = vpop.f32.mrb[0].mxu0
    %v1406 = vpop.f32.mrb[0].mxu0
    %v1407 = vpop.f32.mrb[0].mxu0
    %1408 = vdwg.mxu0
    %1409 = vmatprep.subr.bf16.mxu0 0
    %1410 = vmatpush1.bf16.msra.mxu0 %v1233
    %1411 = vmatprep.subr.bf16.mxu0 0
    %1412 = vmatpush1.bf16.msra.mxu0 %v1234
    %1413 = vmatprep.subr.bf16.mxu0 0
    %1414 = vmatpush1.bf16.msra.mxu0 %v1235
    %1415 = vmatprep.subr.bf16.mxu0 0
    %1416 = vmatpush1.bf16.msra.mxu0 %v1236
    %1417 = vmatprep.subr.bf16.mxu0 0
    %1418 = vmatpush1.bf16.msra.mxu0 %v1237
    %1419 = vmatprep.subr.bf16.mxu0 0
    %1420 = vmatpush1.bf16.msra.mxu0 %v1238
    %1421 = vmatprep.subr.bf16.mxu0 0
    %1422 = vmatpush1.bf16.msra.mxu0 %v1239
    %1423 = vmatprep.subr.bf16.mxu0 0
    %1424 = vmatpush1.bf16.msra.mxu0 %v1240
    %1425 = vmatprep.subr.bf16.mxu0 0
    %1426 = vmatpush1.bf16.msra.mxu0 %v1241
    %1427 = vmatprep.subr.bf16.mxu0 0
    %1428 = vmatpush1.bf16.msra.mxu0 %v1242
    %1429 = vmatprep.subr.bf16.mxu0 0
    %1430 = vmatpush1.bf16.msra.mxu0 %v1243
    %1431 = vmatprep.subr.bf16.mxu0 0
    %1432 = vmatpush1.bf16.msra.mxu0 %v1244
    %1433 = vmatprep.subr.bf16.mxu0 0
    %1434 = vmatpush1.bf16.msra.mxu0 %v1245
    %1435 = vmatprep.subr.bf16.mxu0 0
    %1436 = vmatpush1.bf16.msra.mxu0 %v1246
    %1437 = vmatprep.subr.bf16.mxu0 0
    %1438 = vmatpush1.bf16.msra.mxu0 %v1247
    %1439 = vmatprep.subr.bf16.mxu0 0
    %1440 = vmatpush1.bf16.msra.mxu0 %v1248
    %1441 = vmatprep.mubr.bf16.mxu0 %v938
    %1442 = vmatmul.mubr.bf16.gmra.mrb[0].mxu0 %v937
    %v1443 = vpop.f32.mrb[0].mxu0
    %v1444 = vadd.f32 %v1404, %v1443
    %v1445 = vpop.f32.mrb[0].mxu0
    %v1446 = vpop.f32.mrb[0].mxu0
    %v1447 = vpop.f32.mrb[0].mxu0
    %1448 = vdwg.mxu0
    %1449 = vmatprep.subr.bf16.mxu0 0
    %1450 = vmatpush1.bf16.msra.mxu0 %v1249
    %1451 = vmatprep.subr.bf16.mxu0 0
    %1452 = vmatpush1.bf16.msra.mxu0 %v1250
    %1453 = vmatprep.subr.bf16.mxu0 0
    %1454 = vmatpush1.bf16.msra.mxu0 %v1251
    %1455 = vmatprep.subr.bf16.mxu0 0
    %1456 = vmatpush1.bf16.msra.mxu0 %v1252
    %1457 = vmatprep.subr.bf16.mxu0 0
    %1458 = vmatpush1.bf16.msra.mxu0 %v1253
    %1459 = vmatprep.subr.bf16.mxu0 0
    %1460 = vmatpush1.bf16.msra.mxu0 %v1254
    %1461 = vmatprep.subr.bf16.mxu0 0
    %1462 = vmatpush1.bf16.msra.mxu0 %v1255
    %1463 = vmatprep.subr.bf16.mxu0 0
    %1464 = vmatpush1.bf16.msra.mxu0 %v1256
    %1465 = vmatprep.subr.bf16.mxu0 0
    %1466 = vmatpush1.bf16.msra.mxu0 %v1257
    %1467 = vmatprep.subr.bf16.mxu0 0
    %1468 = vmatpush1.bf16.msra.mxu0 %v1258
    %1469 = vmatprep.subr.bf16.mxu0 0
    %1470 = vmatpush1.bf16.msra.mxu0 %v1259
    %1471 = vmatprep.subr.bf16.mxu0 0
    %1472 = vmatpush1.bf16.msra.mxu0 %v1260
    %1473 = vmatprep.subr.bf16.mxu0 0
    %1474 = vmatpush1.bf16.msra.mxu0 %v1261
    %1475 = vmatprep.subr.bf16.mxu0 0
    %1476 = vmatpush1.bf16.msra.mxu0 %v1262
    %1477 = vmatprep.subr.bf16.mxu0 0
    %1478 = vmatpush1.bf16.msra.mxu0 %v1263
    %1479 = vmatprep.subr.bf16.mxu0 0
    %1480 = vmatpush1.bf16.msra.mxu0 %v1264
    %1481 = vmatprep.mubr.bf16.mxu0 %v940
    %1482 = vmatmul.mubr.bf16.gmra.mrb[0].mxu0 %v939
    %v1483 = vpop.f32.mrb[0].mxu0
    %v1484 = vadd.f32 %v1444, %v1483
    %v1485 = vpop.f32.mrb[0].mxu0
    %v1486 = vpop.f32.mrb[0].mxu0
    %v1487 = vpop.f32.mrb[0].mxu0
    %1488 = vdwg.mxu0
    %v1489 = vmax.f32 %v1484, 0.0
    %v1490 = vld [vmem:[#allocation2 + $0x40] sm:$0xff]
    %v1491 = vld [vmem:[#allocation2 + $0x48] sm:$0xff]
    %v1492 = vld [vmem:[#allocation2 + $0x50] sm:$0xff]
    %v1493 = vld [vmem:[#allocation2 + $0x58] sm:$0xff]
    %v1494 = vld [vmem:[#allocation7 + $0x8] sm:$0xf]
    %v1495 = vld [vmem:[#allocation7 + $0x14] sm:$0xf]
    %v1496 = vld [vmem:[#allocation7 + $0x20] sm:$0xf]
    %v1497 = vld [vmem:[#allocation7 + $0x2c] sm:$0xf]
    %v1498 = vld [vmem:[#allocation7 + $0x38] sm:$0xf]
    %v1499 = vld [vmem:[#allocation7 + $0x44] sm:$0xf]
    %v1500 = vld [vmem:[#allocation7 + $0x50] sm:$0xf]
    %v1501 = vld [vmem:[#allocation7 + $0x5c] sm:$0xf]
    %v1502 = vld [vmem:[#allocation7 + $0x68] sm:$0xf]
    %v1503 = vld [vmem:[#allocation7 + $0x74] sm:$0xf]
    %v1504 = vld [vmem:[#allocation7 + $0x80] sm:$0xf]
    %v1505 = vld [vmem:[#allocation7 + $0x8c] sm:$0xf]
    %v1506 = vld [vmem:[#allocation7 + $0x98] sm:$0xf]
    %v1507 = vld [vmem:[#allocation7 + $0xa4] sm:$0xf]
    %v1508 = vld [vmem:[#allocation7 + $0xb0] sm:$0xf]
    %v1509 = vld [vmem:[#allocation7 + $0xbc] sm:$0xf]
    %v1510 = vld [vmem:[#allocation7 + $0xc8] sm:$0xf]
    %v1511 = vld [vmem:[#allocation7 + $0xd4] sm:$0xf]
    %v1512 = vld [vmem:[#allocation7 + $0xe0] sm:$0xf]
    %v1513 = vld [vmem:[#allocation7 + $0xec] sm:$0xf]
    %v1514 = vld [vmem:[#allocation7 + $0xf8] sm:$0xf]
    %v1515 = vld [vmem:[#allocation7 + $0x104] sm:$0xf]
    %v1516 = vld [vmem:[#allocation7 + $0x110] sm:$0xf]
    %v1517 = vld [vmem:[#allocation7 + $0x11c] sm:$0xf]
    %v1518 = vld [vmem:[#allocation7 + $0x128] sm:$0xf]
    %v1519 = vld [vmem:[#allocation7 + $0x134] sm:$0xf]
    %v1520 = vld [vmem:[#allocation7 + $0x140] sm:$0xf]
    %v1521 = vld [vmem:[#allocation7 + $0x14c] sm:$0xf]
    %v1522 = vld [vmem:[#allocation7 + $0x158] sm:$0xf]
    %v1523 = vld [vmem:[#allocation7 + $0x164] sm:$0xf]
    %v1524 = vld [vmem:[#allocation7 + $0x170] sm:$0xf]
    %v1525 = vld [vmem:[#allocation7 + $0x17c] sm:$0xf]
    %v1526 = vld [vmem:[#allocation7 + $0x188] sm:$0xf]
    %v1527 = vld [vmem:[#allocation7 + $0x194] sm:$0xf]
    %v1528 = vld [vmem:[#allocation7 + $0x1a0] sm:$0xf]
    %v1529 = vld [vmem:[#allocation7 + $0x1ac] sm:$0xf]
    %v1530 = vld [vmem:[#allocation7 + $0x1b8] sm:$0xf]
    %v1531 = vld [vmem:[#allocation7 + $0x1c4] sm:$0xf]
    %v1532 = vld [vmem:[#allocation7 + $0x1d0] sm:$0xf]
    %v1533 = vld [vmem:[#allocation7 + $0x1dc] sm:$0xf]
    %v1534 = vld [vmem:[#allocation7 + $0x1e8] sm:$0xf]
    %v1535 = vld [vmem:[#allocation7 + $0x1f4] sm:$0xf]
    %v1536 = vld [vmem:[#allocation7 + $0x200] sm:$0xf]
    %v1537 = vld [vmem:[#allocation7 + $0x20c] sm:$0xf]
    %v1538 = vld [vmem:[#allocation7 + $0x218] sm:$0xf]
    %v1539 = vld [vmem:[#allocation7 + $0x224] sm:$0xf]
    %v1540 = vld [vmem:[#allocation7 + $0x230] sm:$0xf]
    %v1541 = vld [vmem:[#allocation7 + $0x23c] sm:$0xf]
    %v1542 = vld [vmem:[#allocation7 + $0x248] sm:$0xf]
    %v1543 = vld [vmem:[#allocation7 + $0x254] sm:$0xf]
    %v1544 = vld [vmem:[#allocation7 + $0x260] sm:$0xf]
    %v1545 = vld [vmem:[#allocation7 + $0x26c] sm:$0xf]
    %v1546 = vld [vmem:[#allocation7 + $0x278] sm:$0xf]
    %v1547 = vld [vmem:[#allocation7 + $0x284] sm:$0xf]
    %v1548 = vld [vmem:[#allocation7 + $0x290] sm:$0xf]
    %v1549 = vld [vmem:[#allocation7 + $0x29c] sm:$0xf]
    %v1550 = vld [vmem:[#allocation7 + $0x2a8] sm:$0xf]
    %v1551 = vld [vmem:[#allocation7 + $0x2b4] sm:$0xf]
    %v1552 = vld [vmem:[#allocation7 + $0x2c0] sm:$0xf]
    %v1553 = vld [vmem:[#allocation7 + $0x2cc] sm:$0xf]
    %v1554 = vld [vmem:[#allocation7 + $0x2d8] sm:$0xf]
    %v1555 = vld [vmem:[#allocation7 + $0x2e4] sm:$0xf]
    %v1556 = vld [vmem:[#allocation7 + $0x2f0] sm:$0xf]
    %v1557 = vld [vmem:[#allocation7 + $0x2fc] sm:$0xf]
    %v1558 = vld [vmem:[#allocation7 + $0x308] sm:$0xf]
    %v1559 = vld [vmem:[#allocation7 + $0x314] sm:$0xf]
    %v1560 = vld [vmem:[#allocation7 + $0x320] sm:$0xf]
    %v1561 = vld [vmem:[#allocation7 + $0x32c] sm:$0xf]
    %v1562 = vld [vmem:[#allocation7 + $0x338] sm:$0xf]
    %v1563 = vld [vmem:[#allocation7 + $0x344] sm:$0xf]
    %v1564 = vld [vmem:[#allocation7 + $0x350] sm:$0xf]
    %v1565 = vld [vmem:[#allocation7 + $0x35c] sm:$0xf]
    %v1566 = vld [vmem:[#allocation7 + $0x368] sm:$0xf]
    %v1567 = vld [vmem:[#allocation7 + $0x374] sm:$0xf]
    %v1568 = vld [vmem:[#allocation7 + $0x380] sm:$0xf]
    %v1569 = vld [vmem:[#allocation7 + $0x38c] sm:$0xf]
    %v1570 = vld [vmem:[#allocation7 + $0x398] sm:$0xf]
    %v1571 = vld [vmem:[#allocation7 + $0x3a4] sm:$0xf]
    %v1572 = vld [vmem:[#allocation7 + $0x3b0] sm:$0xf]
    %v1573 = vld [vmem:[#allocation7 + $0x3bc] sm:$0xf]
    %v1574 = vld [vmem:[#allocation7 + $0x3c8] sm:$0xf]
    %v1575 = vld [vmem:[#allocation7 + $0x3d4] sm:$0xf]
    %v1576 = vld [vmem:[#allocation7 + $0x3e0] sm:$0xf]
    %v1577 = vld [vmem:[#allocation7 + $0x3ec] sm:$0xf]
    %v1578 = vld [vmem:[#allocation7 + $0x3f8] sm:$0xf]
    %v1579 = vld [vmem:[#allocation7 + $0x404] sm:$0xf]
    %v1580 = vld [vmem:[#allocation7 + $0x410] sm:$0xf]
    %v1581 = vld [vmem:[#allocation7 + $0x41c] sm:$0xf]
    %v1582 = vld [vmem:[#allocation7 + $0x428] sm:$0xf]
    %v1583 = vld [vmem:[#allocation7 + $0x434] sm:$0xf]
    %v1584 = vld [vmem:[#allocation7 + $0x440] sm:$0xf]
    %v1585 = vld [vmem:[#allocation7 + $0x44c] sm:$0xf]
    %v1586 = vld [vmem:[#allocation7 + $0x458] sm:$0xf]
    %v1587 = vld [vmem:[#allocation7 + $0x464] sm:$0xf]
    %v1588 = vld [vmem:[#allocation7 + $0x470] sm:$0xf]
    %v1589 = vld [vmem:[#allocation7 + $0x47c] sm:$0xf]
    %v1590 = vld [vmem:[#allocation7 + $0x488] sm:$0xf]
    %v1591 = vld [vmem:[#allocation7 + $0x494] sm:$0xf]
    %v1592 = vld [vmem:[#allocation7 + $0x4a0] sm:$0xf]
    %v1593 = vld [vmem:[#allocation7 + $0x4ac] sm:$0xf]
    %v1594 = vld [vmem:[#allocation7 + $0x4b8] sm:$0xf]
    %v1595 = vld [vmem:[#allocation7 + $0x4c4] sm:$0xf]
    %v1596 = vld [vmem:[#allocation7 + $0x4d0] sm:$0xf]
    %v1597 = vld [vmem:[#allocation7 + $0x4dc] sm:$0xf]
    %v1598 = vld [vmem:[#allocation7 + $0x4e8] sm:$0xf]
    %v1599 = vld [vmem:[#allocation7 + $0x4f4] sm:$0xf]
    %v1600 = vld [vmem:[#allocation7 + $0x500] sm:$0xf]
    %v1601 = vld [vmem:[#allocation7 + $0x50c] sm:$0xf]
    %v1602 = vld [vmem:[#allocation7 + $0x518] sm:$0xf]
    %v1603 = vld [vmem:[#allocation7 + $0x524] sm:$0xf]
    %v1604 = vld [vmem:[#allocation7 + $0x530] sm:$0xf]
    %v1605 = vld [vmem:[#allocation7 + $0x53c] sm:$0xf]
    %v1606 = vld [vmem:[#allocation7 + $0x548] sm:$0xf]
    %v1607 = vld [vmem:[#allocation7 + $0x554] sm:$0xf]
    %v1608 = vld [vmem:[#allocation7 + $0x560] sm:$0xf]
    %v1609 = vld [vmem:[#allocation7 + $0x56c] sm:$0xf]
    %v1610 = vld [vmem:[#allocation7 + $0x578] sm:$0xf]
    %v1611 = vld [vmem:[#allocation7 + $0x584] sm:$0xf]
    %v1612 = vld [vmem:[#allocation7 + $0x590] sm:$0xf]
    %v1613 = vld [vmem:[#allocation7 + $0x59c] sm:$0xf]
    %v1614 = vld [vmem:[#allocation7 + $0x5a8] sm:$0xf]
    %v1615 = vld [vmem:[#allocation7 + $0x5b4] sm:$0xf]
    %v1616 = vld [vmem:[#allocation7 + $0x5c0] sm:$0xf]
    %v1617 = vld [vmem:[#allocation7 + $0x5cc] sm:$0xf]
    %v1618 = vld [vmem:[#allocation7 + $0x5d8] sm:$0xf]
    %v1619 = vld [vmem:[#allocation7 + $0x5e4] sm:$0xf]
    %v1620 = vld [vmem:[#allocation7 + $0x5f0] sm:$0xf]
    %v1621 = vld [vmem:[#allocation7 + $0x5fc] sm:$0xf]
    %v1626 = vcombine.high %v1490, %v1490
    %v1627 = vcombine.high %v1491, %v1491
    %v1628 = vcombine.high %v1492, %v1492
    %v1629 = vcombine.high %v1493, %v1493
    %v1634 = vpack.c.bf16 %v1490, %v1490
    %v1635 = vpack.c.bf16 %v1626, %v1626
    %v1636 = vpack.c.bf16 %v1491, %v1491
    %v1637 = vpack.c.bf16 %v1627, %v1627
    %v1638 = vpack.c.bf16 %v1492, %v1492
    %v1639 = vpack.c.bf16 %v1628, %v1628
    %v1640 = vpack.c.bf16 %v1493, %v1493
    %v1641 = vpack.c.bf16 %v1629, %v1629
    %v1642 = vlaneseq
    %v1643 = vshrl.u32 %v1642, 7
    %v1644 = vsub.s32 2, %v1643
    %v1645 = vrot.slane %v86, %v1644
    %v1774 = vunpack.c.l.b16 %v1494
    %v1775 = vunpack.c.l.b16 %v1495
    %v1776 = vunpack.c.l.b16 %v1496
    %v1777 = vunpack.c.l.b16 %v1497
    %v1778 = vunpack.c.l.b16 %v1498
    %v1779 = vunpack.c.l.b16 %v1499
    %v1780 = vunpack.c.l.b16 %v1500
    %v1781 = vunpack.c.l.b16 %v1501
    %v1782 = vunpack.c.l.b16 %v1502
    %v1783 = vunpack.c.l.b16 %v1503
    %v1784 = vunpack.c.l.b16 %v1504
    %v1785 = vunpack.c.l.b16 %v1505
    %v1786 = vunpack.c.l.b16 %v1506
    %v1787 = vunpack.c.l.b16 %v1507
    %v1788 = vunpack.c.l.b16 %v1508
    %v1789 = vunpack.c.l.b16 %v1509
    %v1790 = vunpack.c.l.b16 %v1510
    %v1791 = vunpack.c.l.b16 %v1511
    %v1792 = vunpack.c.l.b16 %v1512
    %v1793 = vunpack.c.l.b16 %v1513
    %v1794 = vunpack.c.l.b16 %v1514
    %v1795 = vunpack.c.l.b16 %v1515
    %v1796 = vunpack.c.l.b16 %v1516
    %v1797 = vunpack.c.l.b16 %v1517
    %v1798 = vunpack.c.l.b16 %v1518
    %v1799 = vunpack.c.l.b16 %v1519
    %v1800 = vunpack.c.l.b16 %v1520
    %v1801 = vunpack.c.l.b16 %v1521
    %v1802 = vunpack.c.l.b16 %v1522
    %v1803 = vunpack.c.l.b16 %v1523
    %v1804 = vunpack.c.l.b16 %v1524
    %v1805 = vunpack.c.l.b16 %v1525
    %v1806 = vunpack.c.l.b16 %v1526
    %v1807 = vunpack.c.l.b16 %v1527
    %v1808 = vunpack.c.l.b16 %v1528
    %v1809 = vunpack.c.l.b16 %v1529
    %v1810 = vunpack.c.l.b16 %v1530
    %v1811 = vunpack.c.l.b16 %v1531
    %v1812 = vunpack.c.l.b16 %v1532
    %v1813 = vunpack.c.l.b16 %v1533
    %v1814 = vunpack.c.l.b16 %v1534
    %v1815 = vunpack.c.l.b16 %v1535
    %v1816 = vunpack.c.l.b16 %v1536
    %v1817 = vunpack.c.l.b16 %v1537
    %v1818 = vunpack.c.l.b16 %v1538
    %v1819 = vunpack.c.l.b16 %v1539
    %v1820 = vunpack.c.l.b16 %v1540
    %v1821 = vunpack.c.l.b16 %v1541
    %v1822 = vunpack.c.l.b16 %v1542
    %v1823 = vunpack.c.l.b16 %v1543
    %v1824 = vunpack.c.l.b16 %v1544
    %v1825 = vunpack.c.l.b16 %v1545
    %v1826 = vunpack.c.l.b16 %v1546
    %v1827 = vunpack.c.l.b16 %v1547
    %v1828 = vunpack.c.l.b16 %v1548
    %v1829 = vunpack.c.l.b16 %v1549
    %v1830 = vunpack.c.l.b16 %v1550
    %v1831 = vunpack.c.l.b16 %v1551
    %v1832 = vunpack.c.l.b16 %v1552
    %v1833 = vunpack.c.l.b16 %v1553
    %v1834 = vunpack.c.l.b16 %v1554
    %v1835 = vunpack.c.l.b16 %v1555
    %v1836 = vunpack.c.l.b16 %v1556
    %v1837 = vunpack.c.l.b16 %v1557
    %v1838 = vunpack.c.l.b16 %v1558
    %v1839 = vunpack.c.l.b16 %v1559
    %v1840 = vunpack.c.l.b16 %v1560
    %v1841 = vunpack.c.l.b16 %v1561
    %v1842 = vunpack.c.l.b16 %v1562
    %v1843 = vunpack.c.l.b16 %v1563
    %v1844 = vunpack.c.l.b16 %v1564
    %v1845 = vunpack.c.l.b16 %v1565
    %v1846 = vunpack.c.l.b16 %v1566
    %v1847 = vunpack.c.l.b16 %v1567
    %v1848 = vunpack.c.l.b16 %v1568
    %v1849 = vunpack.c.l.b16 %v1569
    %v1850 = vunpack.c.l.b16 %v1570
    %v1851 = vunpack.c.l.b16 %v1571
    %v1852 = vunpack.c.l.b16 %v1572
    %v1853 = vunpack.c.l.b16 %v1573
    %v1854 = vunpack.c.l.b16 %v1574
    %v1855 = vunpack.c.l.b16 %v1575
    %v1856 = vunpack.c.l.b16 %v1576
    %v1857 = vunpack.c.l.b16 %v1577
    %v1858 = vunpack.c.l.b16 %v1578
    %v1859 = vunpack.c.l.b16 %v1579
    %v1860 = vunpack.c.l.b16 %v1580
    %v1861 = vunpack.c.l.b16 %v1581
    %v1862 = vunpack.c.l.b16 %v1582
    %v1863 = vunpack.c.l.b16 %v1583
    %v1864 = vunpack.c.l.b16 %v1584
    %v1865 = vunpack.c.l.b16 %v1585
    %v1866 = vunpack.c.l.b16 %v1586
    %v1867 = vunpack.c.l.b16 %v1587
    %v1868 = vunpack.c.l.b16 %v1588
    %v1869 = vunpack.c.l.b16 %v1589
    %v1870 = vunpack.c.l.b16 %v1590
    %v1871 = vunpack.c.l.b16 %v1591
    %v1872 = vunpack.c.l.b16 %v1592
    %v1873 = vunpack.c.l.b16 %v1593
    %v1874 = vunpack.c.l.b16 %v1594
    %v1875 = vunpack.c.l.b16 %v1595
    %v1876 = vunpack.c.l.b16 %v1596
    %v1877 = vunpack.c.l.b16 %v1597
    %v1878 = vunpack.c.l.b16 %v1598
    %v1879 = vunpack.c.l.b16 %v1599
    %v1880 = vunpack.c.l.b16 %v1600
    %v1881 = vunpack.c.l.b16 %v1601
    %v1882 = vunpack.c.l.b16 %v1602
    %v1883 = vunpack.c.l.b16 %v1603
    %v1884 = vunpack.c.l.b16 %v1604
    %v1885 = vunpack.c.l.b16 %v1605
    %v1886 = vunpack.c.l.b16 %v1606
    %v1887 = vunpack.c.l.b16 %v1607
    %v1888 = vunpack.c.l.b16 %v1608
    %v1889 = vunpack.c.l.b16 %v1609
    %v1890 = vunpack.c.l.b16 %v1610
    %v1891 = vunpack.c.l.b16 %v1611
    %v1892 = vunpack.c.l.b16 %v1612
    %v1893 = vunpack.c.l.b16 %v1613
    %v1894 = vunpack.c.l.b16 %v1614
    %v1895 = vunpack.c.l.b16 %v1615
    %v1896 = vunpack.c.l.b16 %v1616
    %v1897 = vunpack.c.l.b16 %v1617
    %v1898 = vunpack.c.l.b16 %v1618
    %v1899 = vunpack.c.l.b16 %v1619
    %v1900 = vunpack.c.l.b16 %v1620
    %v1901 = vunpack.c.l.b16 %v1621
    %v1902 = vpack.c.b16 %v1775, %v1774
    %v1903 = vpack.c.b16 %v1777, %v1776
    %v1904 = vpack.c.b16 %v1779, %v1778
    %v1905 = vpack.c.b16 %v1781, %v1780
    %v1906 = vpack.c.b16 %v1783, %v1782
    %v1907 = vpack.c.b16 %v1785, %v1784
    %v1908 = vpack.c.b16 %v1787, %v1786
    %v1909 = vpack.c.b16 %v1789, %v1788
    %v1910 = vpack.c.b16 %v1791, %v1790
    %v1911 = vpack.c.b16 %v1793, %v1792
    %v1912 = vpack.c.b16 %v1795, %v1794
    %v1913 = vpack.c.b16 %v1797, %v1796
    %v1914 = vpack.c.b16 %v1799, %v1798
    %v1915 = vpack.c.b16 %v1801, %v1800
    %v1916 = vpack.c.b16 %v1803, %v1802
    %v1917 = vpack.c.b16 %v1805, %v1804
    %v1918 = vpack.c.b16 %v1807, %v1806
    %v1919 = vpack.c.b16 %v1809, %v1808
    %v1920 = vpack.c.b16 %v1811, %v1810
    %v1921 = vpack.c.b16 %v1813, %v1812
    %v1922 = vpack.c.b16 %v1815, %v1814
    %v1923 = vpack.c.b16 %v1817, %v1816
    %v1924 = vpack.c.b16 %v1819, %v1818
    %v1925 = vpack.c.b16 %v1821, %v1820
    %v1926 = vpack.c.b16 %v1823, %v1822
    %v1927 = vpack.c.b16 %v1825, %v1824
    %v1928 = vpack.c.b16 %v1827, %v1826
    %v1929 = vpack.c.b16 %v1829, %v1828
    %v1930 = vpack.c.b16 %v1831, %v1830
    %v1931 = vpack.c.b16 %v1833, %v1832
    %v1932 = vpack.c.b16 %v1835, %v1834
    %v1933 = vpack.c.b16 %v1837, %v1836
    %v1934 = vpack.c.b16 %v1839, %v1838
    %v1935 = vpack.c.b16 %v1841, %v1840
    %v1936 = vpack.c.b16 %v1843, %v1842
    %v1937 = vpack.c.b16 %v1845, %v1844
    %v1938 = vpack.c.b16 %v1847, %v1846
    %v1939 = vpack.c.b16 %v1849, %v1848
    %v1940 = vpack.c.b16 %v1851, %v1850
    %v1941 = vpack.c.b16 %v1853, %v1852
    %v1942 = vpack.c.b16 %v1855, %v1854
    %v1943 = vpack.c.b16 %v1857, %v1856
    %v1944 = vpack.c.b16 %v1859, %v1858
    %v1945 = vpack.c.b16 %v1861, %v1860
    %v1946 = vpack.c.b16 %v1863, %v1862
    %v1947 = vpack.c.b16 %v1865, %v1864
    %v1948 = vpack.c.b16 %v1867, %v1866
    %v1949 = vpack.c.b16 %v1869, %v1868
    %v1950 = vpack.c.b16 %v1871, %v1870
    %v1951 = vpack.c.b16 %v1873, %v1872
    %v1952 = vpack.c.b16 %v1875, %v1874
    %v1953 = vpack.c.b16 %v1877, %v1876
    %v1954 = vpack.c.b16 %v1879, %v1878
    %v1955 = vpack.c.b16 %v1881, %v1880
    %v1956 = vpack.c.b16 %v1883, %v1882
    %v1957 = vpack.c.b16 %v1885, %v1884
    %v1958 = vpack.c.b16 %v1887, %v1886
    %v1959 = vpack.c.b16 %v1889, %v1888
    %v1960 = vpack.c.b16 %v1891, %v1890
    %v1961 = vpack.c.b16 %v1893, %v1892
    %v1962 = vpack.c.b16 %v1895, %v1894
    %v1963 = vpack.c.b16 %v1897, %v1896
    %v1964 = vpack.c.b16 %v1899, %v1898
    %v1965 = vpack.c.b16 %v1901, %v1900
    %2030 = vmatprep.subr.bf16.mxu0 0
    %2031 = vmatpush1.bf16.msra.mxu0 %v1902
    %2032 = vmatprep.subr.bf16.mxu0 0
    %2033 = vmatpush1.bf16.msra.mxu0 %v1903
    %2034 = vmatprep.subr.bf16.mxu0 0
    %2035 = vmatpush1.bf16.msra.mxu0 %v1904
    %2036 = vmatprep.subr.bf16.mxu0 0
    %2037 = vmatpush1.bf16.msra.mxu0 %v1905
    %2038 = vmatprep.subr.bf16.mxu0 0
    %2039 = vmatpush1.bf16.msra.mxu0 %v1906
    %2040 = vmatprep.subr.bf16.mxu0 0
    %2041 = vmatpush1.bf16.msra.mxu0 %v1907
    %2042 = vmatprep.subr.bf16.mxu0 0
    %2043 = vmatpush1.bf16.msra.mxu0 %v1908
    %2044 = vmatprep.subr.bf16.mxu0 0
    %2045 = vmatpush1.bf16.msra.mxu0 %v1909
    %2046 = vmatprep.subr.bf16.mxu0 0
    %2047 = vmatpush1.bf16.msra.mxu0 %v1910
    %2048 = vmatprep.subr.bf16.mxu0 0
    %2049 = vmatpush1.bf16.msra.mxu0 %v1911
    %2050 = vmatprep.subr.bf16.mxu0 0
    %2051 = vmatpush1.bf16.msra.mxu0 %v1912
    %2052 = vmatprep.subr.bf16.mxu0 0
    %2053 = vmatpush1.bf16.msra.mxu0 %v1913
    %2054 = vmatprep.subr.bf16.mxu0 0
    %2055 = vmatpush1.bf16.msra.mxu0 %v1914
    %2056 = vmatprep.subr.bf16.mxu0 0
    %2057 = vmatpush1.bf16.msra.mxu0 %v1915
    %2058 = vmatprep.subr.bf16.mxu0 0
    %2059 = vmatpush1.bf16.msra.mxu0 %v1916
    %2060 = vmatprep.subr.bf16.mxu0 0
    %2061 = vmatpush1.bf16.msra.mxu0 %v1917
    %2062 = vmatprep.mubr.bf16.mxu0 %v1635
    %2063 = vmatmul.mubr.bf16.gmra.mrb[0].mxu0 %v1634
    %v2064 = vpop.f32.mrb[0].mxu0
    %v2065 = vadd.f32 %v1645, %v2064
    %v2066 = vpop.f32.mrb[0].mxu0
    %v2067 = vpop.f32.mrb[0].mxu0
    %v2068 = vpop.f32.mrb[0].mxu0
    %2069 = vdwg.mxu0
    %2070 = vmatprep.subr.bf16.mxu0 0
    %2071 = vmatpush1.bf16.msra.mxu0 %v1918
    %2072 = vmatprep.subr.bf16.mxu0 0
    %2073 = vmatpush1.bf16.msra.mxu0 %v1919
    %2074 = vmatprep.subr.bf16.mxu0 0
    %2075 = vmatpush1.bf16.msra.mxu0 %v1920
    %2076 = vmatprep.subr.bf16.mxu0 0
    %2077 = vmatpush1.bf16.msra.mxu0 %v1921
    %2078 = vmatprep.subr.bf16.mxu0 0
    %2079 = vmatpush1.bf16.msra.mxu0 %v1922
    %2080 = vmatprep.subr.bf16.mxu0 0
    %2081 = vmatpush1.bf16.msra.mxu0 %v1923
    %2082 = vmatprep.subr.bf16.mxu0 0
    %2083 = vmatpush1.bf16.msra.mxu0 %v1924
    %2084 = vmatprep.subr.bf16.mxu0 0
    %2085 = vmatpush1.bf16.msra.mxu0 %v1925
    %2086 = vmatprep.subr.bf16.mxu0 0
    %2087 = vmatpush1.bf16.msra.mxu0 %v1926
    %2088 = vmatprep.subr.bf16.mxu0 0
    %2089 = vmatpush1.bf16.msra.mxu0 %v1927
    %2090 = vmatprep.subr.bf16.mxu0 0
    %2091 = vmatpush1.bf16.msra.mxu0 %v1928
    %2092 = vmatprep.subr.bf16.mxu0 0
    %2093 = vmatpush1.bf16.msra.mxu0 %v1929
    %2094 = vmatprep.subr.bf16.mxu0 0
    %2095 = vmatpush1.bf16.msra.mxu0 %v1930
    %2096 = vmatprep.subr.bf16.mxu0 0
    %2097 = vmatpush1.bf16.msra.mxu0 %v1931
    %2098 = vmatprep.subr.bf16.mxu0 0
    %2099 = vmatpush1.bf16.msra.mxu0 %v1932
    %2100 = vmatprep.subr.bf16.mxu0 0
    %2101 = vmatpush1.bf16.msra.mxu0 %v1933
    %2102 = vmatprep.mubr.bf16.mxu0 %v1637
    %2103 = vmatmul.mubr.bf16.gmra.mrb[0].mxu0 %v1636
    %v2104 = vpop.f32.mrb[0].mxu0
    %v2105 = vadd.f32 %v2065, %v2104
    %v2106 = vpop.f32.mrb[0].mxu0
    %v2107 = vpop.f32.mrb[0].mxu0
    %v2108 = vpop.f32.mrb[0].mxu0
    %2109 = vdwg.mxu0
    %2110 = vmatprep.subr.bf16.mxu0 0
    %2111 = vmatpush1.bf16.msra.mxu0 %v1934
    %2112 = vmatprep.subr.bf16.mxu0 0
    %2113 = vmatpush1.bf16.msra.mxu0 %v1935
    %2114 = vmatprep.subr.bf16.mxu0 0
    %2115 = vmatpush1.bf16.msra.mxu0 %v1936
    %2116 = vmatprep.subr.bf16.mxu0 0
    %2117 = vmatpush1.bf16.msra.mxu0 %v1937
    %2118 = vmatprep.subr.bf16.mxu0 0
    %2119 = vmatpush1.bf16.msra.mxu0 %v1938
    %2120 = vmatprep.subr.bf16.mxu0 0
    %2121 = vmatpush1.bf16.msra.mxu0 %v1939
    %2122 = vmatprep.subr.bf16.mxu0 0
    %2123 = vmatpush1.bf16.msra.mxu0 %v1940
    %2124 = vmatprep.subr.bf16.mxu0 0
    %2125 = vmatpush1.bf16.msra.mxu0 %v1941
    %2126 = vmatprep.subr.bf16.mxu0 0
    %2127 = vmatpush1.bf16.msra.mxu0 %v1942
    %2128 = vmatprep.subr.bf16.mxu0 0
    %2129 = vmatpush1.bf16.msra.mxu0 %v1943
    %2130 = vmatprep.subr.bf16.mxu0 0
    %2131 = vmatpush1.bf16.msra.mxu0 %v1944
    %2132 = vmatprep.subr.bf16.mxu0 0
    %2133 = vmatpush1.bf16.msra.mxu0 %v1945
    %2134 = vmatprep.subr.bf16.mxu0 0
    %2135 = vmatpush1.bf16.msra.mxu0 %v1946
    %2136 = vmatprep.subr.bf16.mxu0 0
    %2137 = vmatpush1.bf16.msra.mxu0 %v1947
    %2138 = vmatprep.subr.bf16.mxu0 0
    %2139 = vmatpush1.bf16.msra.mxu0 %v1948
    %2140 = vmatprep.subr.bf16.mxu0 0
    %2141 = vmatpush1.bf16.msra.mxu0 %v1949
    %2142 = vmatprep.mubr.bf16.mxu0 %v1639
    %2143 = vmatmul.mubr.bf16.gmra.mrb[0].mxu0 %v1638
    %v2144 = vpop.f32.mrb[0].mxu0
    %v2145 = vadd.f32 %v2105, %v2144
    %v2146 = vpop.f32.mrb[0].mxu0
    %v2147 = vpop.f32.mrb[0].mxu0
    %v2148 = vpop.f32.mrb[0].mxu0
    %2149 = vdwg.mxu0
    %2150 = vmatprep.subr.bf16.mxu0 0
    %2151 = vmatpush1.bf16.msra.mxu0 %v1950
    %2152 = vmatprep.subr.bf16.mxu0 0
    %2153 = vmatpush1.bf16.msra.mxu0 %v1951
    %2154 = vmatprep.subr.bf16.mxu0 0
    %2155 = vmatpush1.bf16.msra.mxu0 %v1952
    %2156 = vmatprep.subr.bf16.mxu0 0
    %2157 = vmatpush1.bf16.msra.mxu0 %v1953
    %2158 = vmatprep.subr.bf16.mxu0 0
    %2159 = vmatpush1.bf16.msra.mxu0 %v1954
    %2160 = vmatprep.subr.bf16.mxu0 0
    %2161 = vmatpush1.bf16.msra.mxu0 %v1955
    %2162 = vmatprep.subr.bf16.mxu0 0
    %2163 = vmatpush1.bf16.msra.mxu0 %v1956
    %2164 = vmatprep.subr.bf16.mxu0 0
    %2165 = vmatpush1.bf16.msra.mxu0 %v1957
    %2166 = vmatprep.subr.bf16.mxu0 0
    %2167 = vmatpush1.bf16.msra.mxu0 %v1958
    %2168 = vmatprep.subr.bf16.mxu0 0
    %2169 = vmatpush1.bf16.msra.mxu0 %v1959
    %2170 = vmatprep.subr.bf16.mxu0 0
    %2171 = vmatpush1.bf16.msra.mxu0 %v1960
    %2172 = vmatprep.subr.bf16.mxu0 0
    %2173 = vmatpush1.bf16.msra.mxu0 %v1961
    %2174 = vmatprep.subr.bf16.mxu0 0
    %2175 = vmatpush1.bf16.msra.mxu0 %v1962
    %2176 = vmatprep.subr.bf16.mxu0 0
    %2177 = vmatpush1.bf16.msra.mxu0 %v1963
    %2178 = vmatprep.subr.bf16.mxu0 0
    %2179 = vmatpush1.bf16.msra.mxu0 %v1964
    %2180 = vmatprep.subr.bf16.mxu0 0
    %2181 = vmatpush1.bf16.msra.mxu0 %v1965
    %2182 = vmatprep.mubr.bf16.mxu0 %v1641
    %2183 = vmatmul.mubr.bf16.gmra.mrb[0].mxu0 %v1640
    %v2184 = vpop.f32.mrb[0].mxu0
    %v2185 = vadd.f32 %v2145, %v2184
    %v2186 = vpop.f32.mrb[0].mxu0
    %v2187 = vpop.f32.mrb[0].mxu0
    %v2188 = vpop.f32.mrb[0].mxu0
    %2189 = vdwg.mxu0
    %v2190 = vmax.f32 %v2185, 0.0
    %v2191 = vld [vmem:[#allocation8] sm:$0xf]
    %v2192 = vld [vmem:[#allocation8 + $0x4] sm:$0xf]
    %v2193 = vld [vmem:[#allocation8 + $0x8] sm:$0xf]
    %v2194 = vld [vmem:[#allocation8 + $0xc] sm:$0xf]
    %v2195 = vld [vmem:[#allocation8 + $0x10] sm:$0xf]
    %v2196 = vld [vmem:[#allocation8 + $0x14] sm:$0xf]
    %v2197 = vld [vmem:[#allocation8 + $0x18] sm:$0xf]
    %v2198 = vld [vmem:[#allocation8 + $0x1c] sm:$0xf]
    %v2199 = vld [vmem:[#allocation8 + $0x20] sm:$0xf]
    %v2200 = vld [vmem:[#allocation8 + $0x24] sm:$0xf]
    %v2201 = vld [vmem:[#allocation8 + $0x28] sm:$0xf]
    %v2202 = vld [vmem:[#allocation8 + $0x2c] sm:$0xf]
    %v2203 = vld [vmem:[#allocation8 + $0x30] sm:$0xf]
    %v2204 = vld [vmem:[#allocation8 + $0x34] sm:$0xf]
    %v2205 = vld [vmem:[#allocation8 + $0x38] sm:$0xf]
    %v2206 = vld [vmem:[#allocation8 + $0x3c] sm:$0xf]
    %v2207 = vld [vmem:[#allocation8 + $0x40] sm:$0xf]
    %v2208 = vld [vmem:[#allocation8 + $0x44] sm:$0xf]
    %v2209 = vld [vmem:[#allocation8 + $0x48] sm:$0xf]
    %v2210 = vld [vmem:[#allocation8 + $0x4c] sm:$0xf]
    %v2211 = vld [vmem:[#allocation8 + $0x50] sm:$0xf]
    %v2212 = vld [vmem:[#allocation8 + $0x54] sm:$0xf]
    %v2213 = vld [vmem:[#allocation8 + $0x58] sm:$0xf]
    %v2214 = vld [vmem:[#allocation8 + $0x5c] sm:$0xf]
    %v2215 = vld [vmem:[#allocation8 + $0x60] sm:$0xf]
    %v2216 = vld [vmem:[#allocation8 + $0x64] sm:$0xf]
    %v2217 = vld [vmem:[#allocation8 + $0x68] sm:$0xf]
    %v2218 = vld [vmem:[#allocation8 + $0x6c] sm:$0xf]
    %v2219 = vld [vmem:[#allocation8 + $0x70] sm:$0xf]
    %v2220 = vld [vmem:[#allocation8 + $0x74] sm:$0xf]
    %v2221 = vld [vmem:[#allocation8 + $0x78] sm:$0xf]
    %v2222 = vld [vmem:[#allocation8 + $0x7c] sm:$0xf]
    %v2223 = vld [vmem:[#allocation8 + $0x80] sm:$0xf]
    %v2224 = vld [vmem:[#allocation8 + $0x84] sm:$0xf]
    %v2225 = vld [vmem:[#allocation8 + $0x88] sm:$0xf]
    %v2226 = vld [vmem:[#allocation8 + $0x8c] sm:$0xf]
    %v2227 = vld [vmem:[#allocation8 + $0x90] sm:$0xf]
    %v2228 = vld [vmem:[#allocation8 + $0x94] sm:$0xf]
    %v2229 = vld [vmem:[#allocation8 + $0x98] sm:$0xf]
    %v2230 = vld [vmem:[#allocation8 + $0x9c] sm:$0xf]
    %v2231 = vld [vmem:[#allocation8 + $0xa0] sm:$0xf]
    %v2232 = vld [vmem:[#allocation8 + $0xa4] sm:$0xf]
    %v2233 = vld [vmem:[#allocation8 + $0xa8] sm:$0xf]
    %v2234 = vld [vmem:[#allocation8 + $0xac] sm:$0xf]
    %v2235 = vld [vmem:[#allocation8 + $0xb0] sm:$0xf]
    %v2236 = vld [vmem:[#allocation8 + $0xb4] sm:$0xf]
    %v2237 = vld [vmem:[#allocation8 + $0xb8] sm:$0xf]
    %v2238 = vld [vmem:[#allocation8 + $0xbc] sm:$0xf]
    %v2239 = vpack.c.bf16 %v788, %v788
    %v2240 = vpack.c.bf16 %v1489, %v1489
    %v2241 = vpack.c.bf16 %v2190, %v2190
    %v2242 = vlaneseq
    %v2243 = vshrl.u32 %v2242, 7
    %v2244 = vsub.s32 3, %v2243
    %v2245 = vrot.slane %v86, %v2244
    %v2294 = vunpack.c.l.b16 %v2191
    %v2295 = vunpack.c.l.b16 %v2192
    %v2296 = vunpack.c.l.b16 %v2193
    %v2297 = vunpack.c.l.b16 %v2194
    %v2298 = vunpack.c.l.b16 %v2195
    %v2299 = vunpack.c.l.b16 %v2196
    %v2300 = vunpack.c.l.b16 %v2197
    %v2301 = vunpack.c.l.b16 %v2198
    %v2302 = vunpack.c.l.b16 %v2199
    %v2303 = vunpack.c.l.b16 %v2200
    %v2304 = vunpack.c.l.b16 %v2201
    %v2305 = vunpack.c.l.b16 %v2202
    %v2306 = vunpack.c.l.b16 %v2203
    %v2307 = vunpack.c.l.b16 %v2204
    %v2308 = vunpack.c.l.b16 %v2205
    %v2309 = vunpack.c.l.b16 %v2206
    %v2310 = vunpack.c.l.b16 %v2207
    %v2311 = vunpack.c.l.b16 %v2208
    %v2312 = vunpack.c.l.b16 %v2209
    %v2313 = vunpack.c.l.b16 %v2210
    %v2314 = vunpack.c.l.b16 %v2211
    %v2315 = vunpack.c.l.b16 %v2212
    %v2316 = vunpack.c.l.b16 %v2213
    %v2317 = vunpack.c.l.b16 %v2214
    %v2318 = vunpack.c.l.b16 %v2215
    %v2319 = vunpack.c.l.b16 %v2216
    %v2320 = vunpack.c.l.b16 %v2217
    %v2321 = vunpack.c.l.b16 %v2218
    %v2322 = vunpack.c.l.b16 %v2219
    %v2323 = vunpack.c.l.b16 %v2220
    %v2324 = vunpack.c.l.b16 %v2221
    %v2325 = vunpack.c.l.b16 %v2222
    %v2326 = vunpack.c.l.b16 %v2223
    %v2327 = vunpack.c.l.b16 %v2224
    %v2328 = vunpack.c.l.b16 %v2225
    %v2329 = vunpack.c.l.b16 %v2226
    %v2330 = vunpack.c.l.b16 %v2227
    %v2331 = vunpack.c.l.b16 %v2228
    %v2332 = vunpack.c.l.b16 %v2229
    %v2333 = vunpack.c.l.b16 %v2230
    %v2334 = vunpack.c.l.b16 %v2231
    %v2335 = vunpack.c.l.b16 %v2232
    %v2336 = vunpack.c.l.b16 %v2233
    %v2337 = vunpack.c.l.b16 %v2234
    %v2338 = vunpack.c.l.b16 %v2235
    %v2339 = vunpack.c.l.b16 %v2236
    %v2340 = vunpack.c.l.b16 %v2237
    %v2341 = vunpack.c.l.b16 %v2238
    %v2342 = vpack.c.b16 %v2295, %v2294
    %v2343 = vpack.c.b16 %v2297, %v2296
    %v2344 = vpack.c.b16 %v2299, %v2298
    %v2345 = vpack.c.b16 %v2301, %v2300
    %v2346 = vpack.c.b16 %v2303, %v2302
    %v2347 = vpack.c.b16 %v2305, %v2304
    %v2348 = vpack.c.b16 %v2307, %v2306
    %v2349 = vpack.c.b16 %v2309, %v2308
    %v2350 = vpack.c.b16 %v2311, %v2310
    %v2351 = vpack.c.b16 %v2313, %v2312
    %v2352 = vpack.c.b16 %v2315, %v2314
    %v2353 = vpack.c.b16 %v2317, %v2316
    %v2354 = vpack.c.b16 %v2319, %v2318
    %v2355 = vpack.c.b16 %v2321, %v2320
    %v2356 = vpack.c.b16 %v2323, %v2322
    %v2357 = vpack.c.b16 %v2325, %v2324
    %v2358 = vpack.c.b16 %v2327, %v2326
    %v2359 = vpack.c.b16 %v2329, %v2328
    %v2360 = vpack.c.b16 %v2331, %v2330
    %v2361 = vpack.c.b16 %v2333, %v2332
    %v2362 = vpack.c.b16 %v2335, %v2334
    %v2363 = vpack.c.b16 %v2337, %v2336
    %v2364 = vpack.c.b16 %v2339, %v2338
    %v2365 = vpack.c.b16 %v2341, %v2340
    %2390 = vmatprep.subr.bf16.mxu0 0
    %2391 = vmatpush1.bf16.msra.mxu0 %v2342
    %2392 = vmatprep.subr.bf16.mxu0 0
    %2393 = vmatpush1.bf16.msra.mxu0 %v2343
    %2394 = vmatprep.subr.bf16.mxu0 0
    %2395 = vmatpush1.bf16.msra.mxu0 %v2344
    %2396 = vmatprep.subr.bf16.mxu0 0
    %2397 = vmatpush1.bf16.msra.mxu0 %v2345
    %2398 = vmatprep.subr.bf16.mxu0 0
    %2399 = vmatpush1.bf16.msra.mxu0 %v2346
    %2400 = vmatprep.subr.bf16.mxu0 0
    %2401 = vmatpush1.bf16.msra.mxu0 %v2347
    %2402 = vmatprep.subr.bf16.mxu0 0
    %2403 = vmatpush1.bf16.msra.mxu0 %v2348
    %2404 = vmatprep.subr.bf16.mxu0 0
    %2405 = vmatpush1.bf16.msra.mxu0 %v2349
    %2406 = vmatprep.subr.bf16.mxu0 0
    %2407 = vmatpush1.bf16.msra.mxu0 %v2350
    %2408 = vmatprep.subr.bf16.mxu0 0
    %2409 = vmatpush1.bf16.msra.mxu0 %v2351
    %2410 = vmatprep.subr.bf16.mxu0 0
    %2411 = vmatpush1.bf16.msra.mxu0 %v2352
    %2412 = vmatprep.subr.bf16.mxu0 0
    %2413 = vmatpush1.bf16.msra.mxu0 %v2353
    %2414 = vmatprep.subr.bf16.mxu0 0
    %2415 = vmatpush1.bf16.msra.mxu0 %v2354
    %2416 = vmatprep.subr.bf16.mxu0 0
    %2417 = vmatpush1.bf16.msra.mxu0 %v2355
    %2418 = vmatprep.subr.bf16.mxu0 0
    %2419 = vmatpush1.bf16.msra.mxu0 %v2356
    %2420 = vmatprep.subr.bf16.mxu0 0
    %2421 = vmatpush1.bf16.msra.mxu0 %v2357
    %2422 = vmatprep.mubr.bf16.mxu0 %v2240
    %2423 = vmatmul.mubr.bf16.gmra.mrb[0].mxu0 %v2239
    %v2424 = vpop.f32.mrb[0].mxu0
    %v2425 = vadd.f32 %v2245, %v2424
    %v2426 = vpop.f32.mrb[0].mxu0
    %v2427 = vpop.f32.mrb[0].mxu0
    %v2428 = vpop.f32.mrb[0].mxu0
    %2429 = vdwg.mxu0
    %2430 = vmatprep.subr.bf16.mxu0 0
    %2431 = vmatpush1.bf16.msra.mxu0 %v2358
    %2432 = vmatprep.subr.bf16.mxu0 0
    %2433 = vmatpush1.bf16.msra.mxu0 %v2359
    %2434 = vmatprep.subr.bf16.mxu0 0
    %2435 = vmatpush1.bf16.msra.mxu0 %v2360
    %2436 = vmatprep.subr.bf16.mxu0 0
    %2437 = vmatpush1.bf16.msra.mxu0 %v2361
    %2438 = vmatprep.subr.bf16.mxu0 0
    %2439 = vmatpush1.bf16.msra.mxu0 %v2362
    %2440 = vmatprep.subr.bf16.mxu0 0
    %2441 = vmatpush1.bf16.msra.mxu0 %v2363
    %2442 = vmatprep.subr.bf16.mxu0 0
    %2443 = vmatpush1.bf16.msra.mxu0 %v2364
    %2444 = vmatprep.subr.bf16.mxu0 0
    %2445 = vmatpush1.bf16.msra.mxu0 %v2365
    %2446 = vmatprep.subr.bf16.mxu0 0
    %2447 = vmatpush1.bf16.msra.mxu0 0
    %2448 = vmatprep.subr.bf16.mxu0 0
    %2449 = vmatpush1.bf16.msra.mxu0 0
    %2450 = vmatprep.subr.bf16.mxu0 0
    %2451 = vmatpush1.bf16.msra.mxu0 0
    %2452 = vmatprep.subr.bf16.mxu0 0
    %2453 = vmatpush1.bf16.msra.mxu0 0
    %2454 = vmatprep.subr.bf16.mxu0 0
    %2455 = vmatpush1.bf16.msra.mxu0 0
    %2456 = vmatprep.subr.bf16.mxu0 0
    %2457 = vmatpush1.bf16.msra.mxu0 0
    %2458 = vmatprep.subr.bf16.mxu0 0
    %2459 = vmatpush1.bf16.msra.mxu0 0
    %2460 = vmatprep.subr.bf16.mxu0 0
    %2461 = vmatpush1.bf16.msra.mxu0 0
    %2462 = vmatprep.mubr.bf16.mxu0 0
    %2463 = vmatmul.mubr.bf16.gmra.mrb[0].mxu0 %v2241
    %v2464 = vpop.f32.mrb[0].mxu0
    %v2465 = vadd.f32 %v2425, %v2464
    %v2466 = vpop.f32.mrb[0].mxu0
    %v2467 = vpop.f32.mrb[0].mxu0
    %v2468 = vpop.f32.mrb[0].mxu0
    %2469 = vdwg.mxu0
    %v2470 = vmax.f32 %v2465, 0.0
    %v2471 = vld [vmem:[#allocation8 + $0xc0] sm:$0xf]
    %v2472 = vld [vmem:[#allocation8 + $0xc4] sm:$0xf]
    %v2473 = vld [vmem:[#allocation8 + $0xc8] sm:$0xf]
    %v2474 = vld [vmem:[#allocation8 + $0xcc] sm:$0xf]
    %v2475 = vld [vmem:[#allocation8 + $0xd0] sm:$0xf]
    %v2476 = vld [vmem:[#allocation8 + $0xd4] sm:$0xf]
    %v2477 = vld [vmem:[#allocation8 + $0xd8] sm:$0xf]
    %v2478 = vld [vmem:[#allocation8 + $0xdc] sm:$0xf]
    %v2479 = vld [vmem:[#allocation8 + $0xe0] sm:$0xf]
    %v2480 = vld [vmem:[#allocation8 + $0xe4] sm:$0xf]
    %v2481 = vld [vmem:[#allocation8 + $0xe8] sm:$0xf]
    %v2482 = vld [vmem:[#allocation8 + $0xec] sm:$0xf]
    %v2483 = vld [vmem:[#allocation8 + $0xf0] sm:$0xf]
    %v2484 = vld [vmem:[#allocation8 + $0xf4] sm:$0xf]
    %v2485 = vld [vmem:[#allocation8 + $0xf8] sm:$0xf]
    %v2486 = vld [vmem:[#allocation8 + $0xfc] sm:$0xf]
    %v2487 = vpack.c.bf16 %v2470, %v2470
    %v2488 = vlaneseq
    %v2489 = vshrl.u32 %v2488, 7
    %v2490 = vsub.s32 4, %v2489
    %v2491 = vrot.slane %v86, %v2490
    %v2508 = vunpack.c.l.b16 %v2471
    %v2509 = vunpack.c.l.b16 %v2472
    %v2510 = vunpack.c.l.b16 %v2473
    %v2511 = vunpack.c.l.b16 %v2474
    %v2512 = vunpack.c.l.b16 %v2475
    %v2513 = vunpack.c.l.b16 %v2476
    %v2514 = vunpack.c.l.b16 %v2477
    %v2515 = vunpack.c.l.b16 %v2478
    %v2516 = vunpack.c.l.b16 %v2479
    %v2517 = vunpack.c.l.b16 %v2480
    %v2518 = vunpack.c.l.b16 %v2481
    %v2519 = vunpack.c.l.b16 %v2482
    %v2520 = vunpack.c.l.b16 %v2483
    %v2521 = vunpack.c.l.b16 %v2484
    %v2522 = vunpack.c.l.b16 %v2485
    %v2523 = vunpack.c.l.b16 %v2486
    %v2524 = vpack.c.b16 %v2509, %v2508
    %v2525 = vpack.c.b16 %v2511, %v2510
    %v2526 = vpack.c.b16 %v2513, %v2512
    %v2527 = vpack.c.b16 %v2515, %v2514
    %v2528 = vpack.c.b16 %v2517, %v2516
    %v2529 = vpack.c.b16 %v2519, %v2518
    %v2530 = vpack.c.b16 %v2521, %v2520
    %v2531 = vpack.c.b16 %v2523, %v2522
    %2540 = vmatprep.subr.bf16.mxu0 0
    %2541 = vmatpush1.bf16.msra.mxu0 %v2524
    %2542 = vmatprep.subr.bf16.mxu0 0
    %2543 = vmatpush1.bf16.msra.mxu0 %v2525
    %2544 = vmatprep.subr.bf16.mxu0 0
    %2545 = vmatpush1.bf16.msra.mxu0 %v2526
    %2546 = vmatprep.subr.bf16.mxu0 0
    %2547 = vmatpush1.bf16.msra.mxu0 %v2527
    %2548 = vmatprep.subr.bf16.mxu0 0
    %2549 = vmatpush1.bf16.msra.mxu0 %v2528
    %2550 = vmatprep.subr.bf16.mxu0 0
    %2551 = vmatpush1.bf16.msra.mxu0 %v2529
    %2552 = vmatprep.subr.bf16.mxu0 0
    %2553 = vmatpush1.bf16.msra.mxu0 %v2530
    %2554 = vmatprep.subr.bf16.mxu0 0
    %2555 = vmatpush1.bf16.msra.mxu0 %v2531
    %2556 = vmatprep.subr.bf16.mxu0 0
    %2557 = vmatpush1.bf16.msra.mxu0 0
    %2558 = vmatprep.subr.bf16.mxu0 0
    %2559 = vmatpush1.bf16.msra.mxu0 0
    %2560 = vmatprep.subr.bf16.mxu0 0
    %2561 = vmatpush1.bf16.msra.mxu0 0
    %2562 = vmatprep.subr.bf16.mxu0 0
    %2563 = vmatpush1.bf16.msra.mxu0 0
    %2564 = vmatprep.subr.bf16.mxu0 0
    %2565 = vmatpush1.bf16.msra.mxu0 0
    %2566 = vmatprep.subr.bf16.mxu0 0
    %2567 = vmatpush1.bf16.msra.mxu0 0
    %2568 = vmatprep.subr.bf16.mxu0 0
    %2569 = vmatpush1.bf16.msra.mxu0 0
    %2570 = vmatprep.subr.bf16.mxu0 0
    %2571 = vmatpush1.bf16.msra.mxu0 0
    %2572 = vmatprep.mubr.bf16.mxu0 0
    %2573 = vmatmul.mubr.bf16.gmra.mrb[0].mxu0 %v2487
    %v2574 = vpop.f32.mrb[0].mxu0
    %v2575 = vadd.f32 %v2491, %v2574
    %v2576 = vpop.f32.mrb[0].mxu0
    %v2577 = vpop.f32.mrb[0].mxu0
    %v2578 = vpop.f32.mrb[0].mxu0
    %2579 = vdwg.mxu0
    %v2580 = vmax.f32 %v2575, 0.0
    %v2581 = vld [vmem:[#allocation5] sm:$0xf]
    %v2582 = vld [vmem:[#allocation8 + $0x100] sm:$0xf]
    %v2583 = vpack.c.bf16 %v2581, %v2581
    %v2584 = vlaneseq
    %v2585 = vshrl.u32 %v2584, 7
    %v2586 = vsub.s32 5, %v2585
    %v2587 = vrot.slane %v86, %v2586
    %vm2588 = vcmask 64512
    %v2590 = vsel %vm2588, %v2583, 0
    %vm2592 = vcmask 1043456
    %v2594 = vsel %vm2592, %v2582, 0
    %2596 = vmatprep.subr.bf16.mxu0 0
    %2597 = vmatpush1.bf16.msra.mxu0 %v2594
    %2598 = vmatprep.subr.bf16.mxu0 0
    %2599 = vmatpush1.bf16.msra.mxu0 0
    %2600 = vmatprep.subr.bf16.mxu0 0
    %2601 = vmatpush1.bf16.msra.mxu0 0
    %2602 = vmatprep.subr.bf16.mxu0 0
    %2603 = vmatpush1.bf16.msra.mxu0 0
    %2604 = vmatprep.subr.bf16.mxu0 0
    %2605 = vmatpush1.bf16.msra.mxu0 0
    %2606 = vmatprep.subr.bf16.mxu0 0
    %2607 = vmatpush1.bf16.msra.mxu0 0
    %2608 = vmatprep.subr.bf16.mxu0 0
    %2609 = vmatpush1.bf16.msra.mxu0 0
    %2610 = vmatprep.subr.bf16.mxu0 0
    %2611 = vmatpush1.bf16.msra.mxu0 0
    %2612 = vmatprep.subr.bf16.mxu0 0
    %2613 = vmatpush1.bf16.msra.mxu0 0
    %2614 = vmatprep.subr.bf16.mxu0 0
    %2615 = vmatpush1.bf16.msra.mxu0 0
    %2616 = vmatprep.subr.bf16.mxu0 0
    %2617 = vmatpush1.bf16.msra.mxu0 0
    %2618 = vmatprep.subr.bf16.mxu0 0
    %2619 = vmatpush1.bf16.msra.mxu0 0
    %2620 = vmatprep.subr.bf16.mxu0 0
    %2621 = vmatpush1.bf16.msra.mxu0 0
    %2622 = vmatprep.subr.bf16.mxu0 0
    %2623 = vmatpush1.bf16.msra.mxu0 0
    %2624 = vmatprep.subr.bf16.mxu0 0
    %2625 = vmatpush1.bf16.msra.mxu0 0
    %2626 = vmatprep.subr.bf16.mxu0 0
    %2627 = vmatpush1.bf16.msra.mxu0 0
    %2628 = vmatprep.mubr.bf16.mxu0 0
    %2629 = vmatmul.mubr.bf16.gmra.mrb[0].mxu0 %v2590
    %v2630 = vpop.f32.mrb[0].mxu0
    %v2631 = vadd.f32 %v2587, %v2630
    %v2632 = vpop.f32.mrb[0].mxu0
    %v2633 = vpop.f32.mrb[0].mxu0
    %v2634 = vpop.f32.mrb[0].mxu0
    %2635 = vdwg.mxu0
    %v2636 = vmax.f32 %v2631, 0.0
    %v2637 = vld [vmem:[#allocation8 + $0x104] sm:$0xf]
    %v2638 = vld [vmem:[#allocation8 + $0x108] sm:$0xf]
    %v2639 = vld [vmem:[#allocation8 + $0x10c] sm:$0xf]
    %v2640 = vld [vmem:[#allocation8 + $0x110] sm:$0xf]
    %v2641 = vld [vmem:[#allocation8 + $0x114] sm:$0xf]
    %v2642 = vld [vmem:[#allocation8 + $0x118] sm:$0xf]
    %v2643 = vld [vmem:[#allocation8 + $0x11c] sm:$0xf]
    %v2644 = vld [vmem:[#allocation8 + $0x120] sm:$0xf]
    %v2645 = vld [vmem:[#allocation8 + $0x124] sm:$0xf]
    %v2646 = vld [vmem:[#allocation8 + $0x128] sm:$0xf]
    %v2647 = vld [vmem:[#allocation8 + $0x12c] sm:$0xf]
    %v2648 = vld [vmem:[#allocation8 + $0x130] sm:$0xf]
    %v2649 = vld [vmem:[#allocation8 + $0x134] sm:$0xf]
    %v2650 = vld [vmem:[#allocation8 + $0x138] sm:$0xf]
    %v2651 = vld [vmem:[#allocation8 + $0x13c] sm:$0xf]
    %v2652 = vld [vmem:[#allocation8 + $0x140] sm:$0xf]
    %v2653 = vpack.c.bf16 %v2636, %v2636
    %v2654 = vlaneseq
    %v2655 = vshrl.u32 %v2654, 7
    %v2656 = vsub.s32 6, %v2655
    %v2657 = vrot.slane %v86, %v2656
    %v2674 = vunpack.c.l.b16 %v2637
    %v2675 = vunpack.c.l.b16 %v2638
    %v2676 = vunpack.c.l.b16 %v2639
    %v2677 = vunpack.c.l.b16 %v2640
    %v2678 = vunpack.c.l.b16 %v2641
    %v2679 = vunpack.c.l.b16 %v2642
    %v2680 = vunpack.c.l.b16 %v2643
    %v2681 = vunpack.c.l.b16 %v2644
    %v2682 = vunpack.c.l.b16 %v2645
    %v2683 = vunpack.c.l.b16 %v2646
    %v2684 = vunpack.c.l.b16 %v2647
    %v2685 = vunpack.c.l.b16 %v2648
    %v2686 = vunpack.c.l.b16 %v2649
    %v2687 = vunpack.c.l.b16 %v2650
    %v2688 = vunpack.c.l.b16 %v2651
    %v2689 = vunpack.c.l.b16 %v2652
    %v2690 = vpack.c.b16 %v2675, %v2674
    %v2691 = vpack.c.b16 %v2677, %v2676
    %v2692 = vpack.c.b16 %v2679, %v2678
    %v2693 = vpack.c.b16 %v2681, %v2680
    %v2694 = vpack.c.b16 %v2683, %v2682
    %v2695 = vpack.c.b16 %v2685, %v2684
    %v2696 = vpack.c.b16 %v2687, %v2686
    %v2697 = vpack.c.b16 %v2689, %v2688
    %2706 = vmatprep.subr.bf16.mxu0 0
    %2707 = vmatpush1.bf16.msra.mxu0 %v2690
    %2708 = vmatprep.subr.bf16.mxu0 0
    %2709 = vmatpush1.bf16.msra.mxu0 %v2691
    %2710 = vmatprep.subr.bf16.mxu0 0
    %2711 = vmatpush1.bf16.msra.mxu0 %v2692
    %2712 = vmatprep.subr.bf16.mxu0 0
    %2713 = vmatpush1.bf16.msra.mxu0 %v2693
    %2714 = vmatprep.subr.bf16.mxu0 0
    %2715 = vmatpush1.bf16.msra.mxu0 %v2694
    %2716 = vmatprep.subr.bf16.mxu0 0
    %2717 = vmatpush1.bf16.msra.mxu0 %v2695
    %2718 = vmatprep.subr.bf16.mxu0 0
    %2719 = vmatpush1.bf16.msra.mxu0 %v2696
    %2720 = vmatprep.subr.bf16.mxu0 0
    %2721 = vmatpush1.bf16.msra.mxu0 %v2697
    %2722 = vmatprep.subr.bf16.mxu0 0
    %2723 = vmatpush1.bf16.msra.mxu0 0
    %2724 = vmatprep.subr.bf16.mxu0 0
    %2725 = vmatpush1.bf16.msra.mxu0 0
    %2726 = vmatprep.subr.bf16.mxu0 0
    %2727 = vmatpush1.bf16.msra.mxu0 0
    %2728 = vmatprep.subr.bf16.mxu0 0
    %2729 = vmatpush1.bf16.msra.mxu0 0
    %2730 = vmatprep.subr.bf16.mxu0 0
    %2731 = vmatpush1.bf16.msra.mxu0 0
    %2732 = vmatprep.subr.bf16.mxu0 0
    %2733 = vmatpush1.bf16.msra.mxu0 0
    %2734 = vmatprep.subr.bf16.mxu0 0
    %2735 = vmatpush1.bf16.msra.mxu0 0
    %2736 = vmatprep.subr.bf16.mxu0 0
    %2737 = vmatpush1.bf16.msra.mxu0 0
    %2738 = vmatprep.mubr.bf16.mxu0 0
    %2739 = vmatmul.mubr.bf16.gmra.mrb[0].mxu0 %v2653
    %v2740 = vpop.f32.mrb[0].mxu0
    %v2741 = vadd.f32 %v2657, %v2740
    %v2742 = vpop.f32.mrb[0].mxu0
    %v2743 = vpop.f32.mrb[0].mxu0
    %v2744 = vpop.f32.mrb[0].mxu0
    %2745 = vdwg.mxu0
    %v2746 = vmax.f32 %v2741, 0.0
    %v2747 = vadd.f32 %v2746, %v2580
    %v2748 = vld [vmem:[#allocation8 + $0x144] sm:$0xf]
    %v2749 = vld [vmem:[#allocation8 + $0x148] sm:$0xf]
    %v2750 = vld [vmem:[#allocation8 + $0x14c] sm:$0xf]
    %v2751 = vld [vmem:[#allocation8 + $0x150] sm:$0xf]
    %v2752 = vld [vmem:[#allocation8 + $0x154] sm:$0xf]
    %v2753 = vld [vmem:[#allocation8 + $0x158] sm:$0xf]
    %v2754 = vld [vmem:[#allocation8 + $0x15c] sm:$0xf]
    %v2755 = vld [vmem:[#allocation8 + $0x160] sm:$0xf]
    %v2756 = vld [vmem:[#allocation8 + $0x164] sm:$0xf]
    %v2757 = vld [vmem:[#allocation8 + $0x168] sm:$0xf]
    %v2758 = vld [vmem:[#allocation8 + $0x16c] sm:$0xf]
    %v2759 = vld [vmem:[#allocation8 + $0x170] sm:$0xf]
    %v2760 = vld [vmem:[#allocation8 + $0x174] sm:$0xf]
    %v2761 = vld [vmem:[#allocation8 + $0x178] sm:$0xf]
    %v2762 = vld [vmem:[#allocation8 + $0x17c] sm:$0xf]
    %v2763 = vld [vmem:[#allocation8 + $0x180] sm:$0xf]
    %v2764 = vpack.c.bf16 %v2747, %v2747
    %v2765 = vlaneseq
    %v2766 = vshrl.u32 %v2765, 7
    %v2767 = vsub.s32 7, %v2766
    %v2768 = vrot.slane %v86, %v2767
    %v2785 = vunpack.c.l.b16 %v2748
    %v2786 = vunpack.c.l.b16 %v2749
    %v2787 = vunpack.c.l.b16 %v2750
    %v2788 = vunpack.c.l.b16 %v2751
    %v2789 = vunpack.c.l.b16 %v2752
    %v2790 = vunpack.c.l.b16 %v2753
    %v2791 = vunpack.c.l.b16 %v2754
    %v2792 = vunpack.c.l.b16 %v2755
    %v2793 = vunpack.c.l.b16 %v2756
    %v2794 = vunpack.c.l.b16 %v2757
    %v2795 = vunpack.c.l.b16 %v2758
    %v2796 = vunpack.c.l.b16 %v2759
    %v2797 = vunpack.c.l.b16 %v2760
    %v2798 = vunpack.c.l.b16 %v2761
    %v2799 = vunpack.c.l.b16 %v2762
    %v2800 = vunpack.c.l.b16 %v2763
    %v2801 = vpack.c.b16 %v2786, %v2785
    %v2802 = vpack.c.b16 %v2788, %v2787
    %v2803 = vpack.c.b16 %v2790, %v2789
    %v2804 = vpack.c.b16 %v2792, %v2791
    %v2805 = vpack.c.b16 %v2794, %v2793
    %v2806 = vpack.c.b16 %v2796, %v2795
    %v2807 = vpack.c.b16 %v2798, %v2797
    %v2808 = vpack.c.b16 %v2800, %v2799
    %2817 = vmatprep.subr.bf16.mxu0 0
    %2818 = vmatpush1.bf16.msra.mxu0 %v2801
    %2819 = vmatprep.subr.bf16.mxu0 0
    %2820 = vmatpush1.bf16.msra.mxu0 %v2802
    %2821 = vmatprep.subr.bf16.mxu0 0
    %2822 = vmatpush1.bf16.msra.mxu0 %v2803
    %2823 = vmatprep.subr.bf16.mxu0 0
    %2824 = vmatpush1.bf16.msra.mxu0 %v2804
    %2825 = vmatprep.subr.bf16.mxu0 0
    %2826 = vmatpush1.bf16.msra.mxu0 %v2805
    %2827 = vmatprep.subr.bf16.mxu0 0
    %2828 = vmatpush1.bf16.msra.mxu0 %v2806
    %2829 = vmatprep.subr.bf16.mxu0 0
    %2830 = vmatpush1.bf16.msra.mxu0 %v2807
    %2831 = vmatprep.subr.bf16.mxu0 0
    %2832 = vmatpush1.bf16.msra.mxu0 %v2808
    %2833 = vmatprep.subr.bf16.mxu0 0
    %2834 = vmatpush1.bf16.msra.mxu0 0
    %2835 = vmatprep.subr.bf16.mxu0 0
    %2836 = vmatpush1.bf16.msra.mxu0 0
    %2837 = vmatprep.subr.bf16.mxu0 0
    %2838 = vmatpush1.bf16.msra.mxu0 0
    %2839 = vmatprep.subr.bf16.mxu0 0
    %2840 = vmatpush1.bf16.msra.mxu0 0
    %2841 = vmatprep.subr.bf16.mxu0 0
    %2842 = vmatpush1.bf16.msra.mxu0 0
    %2843 = vmatprep.subr.bf16.mxu0 0
    %2844 = vmatpush1.bf16.msra.mxu0 0
    %2845 = vmatprep.subr.bf16.mxu0 0
    %2846 = vmatpush1.bf16.msra.mxu0 0
    %2847 = vmatprep.subr.bf16.mxu0 0
    %2848 = vmatpush1.bf16.msra.mxu0 0
    %2849 = vmatprep.mubr.bf16.mxu0 0
    %2850 = vmatmul.mubr.bf16.gmra.mrb[0].mxu0 %v2764
    %v2851 = vpop.f32.mrb[0].mxu0
    %v2852 = vadd.f32 %v2768, %v2851
    %v2853 = vpop.f32.mrb[0].mxu0
    %v2854 = vpop.f32.mrb[0].mxu0
    %v2855 = vpop.f32.mrb[0].mxu0
    %2856 = vdwg.mxu0
    %v2857 = vmax.f32 %v2852, 0.0
    %v2858 = vld [vmem:[#allocation8 + $0x184] sm:$0xf]
    %v2859 = vld [vmem:[#allocation8 + $0x188] sm:$0xf]
    %v2860 = vld [vmem:[#allocation8 + $0x18c] sm:$0xf]
    %v2861 = vld [vmem:[#allocation8 + $0x190] sm:$0xf]
    %v2862 = vld [vmem:[#allocation8 + $0x194] sm:$0xf]
    %v2863 = vld [vmem:[#allocation8 + $0x198] sm:$0xf]
    %v2864 = vld [vmem:[#allocation8 + $0x19c] sm:$0xf]
    %v2865 = vld [vmem:[#allocation8 + $0x1a0] sm:$0xf]
    %v2866 = vld [vmem:[#allocation8 + $0x1a4] sm:$0xf]
    %v2867 = vld [vmem:[#allocation8 + $0x1a8] sm:$0xf]
    %v2868 = vld [vmem:[#allocation8 + $0x1ac] sm:$0xf]
    %v2869 = vld [vmem:[#allocation8 + $0x1b0] sm:$0xf]
    %v2870 = vld [vmem:[#allocation8 + $0x1b4] sm:$0xf]
    %v2871 = vld [vmem:[#allocation8 + $0x1b8] sm:$0xf]
    %v2872 = vld [vmem:[#allocation8 + $0x1bc] sm:$0xf]
    %v2873 = vld [vmem:[#allocation8 + $0x1c0] sm:$0xf]
    %v2874 = vpack.c.bf16 %v2857, %v2857
    %v2875 = vlaneseq
    %v2876 = vshrl.u32 %v2875, 7
    %v2877 = vsub.s32 0, %v2876
    %v2878 = vrot.slane %v87, %v2877
    %v2895 = vunpack.c.l.b16 %v2858
    %v2896 = vunpack.c.l.b16 %v2859
    %v2897 = vunpack.c.l.b16 %v2860
    %v2898 = vunpack.c.l.b16 %v2861
    %v2899 = vunpack.c.l.b16 %v2862
    %v2900 = vunpack.c.l.b16 %v2863
    %v2901 = vunpack.c.l.b16 %v2864
    %v2902 = vunpack.c.l.b16 %v2865
    %v2903 = vunpack.c.l.b16 %v2866
    %v2904 = vunpack.c.l.b16 %v2867
    %v2905 = vunpack.c.l.b16 %v2868
    %v2906 = vunpack.c.l.b16 %v2869
    %v2907 = vunpack.c.l.b16 %v2870
    %v2908 = vunpack.c.l.b16 %v2871
    %v2909 = vunpack.c.l.b16 %v2872
    %v2910 = vunpack.c.l.b16 %v2873
    %v2911 = vpack.c.b16 %v2896, %v2895
    %v2912 = vpack.c.b16 %v2898, %v2897
    %v2913 = vpack.c.b16 %v2900, %v2899
    %v2914 = vpack.c.b16 %v2902, %v2901
    %v2915 = vpack.c.b16 %v2904, %v2903
    %v2916 = vpack.c.b16 %v2906, %v2905
    %v2917 = vpack.c.b16 %v2908, %v2907
    %v2918 = vpack.c.b16 %v2910, %v2909
    %2927 = vmatprep.subr.bf16.mxu0 0
    %2928 = vmatpush1.bf16.msra.mxu0 %v2911
    %2929 = vmatprep.subr.bf16.mxu0 0
    %2930 = vmatpush1.bf16.msra.mxu0 %v2912
    %2931 = vmatprep.subr.bf16.mxu0 0
    %2932 = vmatpush1.bf16.msra.mxu0 %v2913
    %2933 = vmatprep.subr.bf16.mxu0 0
    %2934 = vmatpush1.bf16.msra.mxu0 %v2914
    %2935 = vmatprep.subr.bf16.mxu0 0
    %2936 = vmatpush1.bf16.msra.mxu0 %v2915
    %2937 = vmatprep.subr.bf16.mxu0 0
    %2938 = vmatpush1.bf16.msra.mxu0 %v2916
    %2939 = vmatprep.subr.bf16.mxu0 0
    %2940 = vmatpush1.bf16.msra.mxu0 %v2917
    %2941 = vmatprep.subr.bf16.mxu0 0
    %2942 = vmatpush1.bf16.msra.mxu0 %v2918
    %2943 = vmatprep.subr.bf16.mxu0 0
    %2944 = vmatpush1.bf16.msra.mxu0 0
    %2945 = vmatprep.subr.bf16.mxu0 0
    %2946 = vmatpush1.bf16.msra.mxu0 0
    %2947 = vmatprep.subr.bf16.mxu0 0
    %2948 = vmatpush1.bf16.msra.mxu0 0
    %2949 = vmatprep.subr.bf16.mxu0 0
    %2950 = vmatpush1.bf16.msra.mxu0 0
    %2951 = vmatprep.subr.bf16.mxu0 0
    %2952 = vmatpush1.bf16.msra.mxu0 0
    %2953 = vmatprep.subr.bf16.mxu0 0
    %2954 = vmatpush1.bf16.msra.mxu0 0
    %2955 = vmatprep.subr.bf16.mxu0 0
    %2956 = vmatpush1.bf16.msra.mxu0 0
    %2957 = vmatprep.subr.bf16.mxu0 0
    %2958 = vmatpush1.bf16.msra.mxu0 0
    %2959 = vmatprep.mubr.bf16.mxu0 0
    %2960 = vmatmul.mubr.bf16.gmra.mrb[0].mxu0 %v2874
    %v2961 = vpop.f32.mrb[0].mxu0
    %v2962 = vadd.f32 %v2878, %v2961
    %v2963 = vpop.f32.mrb[0].mxu0
    %v2964 = vpop.f32.mrb[0].mxu0
    %v2965 = vpop.f32.mrb[0].mxu0
    %2966 = vdwg.mxu0
    %v2967 = vmax.f32 %v2962, 0.0
    %v2968 = vld [vmem:[#allocation8 + $0x1c4] sm:$0xf]
    %v2969 = vld [vmem:[#allocation8 + $0x1c8] sm:$0xf]
    %v2970 = vld [vmem:[#allocation8 + $0x1cc] sm:$0xf]
    %v2971 = vld [vmem:[#allocation8 + $0x1d0] sm:$0xf]
    %v2972 = vld [vmem:[#allocation8 + $0x1d4] sm:$0xf]
    %v2973 = vld [vmem:[#allocation8 + $0x1d8] sm:$0xf]
    %v2974 = vld [vmem:[#allocation8 + $0x1dc] sm:$0xf]
    %v2975 = vld [vmem:[#allocation8 + $0x1e0] sm:$0xf]
    %v2976 = vld [vmem:[#allocation8 + $0x1e4] sm:$0xf]
    %v2977 = vld [vmem:[#allocation8 + $0x1e8] sm:$0xf]
    %v2978 = vld [vmem:[#allocation8 + $0x1ec] sm:$0xf]
    %v2979 = vld [vmem:[#allocation8 + $0x1f0] sm:$0xf]
    %v2980 = vld [vmem:[#allocation8 + $0x1f4] sm:$0xf]
    %v2981 = vld [vmem:[#allocation8 + $0x1f8] sm:$0xf]
    %v2982 = vld [vmem:[#allocation8 + $0x1fc] sm:$0xf]
    %v2983 = vld [vmem:[#allocation8 + $0x200] sm:$0xf]
    %v2984 = vpack.c.bf16 %v2967, %v2967
    %v2985 = vlaneseq
    %v2986 = vshrl.u32 %v2985, 7
    %v2987 = vsub.s32 1, %v2986
    %v2988 = vrot.slane %v87, %v2987
    %v3005 = vunpack.c.l.b16 %v2968
    %v3006 = vunpack.c.l.b16 %v2969
    %v3007 = vunpack.c.l.b16 %v2970
    %v3008 = vunpack.c.l.b16 %v2971
    %v3009 = vunpack.c.l.b16 %v2972
    %v3010 = vunpack.c.l.b16 %v2973
    %v3011 = vunpack.c.l.b16 %v2974
    %v3012 = vunpack.c.l.b16 %v2975
    %v3013 = vunpack.c.l.b16 %v2976
    %v3014 = vunpack.c.l.b16 %v2977
    %v3015 = vunpack.c.l.b16 %v2978
    %v3016 = vunpack.c.l.b16 %v2979
    %v3017 = vunpack.c.l.b16 %v2980
    %v3018 = vunpack.c.l.b16 %v2981
    %v3019 = vunpack.c.l.b16 %v2982
    %v3020 = vunpack.c.l.b16 %v2983
    %v3021 = vpack.c.b16 %v3006, %v3005
    %v3022 = vpack.c.b16 %v3008, %v3007
    %v3023 = vpack.c.b16 %v3010, %v3009
    %v3024 = vpack.c.b16 %v3012, %v3011
    %v3025 = vpack.c.b16 %v3014, %v3013
    %v3026 = vpack.c.b16 %v3016, %v3015
    %v3027 = vpack.c.b16 %v3018, %v3017
    %v3028 = vpack.c.b16 %v3020, %v3019
    %3037 = vmatprep.subr.bf16.mxu0 0
    %3038 = vmatpush1.bf16.msra.mxu0 %v3021
    %3039 = vmatprep.subr.bf16.mxu0 0
    %3040 = vmatpush1.bf16.msra.mxu0 %v3022
    %3041 = vmatprep.subr.bf16.mxu0 0
    %3042 = vmatpush1.bf16.msra.mxu0 %v3023
    %3043 = vmatprep.subr.bf16.mxu0 0
    %3044 = vmatpush1.bf16.msra.mxu0 %v3024
    %3045 = vmatprep.subr.bf16.mxu0 0
    %3046 = vmatpush1.bf16.msra.mxu0 %v3025
    %3047 = vmatprep.subr.bf16.mxu0 0
    %3048 = vmatpush1.bf16.msra.mxu0 %v3026
    %3049 = vmatprep.subr.bf16.mxu0 0
    %3050 = vmatpush1.bf16.msra.mxu0 %v3027
    %3051 = vmatprep.subr.bf16.mxu0 0
    %3052 = vmatpush1.bf16.msra.mxu0 %v3028
    %3053 = vmatprep.subr.bf16.mxu0 0
    %3054 = vmatpush1.bf16.msra.mxu0 0
    %3055 = vmatprep.subr.bf16.mxu0 0
    %3056 = vmatpush1.bf16.msra.mxu0 0
    %3057 = vmatprep.subr.bf16.mxu0 0
    %3058 = vmatpush1.bf16.msra.mxu0 0
    %3059 = vmatprep.subr.bf16.mxu0 0
    %3060 = vmatpush1.bf16.msra.mxu0 0
    %3061 = vmatprep.subr.bf16.mxu0 0
    %3062 = vmatpush1.bf16.msra.mxu0 0
    %3063 = vmatprep.subr.bf16.mxu0 0
    %3064 = vmatpush1.bf16.msra.mxu0 0
    %3065 = vmatprep.subr.bf16.mxu0 0
    %3066 = vmatpush1.bf16.msra.mxu0 0
    %3067 = vmatprep.subr.bf16.mxu0 0
    %3068 = vmatpush1.bf16.msra.mxu0 0
    %3069 = vmatprep.mubr.bf16.mxu0 0
    %3070 = vmatmul.mubr.bf16.gmra.mrb[0].mxu0 %v2984
    %v3071 = vpop.f32.mrb[0].mxu0
    %v3072 = vadd.f32 %v2988, %v3071
    %v3073 = vpop.f32.mrb[0].mxu0
    %v3074 = vpop.f32.mrb[0].mxu0
    %v3075 = vpop.f32.mrb[0].mxu0
    %3076 = vdwg.mxu0
    %3077 = vst [vmem:[#allocation11] sm:$0xf] %v3072
    // Predicated region
    $region42: #{tpu_custom_call.1} parent=1 // pred_check
      _
    $region43: #{tpu_custom_call.1} parent=1 // pred_check_branch
      %3079 = sbr.rel (0) target = $region45
    $region44: #{tpu_custom_call.1} parent=1 // pred_region
      %s3081 = ssub.s32 64, 64
      %3082 = vsyncadd [#allocation4], %s3081
      %s3084 = sshll.u32 [#allocation11], 4
      %s3085 = int_to_ptr.vmem [resolvable:$true] %s3084
      %3087 = dma.vmem_to_hbm [thread:$0]  %s3085, 64, %s5, [#allocation4]
    $region45: #{tpu_custom_call.1} parent=1 // pred_fallthru
      _
    // Predicated region
    $region46: #{tpu_custom_call.1} parent=1 // pred_check
      _
    $region47: #{tpu_custom_call.1} parent=1 // pred_check_branch
      %3089 = sbr.rel (0) target = $region49
    $region48: #{tpu_custom_call.1} parent=1 // pred_region
      %3090 = dma.done [#allocation4], 64
    $region49: #{tpu_custom_call.1} parent=1 // pred_fallthru
      _
    %3091 = vsyncpa [#allocation3], 1
    %3092 = vsyncpa [#allocation6], 1
    %3093 = vsyncpa [#allocation9], 1
    %3094 = vsyncpa [#allocation4], 1

</llo_original>
